<compile_context>
chip_gen: v5e
topology: v5e:2x2
jax: 0.10.0
libtpu: 0.0.40
codegen_flags: <defaults>
</compile_context>

<pallas_src>
import functools

import jax
import jax.numpy as jnp
from jax.experimental import pallas as pl
from jax.experimental.pallas import tpu as pltpu


def _conv_occ_kernel(x_ref, wc_ref, lw_ref, lb_ref, o_ref, *,
                     num_kernels, ksize, out_h, out_w, tb):
    # x_ref : (H, W, TB)               VMEM  (TB images on the lane axis)
    # wc_ref: (num_kernels, ksize**2)  SMEM  (conv weights, scalar reads)
    # lw_ref: (num_kernels,)           SMEM  (linear weights)
    # lb_ref: (1,)                     SMEM  (linear bias)
    # o_ref : (1, TB)                  VMEM  (lane-dense sigmoid output)
    lin = jnp.full((1, tb), lb_ref[0], jnp.float32)

    for o in range(num_kernels):
        # "valid" cross-correlation for output channel o, vectorized over the
        # TB lane-resident images: scalar-tap * shifted-window accumulation.
        acc = jnp.zeros((out_h, out_w, tb), jnp.float32)
        for ki in range(ksize):
            for kj in range(ksize):
                tap = wc_ref[o, ki * ksize + kj]
                # Slice the resident VMEM block per tap (cheap; keeps only acc
                # plus one streaming window live in vregs).
                win = x_ref[ki:ki + out_h, kj:kj + out_w, :].astype(jnp.float32)
                acc = acc + tap * win
        # AdaptiveMaxPool2d((1,1)) == global spatial max.
        pooled = jnp.max(acc, axis=0)                       # (out_w, TB)  VPU
        pooled = jnp.max(pooled, axis=0, keepdims=True)     # (1, TB)      XLU
        lin = lin + pooled * lw_ref[o]

    o_ref[...] = jax.nn.sigmoid(lin).astype(o_ref.dtype)


def conv_one_class_classifier(x_nchw, conv_w, lin_w, lin_b, *, lane_block=128):
    """x_nchw: (B, 1, H, W); conv_w: (O, 1, K, K); lin_w: (1, O); lin_b: (1,)."""
    B, C, H, W = x_nchw.shape
    assert C == 1, "module is defined with in_channels=1"
    O, _, K, _ = conv_w.shape
    out_h, out_w = H - K + 1, W - K + 1

    TB = lane_block
    num_blocks = pl.cdiv(B, TB)
    B_pad = num_blocks * TB

    # Layout plumbing in the wrapper: batch -> lane axis, pad to lane width.
    x = x_nchw[:, 0, :, :].astype(jnp.float32)           # (B, H, W)
    x = jnp.transpose(x, (1, 2, 0))                      # (H, W, B)
    if B_pad != B:
        x = jnp.pad(x, ((0, 0), (0, 0), (0, B_pad - B)))  # (H, W, B_pad)

    wc = conv_w.reshape(O, K * K).astype(jnp.float32)    # (O, K*K)
    lw = lin_w.reshape(O).astype(jnp.float32)            # (O,)
    lb = lin_b.reshape(1).astype(jnp.float32)            # (1,)

    kernel = functools.partial(_conv_occ_kernel, num_kernels=O, ksize=K,
                               out_h=out_h, out_w=out_w, tb=TB)

    out = pl.pallas_call(
        kernel,
        out_shape=jax.ShapeDtypeStruct((num_blocks, TB), jnp.float32),
        grid=(num_blocks,),
        in_specs=[
            pl.BlockSpec((H, W, TB), lambda b: (0, 0, b)),         # lane block of images
            pl.BlockSpec(memory_space=pltpu.MemorySpace.SMEM),     # conv weights
            pl.BlockSpec(memory_space=pltpu.MemorySpace.SMEM),     # linear weights
            pl.BlockSpec(memory_space=pltpu.MemorySpace.SMEM),     # linear bias
        ],
        out_specs=pl.BlockSpec((1, TB), lambda b: (b, 0)),         # lane-dense output
        compiler_params=pltpu.CompilerParams(
            dimension_semantics=("parallel",)),                    # megacore on v7x for B > TB
    )(x, wc, lw, lb)

    return out.reshape(B_pad)[:B].reshape(B, 1, 1)


def _reference(x_nchw, conv_w, lin_w, lin_b):
    conv = jax.lax.conv_general_dilated(
        x_nchw, conv_w, window_strides=(1, 1), padding="VALID",
        dimension_numbers=("NCHW", "OIHW", "NCHW"))
    pooled = jnp.max(conv, axis=(2, 3))          # (B, O)  == AdaptiveMaxPool2d((1,1))
    lin = pooled @ lin_w.T + lin_b               # (B, 1)
    return jax.nn.sigmoid(lin).reshape(x_nchw.shape[0], 1, 1)


if __name__ == "__main__":
    B, H, W = 2, 16, 16
    num_kernels, kernel_side = 8, 3

    key = jax.random.PRNGKey(0)
    k1, k2, k3, k4 = jax.random.split(key, 4)
    x = jax.random.normal(k1, (B, 1, H, W), jnp.float32)
    conv_w = 0.3 * jax.random.normal(
        k2, (num_kernels, 1, kernel_side, kernel_side), jnp.float32)
    lin_w = 0.3 * jax.random.normal(k3, (1, num_kernels), jnp.float32)
    lin_b = 0.1 * jax.random.normal(k4, (1,), jnp.float32)

    out = conv_one_class_classifier(x, conv_w, lin_w, lin_b)
    out = jax.block_until_ready(out)

    ref = _reference(x, conv_w, lin_w, lin_b)
    assert out.shape == (B, 1, 1), out.shape
    assert jnp.allclose(out, ref, atol=1e-5, rtol=1e-5), (out, ref)
    print("KERNEL_OK")
</pallas_src>

<mosaic_0001>
module attributes {stable_mosaic.version = 11 : i64} {
  func.func @_conv_occ_kernel(%arg0: i32, %arg1: memref<16x16x128xf32, #tpu.memory_space<vmem>>, %arg2: memref<8x9xf32, #tpu.memory_space<smem>>, %arg3: memref<8xf32, #tpu.memory_space<smem>>, %arg4: memref<1xf32, #tpu.memory_space<smem>>, %arg5: memref<1x128xf32, #tpu.memory_space<vmem>>) attributes {dimension_semantics = [#tpu.dimension_semantics<parallel>], iteration_bounds = array<i64: 1>, scalar_prefetch = 0 : i64, scratch_operands = 0 : i64, tpu.core_type = #tpu.core_type<tc>, window_params = [{transform_indices = @transform_0, window_bounds = array<i64: 16, 16, 128>}, {transform_indices = @transform_1, window_bounds = array<i64: 8, 9>}, {transform_indices = @transform_2, window_bounds = array<i64: 8>}, {transform_indices = @transform_3, window_bounds = array<i64: 1>}, {transform_indices = @transform_4, window_bounds = array<i64: 1, 128>}]} {
    %c0 = arith.constant 0 : index
    %0 = memref.load %arg4[%c0] : memref<1xf32, #tpu.memory_space<smem>>
    %1 = vector.broadcast %0 : f32 to vector<1x128xf32>
    %cst = arith.constant 0.000000e+00 : f32
    %2 = vector.broadcast %cst : f32 to vector<14x14x128xf32>
    %c0_0 = arith.constant 0 : index
    %c0_1 = arith.constant 0 : index
    %3 = memref.load %arg2[%c0_0, %c0_1] : memref<8x9xf32, #tpu.memory_space<smem>>
    %c0_2 = arith.constant 0 : index
    %c0_3 = arith.constant 0 : index
    %c0_4 = arith.constant 0 : index
    %4 = vector.load %arg1[%c0_2, %c0_3, %c0_4] : memref<16x16x128xf32, #tpu.memory_space<vmem>>, vector<14x14x128xf32>
    %5 = vector.broadcast %3 : f32 to vector<14x14x128xf32>
    %6 = arith.mulf %5, %4 : vector<14x14x128xf32>
    %7 = arith.addf %2, %6 : vector<14x14x128xf32>
    %c0_5 = arith.constant 0 : index
    %c1 = arith.constant 1 : index
    %8 = memref.load %arg2[%c0_5, %c1] : memref<8x9xf32, #tpu.memory_space<smem>>
    %c0_6 = arith.constant 0 : index
    %c1_7 = arith.constant 1 : index
    %c0_8 = arith.constant 0 : index
    %9 = vector.load %arg1[%c0_6, %c1_7, %c0_8] : memref<16x16x128xf32, #tpu.memory_space<vmem>>, vector<14x14x128xf32>
    %10 = vector.broadcast %8 : f32 to vector<14x14x128xf32>
    %11 = arith.mulf %10, %9 : vector<14x14x128xf32>
    %12 = arith.addf %7, %11 : vector<14x14x128xf32>
    %c0_9 = arith.constant 0 : index
    %c2 = arith.constant 2 : index
    %13 = memref.load %arg2[%c0_9, %c2] : memref<8x9xf32, #tpu.memory_space<smem>>
    %c0_10 = arith.constant 0 : index
    %c2_11 = arith.constant 2 : index
    %c0_12 = arith.constant 0 : index
    %14 = vector.load %arg1[%c0_10, %c2_11, %c0_12] : memref<16x16x128xf32, #tpu.memory_space<vmem>>, vector<14x14x128xf32>
    %15 = vector.broadcast %13 : f32 to vector<14x14x128xf32>
    %16 = arith.mulf %15, %14 : vector<14x14x128xf32>
    %17 = arith.addf %12, %16 : vector<14x14x128xf32>
    %c0_13 = arith.constant 0 : index
    %c3 = arith.constant 3 : index
    %18 = memref.load %arg2[%c0_13, %c3] : memref<8x9xf32, #tpu.memory_space<smem>>
    %c1_14 = arith.constant 1 : index
    %c0_15 = arith.constant 0 : index
    %c0_16 = arith.constant 0 : index
    %19 = vector.load %arg1[%c1_14, %c0_15, %c0_16] : memref<16x16x128xf32, #tpu.memory_space<vmem>>, vector<14x14x128xf32>
    %20 = vector.broadcast %18 : f32 to vector<14x14x128xf32>
    %21 = arith.mulf %20, %19 : vector<14x14x128xf32>
    %22 = arith.addf %17, %21 : vector<14x14x128xf32>
    %c0_17 = arith.constant 0 : index
    %c4 = arith.constant 4 : index
    %23 = memref.load %arg2[%c0_17, %c4] : memref<8x9xf32, #tpu.memory_space<smem>>
    %c1_18 = arith.constant 1 : index
    %c1_19 = arith.constant 1 : index
    %c0_20 = arith.constant 0 : index
    %24 = vector.load %arg1[%c1_18, %c1_19, %c0_20] : memref<16x16x128xf32, #tpu.memory_space<vmem>>, vector<14x14x128xf32>
    %25 = vector.broadcast %23 : f32 to vector<14x14x128xf32>
    %26 = arith.mulf %25, %24 : vector<14x14x128xf32>
    %27 = arith.addf %22, %26 : vector<14x14x128xf32>
    %c0_21 = arith.constant 0 : index
    %c5 = arith.constant 5 : index
    %28 = memref.load %arg2[%c0_21, %c5] : memref<8x9xf32, #tpu.memory_space<smem>>
    %c1_22 = arith.constant 1 : index
    %c2_23 = arith.constant 2 : index
    %c0_24 = arith.constant 0 : index
    %29 = vector.load %arg1[%c1_22, %c2_23, %c0_24] : memref<16x16x128xf32, #tpu.memory_space<vmem>>, vector<14x14x128xf32>
    %30 = vector.broadcast %28 : f32 to vector<14x14x128xf32>
    %31 = arith.mulf %30, %29 : vector<14x14x128xf32>
    %32 = arith.addf %27, %31 : vector<14x14x128xf32>
    %c0_25 = arith.constant 0 : index
    %c6 = arith.constant 6 : index
    %33 = memref.load %arg2[%c0_25, %c6] : memref<8x9xf32, #tpu.memory_space<smem>>
    %c2_26 = arith.constant 2 : index
    %c0_27 = arith.constant 0 : index
    %c0_28 = arith.constant 0 : index
    %34 = vector.load %arg1[%c2_26, %c0_27, %c0_28] : memref<16x16x128xf32, #tpu.memory_space<vmem>>, vector<14x14x128xf32>
    %35 = vector.broadcast %33 : f32 to vector<14x14x128xf32>
    %36 = arith.mulf %35, %34 : vector<14x14x128xf32>
    %37 = arith.addf %32, %36 : vector<14x14x128xf32>
    %c0_29 = arith.constant 0 : index
    %c7 = arith.constant 7 : index
    %38 = memref.load %arg2[%c0_29, %c7] : memref<8x9xf32, #tpu.memory_space<smem>>
    %c2_30 = arith.constant 2 : index
    %c1_31 = arith.constant 1 : index
    %c0_32 = arith.constant 0 : index
    %39 = vector.load %arg1[%c2_30, %c1_31, %c0_32] : memref<16x16x128xf32, #tpu.memory_space<vmem>>, vector<14x14x128xf32>
    %40 = vector.broadcast %38 : f32 to vector<14x14x128xf32>
    %41 = arith.mulf %40, %39 : vector<14x14x128xf32>
    %42 = arith.addf %37, %41 : vector<14x14x128xf32>
    %c0_33 = arith.constant 0 : index
    %c8 = arith.constant 8 : index
    %43 = memref.load %arg2[%c0_33, %c8] : memref<8x9xf32, #tpu.memory_space<smem>>
    %c2_34 = arith.constant 2 : index
    %c2_35 = arith.constant 2 : index
    %c0_36 = arith.constant 0 : index
    %44 = vector.load %arg1[%c2_34, %c2_35, %c0_36] : memref<16x16x128xf32, #tpu.memory_space<vmem>>, vector<14x14x128xf32>
    %45 = vector.broadcast %43 : f32 to vector<14x14x128xf32>
    %46 = arith.mulf %45, %44 : vector<14x14x128xf32>
    %47 = arith.addf %42, %46 : vector<14x14x128xf32>
    %cst_37 = arith.constant dense<0xFF800000> : vector<14x128xf32>
    %48 = vector.multi_reduction <maximumf>, %47, %cst_37 [0] : vector<14x14x128xf32> to vector<14x128xf32>
    %cst_38 = arith.constant dense<0xFF800000> : vector<128xf32>
    %49 = vector.multi_reduction <maximumf>, %48, %cst_38 [0] : vector<14x128xf32> to vector<128xf32>
    %50 = vector.shape_cast %49 : vector<128xf32> to vector<1x128xf32>
    %c0_39 = arith.constant 0 : index
    %51 = memref.load %arg3[%c0_39] : memref<8xf32, #tpu.memory_space<smem>>
    %52 = vector.broadcast %51 : f32 to vector<1x128xf32>
    %53 = arith.mulf %50, %52 : vector<1x128xf32>
    %54 = arith.addf %1, %53 : vector<1x128xf32>
    %cst_40 = arith.constant 0.000000e+00 : f32
    %55 = vector.broadcast %cst_40 : f32 to vector<14x14x128xf32>
    %c1_41 = arith.constant 1 : index
    %c0_42 = arith.constant 0 : index
    %56 = memref.load %arg2[%c1_41, %c0_42] : memref<8x9xf32, #tpu.memory_space<smem>>
    %c0_43 = arith.constant 0 : index
    %c0_44 = arith.constant 0 : index
    %c0_45 = arith.constant 0 : index
    %57 = vector.load %arg1[%c0_43, %c0_44, %c0_45] : memref<16x16x128xf32, #tpu.memory_space<vmem>>, vector<14x14x128xf32>
    %58 = vector.broadcast %56 : f32 to vector<14x14x128xf32>
    %59 = arith.mulf %58, %57 : vector<14x14x128xf32>
    %60 = arith.addf %55, %59 : vector<14x14x128xf32>
    %c1_46 = arith.constant 1 : index
    %c1_47 = arith.constant 1 : index
    %61 = memref.load %arg2[%c1_46, %c1_47] : memref<8x9xf32, #tpu.memory_space<smem>>
    %c0_48 = arith.constant 0 : index
    %c1_49 = arith.constant 1 : index
    %c0_50 = arith.constant 0 : index
    %62 = vector.load %arg1[%c0_48, %c1_49, %c0_50] : memref<16x16x128xf32, #tpu.memory_space<vmem>>, vector<14x14x128xf32>
    %63 = vector.broadcast %61 : f32 to vector<14x14x128xf32>
    %64 = arith.mulf %63, %62 : vector<14x14x128xf32>
    %65 = arith.addf %60, %64 : vector<14x14x128xf32>
    %c1_51 = arith.constant 1 : index
    %c2_52 = arith.constant 2 : index
    %66 = memref.load %arg2[%c1_51, %c2_52] : memref<8x9xf32, #tpu.memory_space<smem>>
    %c0_53 = arith.constant 0 : index
    %c2_54 = arith.constant 2 : index
    %c0_55 = arith.constant 0 : index
    %67 = vector.load %arg1[%c0_53, %c2_54, %c0_55] : memref<16x16x128xf32, #tpu.memory_space<vmem>>, vector<14x14x128xf32>
    %68 = vector.broadcast %66 : f32 to vector<14x14x128xf32>
    %69 = arith.mulf %68, %67 : vector<14x14x128xf32>
    %70 = arith.addf %65, %69 : vector<14x14x128xf32>
    %c1_56 = arith.constant 1 : index
    %c3_57 = arith.constant 3 : index
    %71 = memref.load %arg2[%c1_56, %c3_57] : memref<8x9xf32, #tpu.memory_space<smem>>
    %c1_58 = arith.constant 1 : index
    %c0_59 = arith.constant 0 : index
    %c0_60 = arith.constant 0 : index
    %72 = vector.load %arg1[%c1_58, %c0_59, %c0_60] : memref<16x16x128xf32, #tpu.memory_space<vmem>>, vector<14x14x128xf32>
    %73 = vector.broadcast %71 : f32 to vector<14x14x128xf32>
    %74 = arith.mulf %73, %72 : vector<14x14x128xf32>
    %75 = arith.addf %70, %74 : vector<14x14x128xf32>
    %c1_61 = arith.constant 1 : index
    %c4_62 = arith.constant 4 : index
    %76 = memref.load %arg2[%c1_61, %c4_62] : memref<8x9xf32, #tpu.memory_space<smem>>
    %c1_63 = arith.constant 1 : index
    %c1_64 = arith.constant 1 : index
    %c0_65 = arith.constant 0 : index
    %77 = vector.load %arg1[%c1_63, %c1_64, %c0_65] : memref<16x16x128xf32, #tpu.memory_space<vmem>>, vector<14x14x128xf32>
    %78 = vector.broadcast %76 : f32 to vector<14x14x128xf32>
    %79 = arith.mulf %78, %77 : vector<14x14x128xf32>
    %80 = arith.addf %75, %79 : vector<14x14x128xf32>
    %c1_66 = arith.constant 1 : index
    %c5_67 = arith.constant 5 : index
    %81 = memref.load %arg2[%c1_66, %c5_67] : memref<8x9xf32, #tpu.memory_space<smem>>
    %c1_68 = arith.constant 1 : index
    %c2_69 = arith.constant 2 : index
    %c0_70 = arith.constant 0 : index
    %82 = vector.load %arg1[%c1_68, %c2_69, %c0_70] : memref<16x16x128xf32, #tpu.memory_space<vmem>>, vector<14x14x128xf32>
    %83 = vector.broadcast %81 : f32 to vector<14x14x128xf32>
    %84 = arith.mulf %83, %82 : vector<14x14x128xf32>
    %85 = arith.addf %80, %84 : vector<14x14x128xf32>
    %c1_71 = arith.constant 1 : index
    %c6_72 = arith.constant 6 : index
    %86 = memref.load %arg2[%c1_71, %c6_72] : memref<8x9xf32, #tpu.memory_space<smem>>
    %c2_73 = arith.constant 2 : index
    %c0_74 = arith.constant 0 : index
    %c0_75 = arith.constant 0 : index
    %87 = vector.load %arg1[%c2_73, %c0_74, %c0_75] : memref<16x16x128xf32, #tpu.memory_space<vmem>>, vector<14x14x128xf32>
    %88 = vector.broadcast %86 : f32 to vector<14x14x128xf32>
    %89 = arith.mulf %88, %87 : vector<14x14x128xf32>
    %90 = arith.addf %85, %89 : vector<14x14x128xf32>
    %c1_76 = arith.constant 1 : index
    %c7_77 = arith.constant 7 : index
    %91 = memref.load %arg2[%c1_76, %c7_77] : memref<8x9xf32, #tpu.memory_space<smem>>
    %c2_78 = arith.constant 2 : index
    %c1_79 = arith.constant 1 : index
    %c0_80 = arith.constant 0 : index
    %92 = vector.load %arg1[%c2_78, %c1_79, %c0_80] : memref<16x16x128xf32, #tpu.memory_space<vmem>>, vector<14x14x128xf32>
    %93 = vector.broadcast %91 : f32 to vector<14x14x128xf32>
    %94 = arith.mulf %93, %92 : vector<14x14x128xf32>
    %95 = arith.addf %90, %94 : vector<14x14x128xf32>
    %c1_81 = arith.constant 1 : index
    %c8_82 = arith.constant 8 : index
    %96 = memref.load %arg2[%c1_81, %c8_82] : memref<8x9xf32, #tpu.memory_space<smem>>
    %c2_83 = arith.constant 2 : index
    %c2_84 = arith.constant 2 : index
    %c0_85 = arith.constant 0 : index
    %97 = vector.load %arg1[%c2_83, %c2_84, %c0_85] : memref<16x16x128xf32, #tpu.memory_space<vmem>>, vector<14x14x128xf32>
    %98 = vector.broadcast %96 : f32 to vector<14x14x128xf32>
    %99 = arith.mulf %98, %97 : vector<14x14x128xf32>
    %100 = arith.addf %95, %99 : vector<14x14x128xf32>
    %cst_86 = arith.constant dense<0xFF800000> : vector<14x128xf32>
    %101 = vector.multi_reduction <maximumf>, %100, %cst_86 [0] : vector<14x14x128xf32> to vector<14x128xf32>
    %cst_87 = arith.constant dense<0xFF800000> : vector<128xf32>
    %102 = vector.multi_reduction <maximumf>, %101, %cst_87 [0] : vector<14x128xf32> to vector<128xf32>
    %103 = vector.shape_cast %102 : vector<128xf32> to vector<1x128xf32>
    %c1_88 = arith.constant 1 : index
    %104 = memref.load %arg3[%c1_88] : memref<8xf32, #tpu.memory_space<smem>>
    %105 = vector.broadcast %104 : f32 to vector<1x128xf32>
    %106 = arith.mulf %103, %105 : vector<1x128xf32>
    %107 = arith.addf %54, %106 : vector<1x128xf32>
    %cst_89 = arith.constant 0.000000e+00 : f32
    %108 = vector.broadcast %cst_89 : f32 to vector<14x14x128xf32>
    %c2_90 = arith.constant 2 : index
    %c0_91 = arith.constant 0 : index
    %109 = memref.load %arg2[%c2_90, %c0_91] : memref<8x9xf32, #tpu.memory_space<smem>>
    %c0_92 = arith.constant 0 : index
    %c0_93 = arith.constant 0 : index
    %c0_94 = arith.constant 0 : index
    %110 = vector.load %arg1[%c0_92, %c0_93, %c0_94] : memref<16x16x128xf32, #tpu.memory_space<vmem>>, vector<14x14x128xf32>
    %111 = vector.broadcast %109 : f32 to vector<14x14x128xf32>
    %112 = arith.mulf %111, %110 : vector<14x14x128xf32>
    %113 = arith.addf %108, %112 : vector<14x14x128xf32>
    %c2_95 = arith.constant 2 : index
    %c1_96 = arith.constant 1 : index
    %114 = memref.load %arg2[%c2_95, %c1_96] : memref<8x9xf32, #tpu.memory_space<smem>>
    %c0_97 = arith.constant 0 : index
    %c1_98 = arith.constant 1 : index
    %c0_99 = arith.constant 0 : index
    %115 = vector.load %arg1[%c0_97, %c1_98, %c0_99] : memref<16x16x128xf32, #tpu.memory_space<vmem>>, vector<14x14x128xf32>
    %116 = vector.broadcast %114 : f32 to vector<14x14x128xf32>
    %117 = arith.mulf %116, %115 : vector<14x14x128xf32>
    %118 = arith.addf %113, %117 : vector<14x14x128xf32>
    %c2_100 = arith.constant 2 : index
    %c2_101 = arith.constant 2 : index
    %119 = memref.load %arg2[%c2_100, %c2_101] : memref<8x9xf32, #tpu.memory_space<smem>>
    %c0_102 = arith.constant 0 : index
    %c2_103 = arith.constant 2 : index
    %c0_104 = arith.constant 0 : index
    %120 = vector.load %arg1[%c0_102, %c2_103, %c0_104] : memref<16x16x128xf32, #tpu.memory_space<vmem>>, vector<14x14x128xf32>
    %121 = vector.broadcast %119 : f32 to vector<14x14x128xf32>
    %122 = arith.mulf %121, %120 : vector<14x14x128xf32>
    %123 = arith.addf %118, %122 : vector<14x14x128xf32>
    %c2_105 = arith.constant 2 : index
    %c3_106 = arith.constant 3 : index
    %124 = memref.load %arg2[%c2_105, %c3_106] : memref<8x9xf32, #tpu.memory_space<smem>>
    %c1_107 = arith.constant 1 : index
    %c0_108 = arith.constant 0 : index
    %c0_109 = arith.constant 0 : index
    %125 = vector.load %arg1[%c1_107, %c0_108, %c0_109] : memref<16x16x128xf32, #tpu.memory_space<vmem>>, vector<14x14x128xf32>
    %126 = vector.broadcast %124 : f32 to vector<14x14x128xf32>
    %127 = arith.mulf %126, %125 : vector<14x14x128xf32>
    %128 = arith.addf %123, %127 : vector<14x14x128xf32>
    %c2_110 = arith.constant 2 : index
    %c4_111 = arith.constant 4 : index
    %129 = memref.load %arg2[%c2_110, %c4_111] : memref<8x9xf32, #tpu.memory_space<smem>>
    %c1_112 = arith.constant 1 : index
    %c1_113 = arith.constant 1 : index
    %c0_114 = arith.constant 0 : index
    %130 = vector.load %arg1[%c1_112, %c1_113, %c0_114] : memref<16x16x128xf32, #tpu.memory_space<vmem>>, vector<14x14x128xf32>
    %131 = vector.broadcast %129 : f32 to vector<14x14x128xf32>
    %132 = arith.mulf %131, %130 : vector<14x14x128xf32>
    %133 = arith.addf %128, %132 : vector<14x14x128xf32>
    %c2_115 = arith.constant 2 : index
    %c5_116 = arith.constant 5 : index
    %134 = memref.load %arg2[%c2_115, %c5_116] : memref<8x9xf32, #tpu.memory_space<smem>>
    %c1_117 = arith.constant 1 : index
    %c2_118 = arith.constant 2 : index
    %c0_119 = arith.constant 0 : index
    %135 = vector.load %arg1[%c1_117, %c2_118, %c0_119] : memref<16x16x128xf32, #tpu.memory_space<vmem>>, vector<14x14x128xf32>
    %136 = vector.broadcast %134 : f32 to vector<14x14x128xf32>
    %137 = arith.mulf %136, %135 : vector<14x14x128xf32>
    %138 = arith.addf %133, %137 : vector<14x14x128xf32>
    %c2_120 = arith.constant 2 : index
    %c6_121 = arith.constant 6 : index
    %139 = memref.load %arg2[%c2_120, %c6_121] : memref<8x9xf32, #tpu.memory_space<smem>>
    %c2_122 = arith.constant 2 : index
    %c0_123 = arith.constant 0 : index
    %c0_124 = arith.constant 0 : index
    %140 = vector.load %arg1[%c2_122, %c0_123, %c0_124] : memref<16x16x128xf32, #tpu.memory_space<vmem>>, vector<14x14x128xf32>
    %141 = vector.broadcast %139 : f32 to vector<14x14x128xf32>
    %142 = arith.mulf %141, %140 : vector<14x14x128xf32>
    %143 = arith.addf %138, %142 : vector<14x14x128xf32>
    %c2_125 = arith.constant 2 : index
    %c7_126 = arith.constant 7 : index
    %144 = memref.load %arg2[%c2_125, %c7_126] : memref<8x9xf32, #tpu.memory_space<smem>>
    %c2_127 = arith.constant 2 : index
    %c1_128 = arith.constant 1 : index
    %c0_129 = arith.constant 0 : index
    %145 = vector.load %arg1[%c2_127, %c1_128, %c0_129] : memref<16x16x128xf32, #tpu.memory_space<vmem>>, vector<14x14x128xf32>
    %146 = vector.broadcast %144 : f32 to vector<14x14x128xf32>
    %147 = arith.mulf %146, %145 : vector<14x14x128xf32>
    %148 = arith.addf %143, %147 : vector<14x14x128xf32>
    %c2_130 = arith.constant 2 : index
    %c8_131 = arith.constant 8 : index
    %149 = memref.load %arg2[%c2_130, %c8_131] : memref<8x9xf32, #tpu.memory_space<smem>>
    %c2_132 = arith.constant 2 : index
    %c2_133 = arith.constant 2 : index
    %c0_134 = arith.constant 0 : index
    %150 = vector.load %arg1[%c2_132, %c2_133, %c0_134] : memref<16x16x128xf32, #tpu.memory_space<vmem>>, vector<14x14x128xf32>
    %151 = vector.broadcast %149 : f32 to vector<14x14x128xf32>
    %152 = arith.mulf %151, %150 : vector<14x14x128xf32>
    %153 = arith.addf %148, %152 : vector<14x14x128xf32>
    %cst_135 = arith.constant dense<0xFF800000> : vector<14x128xf32>
    %154 = vector.multi_reduction <maximumf>, %153, %cst_135 [0] : vector<14x14x128xf32> to vector<14x128xf32>
    %cst_136 = arith.constant dense<0xFF800000> : vector<128xf32>
    %155 = vector.multi_reduction <maximumf>, %154, %cst_136 [0] : vector<14x128xf32> to vector<128xf32>
    %156 = vector.shape_cast %155 : vector<128xf32> to vector<1x128xf32>
    %c2_137 = arith.constant 2 : index
    %157 = memref.load %arg3[%c2_137] : memref<8xf32, #tpu.memory_space<smem>>
    %158 = vector.broadcast %157 : f32 to vector<1x128xf32>
    %159 = arith.mulf %156, %158 : vector<1x128xf32>
    %160 = arith.addf %107, %159 : vector<1x128xf32>
    %cst_138 = arith.constant 0.000000e+00 : f32
    %161 = vector.broadcast %cst_138 : f32 to vector<14x14x128xf32>
    %c3_139 = arith.constant 3 : index
    %c0_140 = arith.constant 0 : index
    %162 = memref.load %arg2[%c3_139, %c0_140] : memref<8x9xf32, #tpu.memory_space<smem>>
    %c0_141 = arith.constant 0 : index
    %c0_142 = arith.constant 0 : index
    %c0_143 = arith.constant 0 : index
    %163 = vector.load %arg1[%c0_141, %c0_142, %c0_143] : memref<16x16x128xf32, #tpu.memory_space<vmem>>, vector<14x14x128xf32>
    %164 = vector.broadcast %162 : f32 to vector<14x14x128xf32>
    %165 = arith.mulf %164, %163 : vector<14x14x128xf32>
    %166 = arith.addf %161, %165 : vector<14x14x128xf32>
    %c3_144 = arith.constant 3 : index
    %c1_145 = arith.constant 1 : index
    %167 = memref.load %arg2[%c3_144, %c1_145] : memref<8x9xf32, #tpu.memory_space<smem>>
    %c0_146 = arith.constant 0 : index
    %c1_147 = arith.constant 1 : index
    %c0_148 = arith.constant 0 : index
    %168 = vector.load %arg1[%c0_146, %c1_147, %c0_148] : memref<16x16x128xf32, #tpu.memory_space<vmem>>, vector<14x14x128xf32>
    %169 = vector.broadcast %167 : f32 to vector<14x14x128xf32>
    %170 = arith.mulf %169, %168 : vector<14x14x128xf32>
    %171 = arith.addf %166, %170 : vector<14x14x128xf32>
    %c3_149 = arith.constant 3 : index
    %c2_150 = arith.constant 2 : index
    %172 = memref.load %arg2[%c3_149, %c2_150] : memref<8x9xf32, #tpu.memory_space<smem>>
    %c0_151 = arith.constant 0 : index
    %c2_152 = arith.constant 2 : index
    %c0_153 = arith.constant 0 : index
    %173 = vector.load %arg1[%c0_151, %c2_152, %c0_153] : memref<16x16x128xf32, #tpu.memory_space<vmem>>, vector<14x14x128xf32>
    %174 = vector.broadcast %172 : f32 to vector<14x14x128xf32>
    %175 = arith.mulf %174, %173 : vector<14x14x128xf32>
    %176 = arith.addf %171, %175 : vector<14x14x128xf32>
    %c3_154 = arith.constant 3 : index
    %c3_155 = arith.constant 3 : index
    %177 = memref.load %arg2[%c3_154, %c3_155] : memref<8x9xf32, #tpu.memory_space<smem>>
    %c1_156 = arith.constant 1 : index
    %c0_157 = arith.constant 0 : index
    %c0_158 = arith.constant 0 : index
    %178 = vector.load %arg1[%c1_156, %c0_157, %c0_158] : memref<16x16x128xf32, #tpu.memory_space<vmem>>, vector<14x14x128xf32>
    %179 = vector.broadcast %177 : f32 to vector<14x14x128xf32>
    %180 = arith.mulf %179, %178 : vector<14x14x128xf32>
    %181 = arith.addf %176, %180 : vector<14x14x128xf32>
    %c3_159 = arith.constant 3 : index
    %c4_160 = arith.constant 4 : index
    %182 = memref.load %arg2[%c3_159, %c4_160] : memref<8x9xf32, #tpu.memory_space<smem>>
    %c1_161 = arith.constant 1 : index
    %c1_162 = arith.constant 1 : index
    %c0_163 = arith.constant 0 : index
    %183 = vector.load %arg1[%c1_161, %c1_162, %c0_163] : memref<16x16x128xf32, #tpu.memory_space<vmem>>, vector<14x14x128xf32>
    %184 = vector.broadcast %182 : f32 to vector<14x14x128xf32>
    %185 = arith.mulf %184, %183 : vector<14x14x128xf32>
    %186 = arith.addf %181, %185 : vector<14x14x128xf32>
    %c3_164 = arith.constant 3 : index
    %c5_165 = arith.constant 5 : index
    %187 = memref.load %arg2[%c3_164, %c5_165] : memref<8x9xf32, #tpu.memory_space<smem>>
    %c1_166 = arith.constant 1 : index
    %c2_167 = arith.constant 2 : index
    %c0_168 = arith.constant 0 : index
    %188 = vector.load %arg1[%c1_166, %c2_167, %c0_168] : memref<16x16x128xf32, #tpu.memory_space<vmem>>, vector<14x14x128xf32>
    %189 = vector.broadcast %187 : f32 to vector<14x14x128xf32>
    %190 = arith.mulf %189, %188 : vector<14x14x128xf32>
    %191 = arith.addf %186, %190 : vector<14x14x128xf32>
    %c3_169 = arith.constant 3 : index
    %c6_170 = arith.constant 6 : index
    %192 = memref.load %arg2[%c3_169, %c6_170] : memref<8x9xf32, #tpu.memory_space<smem>>
    %c2_171 = arith.constant 2 : index
    %c0_172 = arith.constant 0 : index
    %c0_173 = arith.constant 0 : index
    %193 = vector.load %arg1[%c2_171, %c0_172, %c0_173] : memref<16x16x128xf32, #tpu.memory_space<vmem>>, vector<14x14x128xf32>
    %194 = vector.broadcast %192 : f32 to vector<14x14x128xf32>
    %195 = arith.mulf %194, %193 : vector<14x14x128xf32>
    %196 = arith.addf %191, %195 : vector<14x14x128xf32>
    %c3_174 = arith.constant 3 : index
    %c7_175 = arith.constant 7 : index
    %197 = memref.load %arg2[%c3_174, %c7_175] : memref<8x9xf32, #tpu.memory_space<smem>>
    %c2_176 = arith.constant 2 : index
    %c1_177 = arith.constant 1 : index
    %c0_178 = arith.constant 0 : index
    %198 = vector.load %arg1[%c2_176, %c1_177, %c0_178] : memref<16x16x128xf32, #tpu.memory_space<vmem>>, vector<14x14x128xf32>
    %199 = vector.broadcast %197 : f32 to vector<14x14x128xf32>
    %200 = arith.mulf %199, %198 : vector<14x14x128xf32>
    %201 = arith.addf %196, %200 : vector<14x14x128xf32>
    %c3_179 = arith.constant 3 : index
    %c8_180 = arith.constant 8 : index
    %202 = memref.load %arg2[%c3_179, %c8_180] : memref<8x9xf32, #tpu.memory_space<smem>>
    %c2_181 = arith.constant 2 : index
    %c2_182 = arith.constant 2 : index
    %c0_183 = arith.constant 0 : index
    %203 = vector.load %arg1[%c2_181, %c2_182, %c0_183] : memref<16x16x128xf32, #tpu.memory_space<vmem>>, vector<14x14x128xf32>
    %204 = vector.broadcast %202 : f32 to vector<14x14x128xf32>
    %205 = arith.mulf %204, %203 : vector<14x14x128xf32>
    %206 = arith.addf %201, %205 : vector<14x14x128xf32>
    %cst_184 = arith.constant dense<0xFF800000> : vector<14x128xf32>
    %207 = vector.multi_reduction <maximumf>, %206, %cst_184 [0] : vector<14x14x128xf32> to vector<14x128xf32>
    %cst_185 = arith.constant dense<0xFF800000> : vector<128xf32>
    %208 = vector.multi_reduction <maximumf>, %207, %cst_185 [0] : vector<14x128xf32> to vector<128xf32>
    %209 = vector.shape_cast %208 : vector<128xf32> to vector<1x128xf32>
    %c3_186 = arith.constant 3 : index
    %210 = memref.load %arg3[%c3_186] : memref<8xf32, #tpu.memory_space<smem>>
    %211 = vector.broadcast %210 : f32 to vector<1x128xf32>
    %212 = arith.mulf %209, %211 : vector<1x128xf32>
    %213 = arith.addf %160, %212 : vector<1x128xf32>
    %cst_187 = arith.constant 0.000000e+00 : f32
    %214 = vector.broadcast %cst_187 : f32 to vector<14x14x128xf32>
    %c4_188 = arith.constant 4 : index
    %c0_189 = arith.constant 0 : index
    %215 = memref.load %arg2[%c4_188, %c0_189] : memref<8x9xf32, #tpu.memory_space<smem>>
    %c0_190 = arith.constant 0 : index
    %c0_191 = arith.constant 0 : index
    %c0_192 = arith.constant 0 : index
    %216 = vector.load %arg1[%c0_190, %c0_191, %c0_192] : memref<16x16x128xf32, #tpu.memory_space<vmem>>, vector<14x14x128xf32>
    %217 = vector.broadcast %215 : f32 to vector<14x14x128xf32>
    %218 = arith.mulf %217, %216 : vector<14x14x128xf32>
    %219 = arith.addf %214, %218 : vector<14x14x128xf32>
    %c4_193 = arith.constant 4 : index
    %c1_194 = arith.constant 1 : index
    %220 = memref.load %arg2[%c4_193, %c1_194] : memref<8x9xf32, #tpu.memory_space<smem>>
    %c0_195 = arith.constant 0 : index
    %c1_196 = arith.constant 1 : index
    %c0_197 = arith.constant 0 : index
    %221 = vector.load %arg1[%c0_195, %c1_196, %c0_197] : memref<16x16x128xf32, #tpu.memory_space<vmem>>, vector<14x14x128xf32>
    %222 = vector.broadcast %220 : f32 to vector<14x14x128xf32>
    %223 = arith.mulf %222, %221 : vector<14x14x128xf32>
    %224 = arith.addf %219, %223 : vector<14x14x128xf32>
    %c4_198 = arith.constant 4 : index
    %c2_199 = arith.constant 2 : index
    %225 = memref.load %arg2[%c4_198, %c2_199] : memref<8x9xf32, #tpu.memory_space<smem>>
    %c0_200 = arith.constant 0 : index
    %c2_201 = arith.constant 2 : index
    %c0_202 = arith.constant 0 : index
    %226 = vector.load %arg1[%c0_200, %c2_201, %c0_202] : memref<16x16x128xf32, #tpu.memory_space<vmem>>, vector<14x14x128xf32>
    %227 = vector.broadcast %225 : f32 to vector<14x14x128xf32>
    %228 = arith.mulf %227, %226 : vector<14x14x128xf32>
    %229 = arith.addf %224, %228 : vector<14x14x128xf32>
    %c4_203 = arith.constant 4 : index
    %c3_204 = arith.constant 3 : index
    %230 = memref.load %arg2[%c4_203, %c3_204] : memref<8x9xf32, #tpu.memory_space<smem>>
    %c1_205 = arith.constant 1 : index
    %c0_206 = arith.constant 0 : index
    %c0_207 = arith.constant 0 : index
    %231 = vector.load %arg1[%c1_205, %c0_206, %c0_207] : memref<16x16x128xf32, #tpu.memory_space<vmem>>, vector<14x14x128xf32>
    %232 = vector.broadcast %230 : f32 to vector<14x14x128xf32>
    %233 = arith.mulf %232, %231 : vector<14x14x128xf32>
    %234 = arith.addf %229, %233 : vector<14x14x128xf32>
    %c4_208 = arith.constant 4 : index
    %c4_209 = arith.constant 4 : index
    %235 = memref.load %arg2[%c4_208, %c4_209] : memref<8x9xf32, #tpu.memory_space<smem>>
    %c1_210 = arith.constant 1 : index
    %c1_211 = arith.constant 1 : index
    %c0_212 = arith.constant 0 : index
    %236 = vector.load %arg1[%c1_210, %c1_211, %c0_212] : memref<16x16x128xf32, #tpu.memory_space<vmem>>, vector<14x14x128xf32>
    %237 = vector.broadcast %235 : f32 to vector<14x14x128xf32>
    %238 = arith.mulf %237, %236 : vector<14x14x128xf32>
    %239 = arith.addf %234, %238 : vector<14x14x128xf32>
    %c4_213 = arith.constant 4 : index
    %c5_214 = arith.constant 5 : index
    %240 = memref.load %arg2[%c4_213, %c5_214] : memref<8x9xf32, #tpu.memory_space<smem>>
    %c1_215 = arith.constant 1 : index
    %c2_216 = arith.constant 2 : index
    %c0_217 = arith.constant 0 : index
    %241 = vector.load %arg1[%c1_215, %c2_216, %c0_217] : memref<16x16x128xf32, #tpu.memory_space<vmem>>, vector<14x14x128xf32>
    %242 = vector.broadcast %240 : f32 to vector<14x14x128xf32>
    %243 = arith.mulf %242, %241 : vector<14x14x128xf32>
    %244 = arith.addf %239, %243 : vector<14x14x128xf32>
    %c4_218 = arith.constant 4 : index
    %c6_219 = arith.constant 6 : index
    %245 = memref.load %arg2[%c4_218, %c6_219] : memref<8x9xf32, #tpu.memory_space<smem>>
    %c2_220 = arith.constant 2 : index
    %c0_221 = arith.constant 0 : index
    %c0_222 = arith.constant 0 : index
    %246 = vector.load %arg1[%c2_220, %c0_221, %c0_222] : memref<16x16x128xf32, #tpu.memory_space<vmem>>, vector<14x14x128xf32>
    %247 = vector.broadcast %245 : f32 to vector<14x14x128xf32>
    %248 = arith.mulf %247, %246 : vector<14x14x128xf32>
    %249 = arith.addf %244, %248 : vector<14x14x128xf32>
    %c4_223 = arith.constant 4 : index
    %c7_224 = arith.constant 7 : index
    %250 = memref.load %arg2[%c4_223, %c7_224] : memref<8x9xf32, #tpu.memory_space<smem>>
    %c2_225 = arith.constant 2 : index
    %c1_226 = arith.constant 1 : index
    %c0_227 = arith.constant 0 : index
    %251 = vector.load %arg1[%c2_225, %c1_226, %c0_227] : memref<16x16x128xf32, #tpu.memory_space<vmem>>, vector<14x14x128xf32>
    %252 = vector.broadcast %250 : f32 to vector<14x14x128xf32>
    %253 = arith.mulf %252, %251 : vector<14x14x128xf32>
    %254 = arith.addf %249, %253 : vector<14x14x128xf32>
    %c4_228 = arith.constant 4 : index
    %c8_229 = arith.constant 8 : index
    %255 = memref.load %arg2[%c4_228, %c8_229] : memref<8x9xf32, #tpu.memory_space<smem>>
    %c2_230 = arith.constant 2 : index
    %c2_231 = arith.constant 2 : index
    %c0_232 = arith.constant 0 : index
    %256 = vector.load %arg1[%c2_230, %c2_231, %c0_232] : memref<16x16x128xf32, #tpu.memory_space<vmem>>, vector<14x14x128xf32>
    %257 = vector.broadcast %255 : f32 to vector<14x14x128xf32>
    %258 = arith.mulf %257, %256 : vector<14x14x128xf32>
    %259 = arith.addf %254, %258 : vector<14x14x128xf32>
    %cst_233 = arith.constant dense<0xFF800000> : vector<14x128xf32>
    %260 = vector.multi_reduction <maximumf>, %259, %cst_233 [0] : vector<14x14x128xf32> to vector<14x128xf32>
    %cst_234 = arith.constant dense<0xFF800000> : vector<128xf32>
    %261 = vector.multi_reduction <maximumf>, %260, %cst_234 [0] : vector<14x128xf32> to vector<128xf32>
    %262 = vector.shape_cast %261 : vector<128xf32> to vector<1x128xf32>
    %c4_235 = arith.constant 4 : index
    %263 = memref.load %arg3[%c4_235] : memref<8xf32, #tpu.memory_space<smem>>
    %264 = vector.broadcast %263 : f32 to vector<1x128xf32>
    %265 = arith.mulf %262, %264 : vector<1x128xf32>
    %266 = arith.addf %213, %265 : vector<1x128xf32>
    %cst_236 = arith.constant 0.000000e+00 : f32
    %267 = vector.broadcast %cst_236 : f32 to vector<14x14x128xf32>
    %c5_237 = arith.constant 5 : index
    %c0_238 = arith.constant 0 : index
    %268 = memref.load %arg2[%c5_237, %c0_238] : memref<8x9xf32, #tpu.memory_space<smem>>
    %c0_239 = arith.constant 0 : index
    %c0_240 = arith.constant 0 : index
    %c0_241 = arith.constant 0 : index
    %269 = vector.load %arg1[%c0_239, %c0_240, %c0_241] : memref<16x16x128xf32, #tpu.memory_space<vmem>>, vector<14x14x128xf32>
    %270 = vector.broadcast %268 : f32 to vector<14x14x128xf32>
    %271 = arith.mulf %270, %269 : vector<14x14x128xf32>
    %272 = arith.addf %267, %271 : vector<14x14x128xf32>
    %c5_242 = arith.constant 5 : index
    %c1_243 = arith.constant 1 : index
    %273 = memref.load %arg2[%c5_242, %c1_243] : memref<8x9xf32, #tpu.memory_space<smem>>
    %c0_244 = arith.constant 0 : index
    %c1_245 = arith.constant 1 : index
    %c0_246 = arith.constant 0 : index
    %274 = vector.load %arg1[%c0_244, %c1_245, %c0_246] : memref<16x16x128xf32, #tpu.memory_space<vmem>>, vector<14x14x128xf32>
    %275 = vector.broadcast %273 : f32 to vector<14x14x128xf32>
    %276 = arith.mulf %275, %274 : vector<14x14x128xf32>
    %277 = arith.addf %272, %276 : vector<14x14x128xf32>
    %c5_247 = arith.constant 5 : index
    %c2_248 = arith.constant 2 : index
    %278 = memref.load %arg2[%c5_247, %c2_248] : memref<8x9xf32, #tpu.memory_space<smem>>
    %c0_249 = arith.constant 0 : index
    %c2_250 = arith.constant 2 : index
    %c0_251 = arith.constant 0 : index
    %279 = vector.load %arg1[%c0_249, %c2_250, %c0_251] : memref<16x16x128xf32, #tpu.memory_space<vmem>>, vector<14x14x128xf32>
    %280 = vector.broadcast %278 : f32 to vector<14x14x128xf32>
    %281 = arith.mulf %280, %279 : vector<14x14x128xf32>
    %282 = arith.addf %277, %281 : vector<14x14x128xf32>
    %c5_252 = arith.constant 5 : index
    %c3_253 = arith.constant 3 : index
    %283 = memref.load %arg2[%c5_252, %c3_253] : memref<8x9xf32, #tpu.memory_space<smem>>
    %c1_254 = arith.constant 1 : index
    %c0_255 = arith.constant 0 : index
    %c0_256 = arith.constant 0 : index
    %284 = vector.load %arg1[%c1_254, %c0_255, %c0_256] : memref<16x16x128xf32, #tpu.memory_space<vmem>>, vector<14x14x128xf32>
    %285 = vector.broadcast %283 : f32 to vector<14x14x128xf32>
    %286 = arith.mulf %285, %284 : vector<14x14x128xf32>
    %287 = arith.addf %282, %286 : vector<14x14x128xf32>
    %c5_257 = arith.constant 5 : index
    %c4_258 = arith.constant 4 : index
    %288 = memref.load %arg2[%c5_257, %c4_258] : memref<8x9xf32, #tpu.memory_space<smem>>
    %c1_259 = arith.constant 1 : index
    %c1_260 = arith.constant 1 : index
    %c0_261 = arith.constant 0 : index
    %289 = vector.load %arg1[%c1_259, %c1_260, %c0_261] : memref<16x16x128xf32, #tpu.memory_space<vmem>>, vector<14x14x128xf32>
    %290 = vector.broadcast %288 : f32 to vector<14x14x128xf32>
    %291 = arith.mulf %290, %289 : vector<14x14x128xf32>
    %292 = arith.addf %287, %291 : vector<14x14x128xf32>
    %c5_262 = arith.constant 5 : index
    %c5_263 = arith.constant 5 : index
    %293 = memref.load %arg2[%c5_262, %c5_263] : memref<8x9xf32, #tpu.memory_space<smem>>
    %c1_264 = arith.constant 1 : index
    %c2_265 = arith.constant 2 : index
    %c0_266 = arith.constant 0 : index
    %294 = vector.load %arg1[%c1_264, %c2_265, %c0_266] : memref<16x16x128xf32, #tpu.memory_space<vmem>>, vector<14x14x128xf32>
    %295 = vector.broadcast %293 : f32 to vector<14x14x128xf32>
    %296 = arith.mulf %295, %294 : vector<14x14x128xf32>
    %297 = arith.addf %292, %296 : vector<14x14x128xf32>
    %c5_267 = arith.constant 5 : index
    %c6_268 = arith.constant 6 : index
    %298 = memref.load %arg2[%c5_267, %c6_268] : memref<8x9xf32, #tpu.memory_space<smem>>
    %c2_269 = arith.constant 2 : index
    %c0_270 = arith.constant 0 : index
    %c0_271 = arith.constant 0 : index
    %299 = vector.load %arg1[%c2_269, %c0_270, %c0_271] : memref<16x16x128xf32, #tpu.memory_space<vmem>>, vector<14x14x128xf32>
    %300 = vector.broadcast %298 : f32 to vector<14x14x128xf32>
    %301 = arith.mulf %300, %299 : vector<14x14x128xf32>
    %302 = arith.addf %297, %301 : vector<14x14x128xf32>
    %c5_272 = arith.constant 5 : index
    %c7_273 = arith.constant 7 : index
    %303 = memref.load %arg2[%c5_272, %c7_273] : memref<8x9xf32, #tpu.memory_space<smem>>
    %c2_274 = arith.constant 2 : index
    %c1_275 = arith.constant 1 : index
    %c0_276 = arith.constant 0 : index
    %304 = vector.load %arg1[%c2_274, %c1_275, %c0_276] : memref<16x16x128xf32, #tpu.memory_space<vmem>>, vector<14x14x128xf32>
    %305 = vector.broadcast %303 : f32 to vector<14x14x128xf32>
    %306 = arith.mulf %305, %304 : vector<14x14x128xf32>
    %307 = arith.addf %302, %306 : vector<14x14x128xf32>
    %c5_277 = arith.constant 5 : index
    %c8_278 = arith.constant 8 : index
    %308 = memref.load %arg2[%c5_277, %c8_278] : memref<8x9xf32, #tpu.memory_space<smem>>
    %c2_279 = arith.constant 2 : index
    %c2_280 = arith.constant 2 : index
    %c0_281 = arith.constant 0 : index
    %309 = vector.load %arg1[%c2_279, %c2_280, %c0_281] : memref<16x16x128xf32, #tpu.memory_space<vmem>>, vector<14x14x128xf32>
    %310 = vector.broadcast %308 : f32 to vector<14x14x128xf32>
    %311 = arith.mulf %310, %309 : vector<14x14x128xf32>
    %312 = arith.addf %307, %311 : vector<14x14x128xf32>
    %cst_282 = arith.constant dense<0xFF800000> : vector<14x128xf32>
    %313 = vector.multi_reduction <maximumf>, %312, %cst_282 [0] : vector<14x14x128xf32> to vector<14x128xf32>
    %cst_283 = arith.constant dense<0xFF800000> : vector<128xf32>
    %314 = vector.multi_reduction <maximumf>, %313, %cst_283 [0] : vector<14x128xf32> to vector<128xf32>
    %315 = vector.shape_cast %314 : vector<128xf32> to vector<1x128xf32>
    %c5_284 = arith.constant 5 : index
    %316 = memref.load %arg3[%c5_284] : memref<8xf32, #tpu.memory_space<smem>>
    %317 = vector.broadcast %316 : f32 to vector<1x128xf32>
    %318 = arith.mulf %315, %317 : vector<1x128xf32>
    %319 = arith.addf %266, %318 : vector<1x128xf32>
    %cst_285 = arith.constant 0.000000e+00 : f32
    %320 = vector.broadcast %cst_285 : f32 to vector<14x14x128xf32>
    %c6_286 = arith.constant 6 : index
    %c0_287 = arith.constant 0 : index
    %321 = memref.load %arg2[%c6_286, %c0_287] : memref<8x9xf32, #tpu.memory_space<smem>>
    %c0_288 = arith.constant 0 : index
    %c0_289 = arith.constant 0 : index
    %c0_290 = arith.constant 0 : index
    %322 = vector.load %arg1[%c0_288, %c0_289, %c0_290] : memref<16x16x128xf32, #tpu.memory_space<vmem>>, vector<14x14x128xf32>
    %323 = vector.broadcast %321 : f32 to vector<14x14x128xf32>
    %324 = arith.mulf %323, %322 : vector<14x14x128xf32>
    %325 = arith.addf %320, %324 : vector<14x14x128xf32>
    %c6_291 = arith.constant 6 : index
    %c1_292 = arith.constant 1 : index
    %326 = memref.load %arg2[%c6_291, %c1_292] : memref<8x9xf32, #tpu.memory_space<smem>>
    %c0_293 = arith.constant 0 : index
    %c1_294 = arith.constant 1 : index
    %c0_295 = arith.constant 0 : index
    %327 = vector.load %arg1[%c0_293, %c1_294, %c0_295] : memref<16x16x128xf32, #tpu.memory_space<vmem>>, vector<14x14x128xf32>
    %328 = vector.broadcast %326 : f32 to vector<14x14x128xf32>
    %329 = arith.mulf %328, %327 : vector<14x14x128xf32>
    %330 = arith.addf %325, %329 : vector<14x14x128xf32>
    %c6_296 = arith.constant 6 : index
    %c2_297 = arith.constant 2 : index
    %331 = memref.load %arg2[%c6_296, %c2_297] : memref<8x9xf32, #tpu.memory_space<smem>>
    %c0_298 = arith.constant 0 : index
    %c2_299 = arith.constant 2 : index
    %c0_300 = arith.constant 0 : index
    %332 = vector.load %arg1[%c0_298, %c2_299, %c0_300] : memref<16x16x128xf32, #tpu.memory_space<vmem>>, vector<14x14x128xf32>
    %333 = vector.broadcast %331 : f32 to vector<14x14x128xf32>
    %334 = arith.mulf %333, %332 : vector<14x14x128xf32>
    %335 = arith.addf %330, %334 : vector<14x14x128xf32>
    %c6_301 = arith.constant 6 : index
    %c3_302 = arith.constant 3 : index
    %336 = memref.load %arg2[%c6_301, %c3_302] : memref<8x9xf32, #tpu.memory_space<smem>>
    %c1_303 = arith.constant 1 : index
    %c0_304 = arith.constant 0 : index
    %c0_305 = arith.constant 0 : index
    %337 = vector.load %arg1[%c1_303, %c0_304, %c0_305] : memref<16x16x128xf32, #tpu.memory_space<vmem>>, vector<14x14x128xf32>
    %338 = vector.broadcast %336 : f32 to vector<14x14x128xf32>
    %339 = arith.mulf %338, %337 : vector<14x14x128xf32>
    %340 = arith.addf %335, %339 : vector<14x14x128xf32>
    %c6_306 = arith.constant 6 : index
    %c4_307 = arith.constant 4 : index
    %341 = memref.load %arg2[%c6_306, %c4_307] : memref<8x9xf32, #tpu.memory_space<smem>>
    %c1_308 = arith.constant 1 : index
    %c1_309 = arith.constant 1 : index
    %c0_310 = arith.constant 0 : index
    %342 = vector.load %arg1[%c1_308, %c1_309, %c0_310] : memref<16x16x128xf32, #tpu.memory_space<vmem>>, vector<14x14x128xf32>
    %343 = vector.broadcast %341 : f32 to vector<14x14x128xf32>
    %344 = arith.mulf %343, %342 : vector<14x14x128xf32>
    %345 = arith.addf %340, %344 : vector<14x14x128xf32>
    %c6_311 = arith.constant 6 : index
    %c5_312 = arith.constant 5 : index
    %346 = memref.load %arg2[%c6_311, %c5_312] : memref<8x9xf32, #tpu.memory_space<smem>>
    %c1_313 = arith.constant 1 : index
    %c2_314 = arith.constant 2 : index
    %c0_315 = arith.constant 0 : index
    %347 = vector.load %arg1[%c1_313, %c2_314, %c0_315] : memref<16x16x128xf32, #tpu.memory_space<vmem>>, vector<14x14x128xf32>
    %348 = vector.broadcast %346 : f32 to vector<14x14x128xf32>
    %349 = arith.mulf %348, %347 : vector<14x14x128xf32>
    %350 = arith.addf %345, %349 : vector<14x14x128xf32>
    %c6_316 = arith.constant 6 : index
    %c6_317 = arith.constant 6 : index
    %351 = memref.load %arg2[%c6_316, %c6_317] : memref<8x9xf32, #tpu.memory_space<smem>>
    %c2_318 = arith.constant 2 : index
    %c0_319 = arith.constant 0 : index
    %c0_320 = arith.constant 0 : index
    %352 = vector.load %arg1[%c2_318, %c0_319, %c0_320] : memref<16x16x128xf32, #tpu.memory_space<vmem>>, vector<14x14x128xf32>
    %353 = vector.broadcast %351 : f32 to vector<14x14x128xf32>
    %354 = arith.mulf %353, %352 : vector<14x14x128xf32>
    %355 = arith.addf %350, %354 : vector<14x14x128xf32>
    %c6_321 = arith.constant 6 : index
    %c7_322 = arith.constant 7 : index
    %356 = memref.load %arg2[%c6_321, %c7_322] : memref<8x9xf32, #tpu.memory_space<smem>>
    %c2_323 = arith.constant 2 : index
    %c1_324 = arith.constant 1 : index
    %c0_325 = arith.constant 0 : index
    %357 = vector.load %arg1[%c2_323, %c1_324, %c0_325] : memref<16x16x128xf32, #tpu.memory_space<vmem>>, vector<14x14x128xf32>
    %358 = vector.broadcast %356 : f32 to vector<14x14x128xf32>
    %359 = arith.mulf %358, %357 : vector<14x14x128xf32>
    %360 = arith.addf %355, %359 : vector<14x14x128xf32>
    %c6_326 = arith.constant 6 : index
    %c8_327 = arith.constant 8 : index
    %361 = memref.load %arg2[%c6_326, %c8_327] : memref<8x9xf32, #tpu.memory_space<smem>>
    %c2_328 = arith.constant 2 : index
    %c2_329 = arith.constant 2 : index
    %c0_330 = arith.constant 0 : index
    %362 = vector.load %arg1[%c2_328, %c2_329, %c0_330] : memref<16x16x128xf32, #tpu.memory_space<vmem>>, vector<14x14x128xf32>
    %363 = vector.broadcast %361 : f32 to vector<14x14x128xf32>
    %364 = arith.mulf %363, %362 : vector<14x14x128xf32>
    %365 = arith.addf %360, %364 : vector<14x14x128xf32>
    %cst_331 = arith.constant dense<0xFF800000> : vector<14x128xf32>
    %366 = vector.multi_reduction <maximumf>, %365, %cst_331 [0] : vector<14x14x128xf32> to vector<14x128xf32>
    %cst_332 = arith.constant dense<0xFF800000> : vector<128xf32>
    %367 = vector.multi_reduction <maximumf>, %366, %cst_332 [0] : vector<14x128xf32> to vector<128xf32>
    %368 = vector.shape_cast %367 : vector<128xf32> to vector<1x128xf32>
    %c6_333 = arith.constant 6 : index
    %369 = memref.load %arg3[%c6_333] : memref<8xf32, #tpu.memory_space<smem>>
    %370 = vector.broadcast %369 : f32 to vector<1x128xf32>
    %371 = arith.mulf %368, %370 : vector<1x128xf32>
    %372 = arith.addf %319, %371 : vector<1x128xf32>
    %cst_334 = arith.constant 0.000000e+00 : f32
    %373 = vector.broadcast %cst_334 : f32 to vector<14x14x128xf32>
    %c7_335 = arith.constant 7 : index
    %c0_336 = arith.constant 0 : index
    %374 = memref.load %arg2[%c7_335, %c0_336] : memref<8x9xf32, #tpu.memory_space<smem>>
    %c0_337 = arith.constant 0 : index
    %c0_338 = arith.constant 0 : index
    %c0_339 = arith.constant 0 : index
    %375 = vector.load %arg1[%c0_337, %c0_338, %c0_339] : memref<16x16x128xf32, #tpu.memory_space<vmem>>, vector<14x14x128xf32>
    %376 = vector.broadcast %374 : f32 to vector<14x14x128xf32>
    %377 = arith.mulf %376, %375 : vector<14x14x128xf32>
    %378 = arith.addf %373, %377 : vector<14x14x128xf32>
    %c7_340 = arith.constant 7 : index
    %c1_341 = arith.constant 1 : index
    %379 = memref.load %arg2[%c7_340, %c1_341] : memref<8x9xf32, #tpu.memory_space<smem>>
    %c0_342 = arith.constant 0 : index
    %c1_343 = arith.constant 1 : index
    %c0_344 = arith.constant 0 : index
    %380 = vector.load %arg1[%c0_342, %c1_343, %c0_344] : memref<16x16x128xf32, #tpu.memory_space<vmem>>, vector<14x14x128xf32>
    %381 = vector.broadcast %379 : f32 to vector<14x14x128xf32>
    %382 = arith.mulf %381, %380 : vector<14x14x128xf32>
    %383 = arith.addf %378, %382 : vector<14x14x128xf32>
    %c7_345 = arith.constant 7 : index
    %c2_346 = arith.constant 2 : index
    %384 = memref.load %arg2[%c7_345, %c2_346] : memref<8x9xf32, #tpu.memory_space<smem>>
    %c0_347 = arith.constant 0 : index
    %c2_348 = arith.constant 2 : index
    %c0_349 = arith.constant 0 : index
    %385 = vector.load %arg1[%c0_347, %c2_348, %c0_349] : memref<16x16x128xf32, #tpu.memory_space<vmem>>, vector<14x14x128xf32>
    %386 = vector.broadcast %384 : f32 to vector<14x14x128xf32>
    %387 = arith.mulf %386, %385 : vector<14x14x128xf32>
    %388 = arith.addf %383, %387 : vector<14x14x128xf32>
    %c7_350 = arith.constant 7 : index
    %c3_351 = arith.constant 3 : index
    %389 = memref.load %arg2[%c7_350, %c3_351] : memref<8x9xf32, #tpu.memory_space<smem>>
    %c1_352 = arith.constant 1 : index
    %c0_353 = arith.constant 0 : index
    %c0_354 = arith.constant 0 : index
    %390 = vector.load %arg1[%c1_352, %c0_353, %c0_354] : memref<16x16x128xf32, #tpu.memory_space<vmem>>, vector<14x14x128xf32>
    %391 = vector.broadcast %389 : f32 to vector<14x14x128xf32>
    %392 = arith.mulf %391, %390 : vector<14x14x128xf32>
    %393 = arith.addf %388, %392 : vector<14x14x128xf32>
    %c7_355 = arith.constant 7 : index
    %c4_356 = arith.constant 4 : index
    %394 = memref.load %arg2[%c7_355, %c4_356] : memref<8x9xf32, #tpu.memory_space<smem>>
    %c1_357 = arith.constant 1 : index
    %c1_358 = arith.constant 1 : index
    %c0_359 = arith.constant 0 : index
    %395 = vector.load %arg1[%c1_357, %c1_358, %c0_359] : memref<16x16x128xf32, #tpu.memory_space<vmem>>, vector<14x14x128xf32>
    %396 = vector.broadcast %394 : f32 to vector<14x14x128xf32>
    %397 = arith.mulf %396, %395 : vector<14x14x128xf32>
    %398 = arith.addf %393, %397 : vector<14x14x128xf32>
    %c7_360 = arith.constant 7 : index
    %c5_361 = arith.constant 5 : index
    %399 = memref.load %arg2[%c7_360, %c5_361] : memref<8x9xf32, #tpu.memory_space<smem>>
    %c1_362 = arith.constant 1 : index
    %c2_363 = arith.constant 2 : index
    %c0_364 = arith.constant 0 : index
    %400 = vector.load %arg1[%c1_362, %c2_363, %c0_364] : memref<16x16x128xf32, #tpu.memory_space<vmem>>, vector<14x14x128xf32>
    %401 = vector.broadcast %399 : f32 to vector<14x14x128xf32>
    %402 = arith.mulf %401, %400 : vector<14x14x128xf32>
    %403 = arith.addf %398, %402 : vector<14x14x128xf32>
    %c7_365 = arith.constant 7 : index
    %c6_366 = arith.constant 6 : index
    %404 = memref.load %arg2[%c7_365, %c6_366] : memref<8x9xf32, #tpu.memory_space<smem>>
    %c2_367 = arith.constant 2 : index
    %c0_368 = arith.constant 0 : index
    %c0_369 = arith.constant 0 : index
    %405 = vector.load %arg1[%c2_367, %c0_368, %c0_369] : memref<16x16x128xf32, #tpu.memory_space<vmem>>, vector<14x14x128xf32>
    %406 = vector.broadcast %404 : f32 to vector<14x14x128xf32>
    %407 = arith.mulf %406, %405 : vector<14x14x128xf32>
    %408 = arith.addf %403, %407 : vector<14x14x128xf32>
    %c7_370 = arith.constant 7 : index
    %c7_371 = arith.constant 7 : index
    %409 = memref.load %arg2[%c7_370, %c7_371] : memref<8x9xf32, #tpu.memory_space<smem>>
    %c2_372 = arith.constant 2 : index
    %c1_373 = arith.constant 1 : index
    %c0_374 = arith.constant 0 : index
    %410 = vector.load %arg1[%c2_372, %c1_373, %c0_374] : memref<16x16x128xf32, #tpu.memory_space<vmem>>, vector<14x14x128xf32>
    %411 = vector.broadcast %409 : f32 to vector<14x14x128xf32>
    %412 = arith.mulf %411, %410 : vector<14x14x128xf32>
    %413 = arith.addf %408, %412 : vector<14x14x128xf32>
    %c7_375 = arith.constant 7 : index
    %c8_376 = arith.constant 8 : index
    %414 = memref.load %arg2[%c7_375, %c8_376] : memref<8x9xf32, #tpu.memory_space<smem>>
    %c2_377 = arith.constant 2 : index
    %c2_378 = arith.constant 2 : index
    %c0_379 = arith.constant 0 : index
    %415 = vector.load %arg1[%c2_377, %c2_378, %c0_379] : memref<16x16x128xf32, #tpu.memory_space<vmem>>, vector<14x14x128xf32>
    %416 = vector.broadcast %414 : f32 to vector<14x14x128xf32>
    %417 = arith.mulf %416, %415 : vector<14x14x128xf32>
    %418 = arith.addf %413, %417 : vector<14x14x128xf32>
    %cst_380 = arith.constant dense<0xFF800000> : vector<14x128xf32>
    %419 = vector.multi_reduction <maximumf>, %418, %cst_380 [0] : vector<14x14x128xf32> to vector<14x128xf32>
    %cst_381 = arith.constant dense<0xFF800000> : vector<128xf32>
    %420 = vector.multi_reduction <maximumf>, %419, %cst_381 [0] : vector<14x128xf32> to vector<128xf32>
    %421 = vector.shape_cast %420 : vector<128xf32> to vector<1x128xf32>
    %c7_382 = arith.constant 7 : index
    %422 = memref.load %arg3[%c7_382] : memref<8xf32, #tpu.memory_space<smem>>
    %423 = vector.broadcast %422 : f32 to vector<1x128xf32>
    %424 = arith.mulf %421, %423 : vector<1x128xf32>
    %425 = arith.addf %372, %424 : vector<1x128xf32>
    %426 = arith.negf %425 : vector<1x128xf32>
    %427 = math.exp %426 : vector<1x128xf32>
    %cst_383 = arith.constant 1.000000e+00 : f32
    %428 = vector.broadcast %cst_383 : f32 to vector<1x128xf32>
    %429 = arith.addf %428, %427 : vector<1x128xf32>
    %430 = arith.divf %428, %429 : vector<1x128xf32>
    %c0_384 = arith.constant 0 : index
    %c0_385 = arith.constant 0 : index
    %431 = vector.load %arg5[%c0_384, %c0_385] : memref<1x128xf32, #tpu.memory_space<vmem>>, vector<1x128xf32>
    tpu.vector_store %arg5[%c0_384, %c0_385], %430 {strides = array<i32>} : memref<1x128xf32, #tpu.memory_space<vmem>>, vector<1x128xf32>,
    return
  }
  func.func @transform_0(%arg0: i32) -> (i32, i32, i32) {
    %c0_i32 = arith.constant 0 : i32
    %c0_i32_0 = arith.constant 0 : i32
    %c0_i32_1 = arith.constant 0 : i32
    return %c0_i32, %c0_i32_0, %arg0 : i32, i32, i32
  }
  func.func @transform_1(%arg0: i32) -> (i32, i32) {
    %c0_i32 = arith.constant 0 : i32
    %c0_i32_0 = arith.constant 0 : i32
    %c0_i32_1 = arith.constant 0 : i32
    return %c0_i32, %c0_i32_0 : i32, i32
  }
  func.func @transform_2(%arg0: i32) -> i32 {
    %c0_i32 = arith.constant 0 : i32
    %c0_i32_0 = arith.constant 0 : i32
    return %c0_i32 : i32
  }
  func.func @transform_3(%arg0: i32) -> i32 {
    %c0_i32 = arith.constant 0 : i32
    %c0_i32_0 = arith.constant 0 : i32
    return %c0_i32 : i32
  }
  func.func @transform_4(%arg0: i32) -> (i32, i32) {
    %c0_i32 = arith.constant 0 : i32
    %c0_i32_0 = arith.constant 0 : i32
    return %arg0, %c0_i32 : i32, i32
  }
}

</mosaic_0001>

<llo_original>
// kernel: tpu_custom_call.1
$region0: #{tpu_custom_call.1}
  #allocation0 [shape = 'u32[]', space=smem, size = 0x4, offset = 0x4, fixed_abs, tag = 'smem constant byte address 0x4 - core index']
  #allocation1 [shape = 'u32[72,128]{1,0:T(1,128)}', space=vmem, size = 0x9000, scoped, tag = 'internal scratch']
  #allocation2 [shape = 'f32[1]{0:T(128)S(6)}', space=smem, size = 0x200, scoped, tag = 'scoped memory for tpu_custom_call.1']
  %s0 = inlined_call_operand.hbm [shape: f32[16,16,128], index: 0, kind: input, shape index: {}]
  %s1 = inlined_call_operand.hbm [shape: f32[8,9], index: 1, kind: input, shape index: {}]
  %s2 = inlined_call_operand.vmem [shape: f32[8], index: 2, kind: input, shape index: {}]
  %s3 = inlined_call_operand.<no memory space> [shape: f32[1], index: 3, kind: input, shape index: {}]
  %s4 = inlined_call_operand.hbm [shape: f32[1,128], index: 4, kind: output, shape index: {}]
  %s5 = sld [smem:[#allocation0]]
  $region38: #{tpu_custom_call.1} parent=0
    _
  %s7 = ssub.s32 1, %s5
  %s8 = scalar_select 0, %s7, %s5
  %9 = sst [smem:[#allocation2]] %s3
  $region1: #{tpu_custom_call.1} parent=0
    #allocation3 [shape = 'u8[131072]{0}', space=vmem, size = 0x20000, scoped, tag = 'input window, operand 0, single buffered']
    #allocation4 [shape = 's32[1]{0}', space=sflag, size = 0x4, scoped, tag = 'scoped memory for tpu_custom_call.1']
    #allocation5 [shape = 's32[1]{0}', space=sflag, size = 0x4, scoped, tag = 'scoped memory for tpu_custom_call.1']
    #allocation6 [shape = 's32[1]{0}', space=sflag, size = 0x4, scoped, tag = 'scoped memory for tpu_custom_call.1']
    #allocation7 [shape = 's32[1]{0}', space=sflag, size = 0x4, scoped, tag = 'scoped memory for tpu_custom_call.1']
    #allocation8 [shape = 'u8[4096]{0}', space=smem, size = 0x1000, scoped, tag = 'input window, operand 1, single buffered']
    #allocation9 [shape = 'u8[512]{0}', space=smem, size = 0x200, scoped, tag = 'input window, operand 2, single buffered']
    #allocation10 [shape = 'u8[512]{0}', space=vmem, size = 0x400, scoped, tag = 'output window, operand 0, single buffered']
    %10 = vsyncpa [#allocation4], 0
    %11 = vsyncpa [#allocation6], 0
    %12 = vsyncpa [#allocation7], 0
    %13 = vsyncpa [#allocation5], 0
    // Predicated region
    $region2: #{tpu_custom_call.1} parent=1 // pred_check
      _
    $region3: #{tpu_custom_call.1} parent=1 // pred_check_branch
      %15 = sbr.rel (0) target = $region5
    $region4: #{tpu_custom_call.1} parent=1 // pred_region
      %17 = vsyncadd [#allocation4], 0
      %s18 = sshll.u32 %s0, 4
      %s19 = int_to_ptr.hbm [resolvable:$true] %s18
      %s20 = sshll.u32 [#allocation3], 4
      %s21 = int_to_ptr.vmem [resolvable:$true] %s20
      %26 = dma.hbm_to_vmem [thread:$0]  %s19, 4096, %s21, [#allocation4], 128, 128, 8
    $region5: #{tpu_custom_call.1} parent=1 // pred_fallthru
      _
    // Predicated region
    $region6: #{tpu_custom_call.1} parent=1 // pred_check
      _
    $region7: #{tpu_custom_call.1} parent=1 // pred_check_branch
      %28 = sbr.rel (0) target = $region9
    $region8: #{tpu_custom_call.1} parent=1 // pred_region
      %30 = vsyncadd [#allocation6], 0
      %s32 = sshll.u32 %s1, 4
      %s33 = int_to_ptr.hbm [resolvable:$true] %s32
      %35 = dma.hbm_to_smem %s33, 128, [#allocation8], [#allocation6]
    $region9: #{tpu_custom_call.1} parent=1 // pred_fallthru
      _
    // Predicated region
    $region10: #{tpu_custom_call.1} parent=1 // pred_check
      _
    $region11: #{tpu_custom_call.1} parent=1 // pred_check_branch
      %37 = sbr.rel (0) target = $region13
    $region12: #{tpu_custom_call.1} parent=1 // pred_region
      %39 = vsyncadd [#allocation7], 0
      %s41 = sshll.u32 %s2, 4
      %s42 = int_to_ptr.vmem [resolvable:$true] %s41
      %44 = dma.vmem_to_smem %s42, 16, [#allocation9], [#allocation7]
    $region13: #{tpu_custom_call.1} parent=1 // pred_fallthru
      _
    // Predicated region
    $region14: #{tpu_custom_call.1} parent=1 // pred_check
      _
    $region15: #{tpu_custom_call.1} parent=1 // pred_check_branch
      %46 = sbr.rel (0) target = $region17
    $region16: #{tpu_custom_call.1} parent=1 // pred_region
      _
    $region17: #{tpu_custom_call.1} parent=1 // pred_fallthru
      _
    // Predicated region
    $region18: #{tpu_custom_call.1} parent=1 // pred_check
      _
    $region19: #{tpu_custom_call.1} parent=1 // pred_check_branch
      %48 = sbr.rel (0) target = $region21
    $region20: #{tpu_custom_call.1} parent=1 // pred_region
      %50 = dma.done [#allocation4], 4096
    $region21: #{tpu_custom_call.1} parent=1 // pred_fallthru
      _
    // Predicated region
    $region22: #{tpu_custom_call.1} parent=1 // pred_check
      _
    $region23: #{tpu_custom_call.1} parent=1 // pred_check_branch
      %52 = sbr.rel (0) target = $region25
    $region24: #{tpu_custom_call.1} parent=1 // pred_region
      %54 = dma.done [#allocation6], 128
    $region25: #{tpu_custom_call.1} parent=1 // pred_fallthru
      _
    // Predicated region
    $region26: #{tpu_custom_call.1} parent=1 // pred_check
      _
    $region27: #{tpu_custom_call.1} parent=1 // pred_check_branch
      %56 = sbr.rel (0) target = $region29
    $region28: #{tpu_custom_call.1} parent=1 // pred_region
      %58 = dma.done [#allocation7], 16
    $region29: #{tpu_custom_call.1} parent=1 // pred_fallthru
      _
    %59 = sfence
    %s60 = sld [smem:[#allocation2]]
    %v61 = vstv %s60
    %s62 = sld [smem:[#allocation8]]
    %v63 = vld [vmem:[#allocation3] sm:$0xff]
    %v64 = vld [vmem:[#allocation3 + $0x8] sm:$0x3f]
    %v65 = vld [vmem:[#allocation3 + $0x10] sm:$0xff]
    %v66 = vld [vmem:[#allocation3 + $0x18] sm:$0x3f]
    %v67 = vld [vmem:[#allocation3 + $0x20] sm:$0xff]
    %v68 = vld [vmem:[#allocation3 + $0x28] sm:$0x3f]
    %v69 = vld [vmem:[#allocation3 + $0x30] sm:$0xff]
    %v70 = vld [vmem:[#allocation3 + $0x38] sm:$0x3f]
    %v71 = vld [vmem:[#allocation3 + $0x40] sm:$0xff]
    %v72 = vld [vmem:[#allocation3 + $0x48] sm:$0x3f]
    %v73 = vld [vmem:[#allocation3 + $0x50] sm:$0xff]
    %v74 = vld [vmem:[#allocation3 + $0x58] sm:$0x3f]
    %v75 = vld [vmem:[#allocation3 + $0x60] sm:$0xff]
    %v76 = vld [vmem:[#allocation3 + $0x68] sm:$0x3f]
    %v77 = vld [vmem:[#allocation3 + $0x70] sm:$0xff]
    %v78 = vld [vmem:[#allocation3 + $0x78] sm:$0x3f]
    %v79 = vld [vmem:[#allocation3 + $0x80] sm:$0xff]
    %v80 = vld [vmem:[#allocation3 + $0x88] sm:$0x3f]
    %v81 = vld [vmem:[#allocation3 + $0x90] sm:$0xff]
    %v82 = vld [vmem:[#allocation3 + $0x98] sm:$0x3f]
    %v83 = vld [vmem:[#allocation3 + $0xa0] sm:$0xff]
    %v84 = vld [vmem:[#allocation3 + $0xa8] sm:$0x3f]
    %v85 = vld [vmem:[#allocation3 + $0xb0] sm:$0xff]
    %v86 = vld [vmem:[#allocation3 + $0xb8] sm:$0x3f]
    %v87 = vld [vmem:[#allocation3 + $0xc0] sm:$0xff]
    %v88 = vld [vmem:[#allocation3 + $0xc8] sm:$0x3f]
    %v89 = vld [vmem:[#allocation3 + $0xd0] sm:$0xff]
    %v90 = vld [vmem:[#allocation3 + $0xd8] sm:$0x3f]
    %v91 = vstv %s62
    %v92 = vmul.f32 %v91, %v63
    %v93 = vmul.f32 %v91, %v64
    %v94 = vmul.f32 %v91, %v65
    %v95 = vmul.f32 %v91, %v66
    %v96 = vmul.f32 %v91, %v67
    %v97 = vmul.f32 %v91, %v68
    %v98 = vmul.f32 %v91, %v69
    %v99 = vmul.f32 %v91, %v70
    %v100 = vmul.f32 %v91, %v71
    %v101 = vmul.f32 %v91, %v72
    %v102 = vmul.f32 %v91, %v73
    %v103 = vmul.f32 %v91, %v74
    %v104 = vmul.f32 %v91, %v75
    %v105 = vmul.f32 %v91, %v76
    %v106 = vmul.f32 %v91, %v77
    %v107 = vmul.f32 %v91, %v78
    %v108 = vmul.f32 %v91, %v79
    %v109 = vmul.f32 %v91, %v80
    %v110 = vmul.f32 %v91, %v81
    %v111 = vmul.f32 %v91, %v82
    %v112 = vmul.f32 %v91, %v83
    %v113 = vmul.f32 %v91, %v84
    %v114 = vmul.f32 %v91, %v85
    %v115 = vmul.f32 %v91, %v86
    %v116 = vmul.f32 %v91, %v87
    %v117 = vmul.f32 %v91, %v88
    %v118 = vmul.f32 %v91, %v89
    %v119 = vmul.f32 %v91, %v90
    %v120 = vadd.f32 %v92, 0.0
    %v121 = vadd.f32 %v93, 0.0
    %v122 = vadd.f32 %v94, 0.0
    %v123 = vadd.f32 %v95, 0.0
    %v124 = vadd.f32 %v96, 0.0
    %v125 = vadd.f32 %v97, 0.0
    %v126 = vadd.f32 %v98, 0.0
    %v127 = vadd.f32 %v99, 0.0
    %v128 = vadd.f32 %v100, 0.0
    %v129 = vadd.f32 %v101, 0.0
    %v130 = vadd.f32 %v102, 0.0
    %v131 = vadd.f32 %v103, 0.0
    %v132 = vadd.f32 %v104, 0.0
    %v133 = vadd.f32 %v105, 0.0
    %v134 = vadd.f32 %v106, 0.0
    %v135 = vadd.f32 %v107, 0.0
    %v136 = vadd.f32 %v108, 0.0
    %v137 = vadd.f32 %v109, 0.0
    %v138 = vadd.f32 %v110, 0.0
    %v139 = vadd.f32 %v111, 0.0
    %v140 = vadd.f32 %v112, 0.0
    %v141 = vadd.f32 %v113, 0.0
    %v142 = vadd.f32 %v114, 0.0
    %v143 = vadd.f32 %v115, 0.0
    %v144 = vadd.f32 %v116, 0.0
    %v145 = vadd.f32 %v117, 0.0
    %v146 = vadd.f32 %v118, 0.0
    %v147 = vadd.f32 %v119, 0.0
    %s148 = sld [smem:[#allocation8 + $0x1]]
    %v149 = vld [vmem:[#allocation3 + $0x1] sm:$0xff]
    %v150 = vld [vmem:[#allocation3 + $0x9] sm:$0x3f]
    %v151 = vld [vmem:[#allocation3 + $0x11] sm:$0xff]
    %v152 = vld [vmem:[#allocation3 + $0x19] sm:$0x3f]
    %v153 = vld [vmem:[#allocation3 + $0x21] sm:$0xff]
    %v154 = vld [vmem:[#allocation3 + $0x29] sm:$0x3f]
    %v155 = vld [vmem:[#allocation3 + $0x31] sm:$0xff]
    %v156 = vld [vmem:[#allocation3 + $0x39] sm:$0x3f]
    %v157 = vld [vmem:[#allocation3 + $0x41] sm:$0xff]
    %v158 = vld [vmem:[#allocation3 + $0x49] sm:$0x3f]
    %v159 = vld [vmem:[#allocation3 + $0x51] sm:$0xff]
    %v160 = vld [vmem:[#allocation3 + $0x59] sm:$0x3f]
    %v161 = vld [vmem:[#allocation3 + $0x61] sm:$0xff]
    %v162 = vld [vmem:[#allocation3 + $0x69] sm:$0x3f]
    %v163 = vld [vmem:[#allocation3 + $0x71] sm:$0xff]
    %v164 = vld [vmem:[#allocation3 + $0x79] sm:$0x3f]
    %v165 = vld [vmem:[#allocation3 + $0x81] sm:$0xff]
    %v166 = vld [vmem:[#allocation3 + $0x89] sm:$0x3f]
    %v167 = vld [vmem:[#allocation3 + $0x91] sm:$0xff]
    %v168 = vld [vmem:[#allocation3 + $0x99] sm:$0x3f]
    %v169 = vld [vmem:[#allocation3 + $0xa1] sm:$0xff]
    %v170 = vld [vmem:[#allocation3 + $0xa9] sm:$0x3f]
    %v171 = vld [vmem:[#allocation3 + $0xb1] sm:$0xff]
    %v172 = vld [vmem:[#allocation3 + $0xb9] sm:$0x3f]
    %v173 = vld [vmem:[#allocation3 + $0xc1] sm:$0xff]
    %v174 = vld [vmem:[#allocation3 + $0xc9] sm:$0x3f]
    %v175 = vld [vmem:[#allocation3 + $0xd1] sm:$0xff]
    %v176 = vld [vmem:[#allocation3 + $0xd9] sm:$0x3f]
    %v177 = vstv %s148
    %v178 = vmul.f32 %v177, %v149
    %v179 = vmul.f32 %v177, %v150
    %v180 = vmul.f32 %v177, %v151
    %v181 = vmul.f32 %v177, %v152
    %v182 = vmul.f32 %v177, %v153
    %v183 = vmul.f32 %v177, %v154
    %v184 = vmul.f32 %v177, %v155
    %v185 = vmul.f32 %v177, %v156
    %v186 = vmul.f32 %v177, %v157
    %v187 = vmul.f32 %v177, %v158
    %v188 = vmul.f32 %v177, %v159
    %v189 = vmul.f32 %v177, %v160
    %v190 = vmul.f32 %v177, %v161
    %v191 = vmul.f32 %v177, %v162
    %v192 = vmul.f32 %v177, %v163
    %v193 = vmul.f32 %v177, %v164
    %v194 = vmul.f32 %v177, %v165
    %v195 = vmul.f32 %v177, %v166
    %v196 = vmul.f32 %v177, %v167
    %v197 = vmul.f32 %v177, %v168
    %v198 = vmul.f32 %v177, %v169
    %v199 = vmul.f32 %v177, %v170
    %v200 = vmul.f32 %v177, %v171
    %v201 = vmul.f32 %v177, %v172
    %v202 = vmul.f32 %v177, %v173
    %v203 = vmul.f32 %v177, %v174
    %v204 = vmul.f32 %v177, %v175
    %v205 = vmul.f32 %v177, %v176
    %v206 = vadd.f32 %v120, %v178
    %v207 = vadd.f32 %v121, %v179
    %v208 = vadd.f32 %v122, %v180
    %v209 = vadd.f32 %v123, %v181
    %v210 = vadd.f32 %v124, %v182
    %v211 = vadd.f32 %v125, %v183
    %v212 = vadd.f32 %v126, %v184
    %v213 = vadd.f32 %v127, %v185
    %v214 = vadd.f32 %v128, %v186
    %v215 = vadd.f32 %v129, %v187
    %v216 = vadd.f32 %v130, %v188
    %v217 = vadd.f32 %v131, %v189
    %v218 = vadd.f32 %v132, %v190
    %v219 = vadd.f32 %v133, %v191
    %v220 = vadd.f32 %v134, %v192
    %v221 = vadd.f32 %v135, %v193
    %v222 = vadd.f32 %v136, %v194
    %v223 = vadd.f32 %v137, %v195
    %v224 = vadd.f32 %v138, %v196
    %v225 = vadd.f32 %v139, %v197
    %v226 = vadd.f32 %v140, %v198
    %v227 = vadd.f32 %v141, %v199
    %v228 = vadd.f32 %v142, %v200
    %v229 = vadd.f32 %v143, %v201
    %v230 = vadd.f32 %v144, %v202
    %v231 = vadd.f32 %v145, %v203
    %v232 = vadd.f32 %v146, %v204
    %v233 = vadd.f32 %v147, %v205
    %s234 = sld [smem:[#allocation8 + $0x2]]
    %v235 = vld [vmem:[#allocation3 + $0x2] sm:$0xff]
    %v236 = vld [vmem:[#allocation3 + $0xa] sm:$0x3f]
    %v237 = vld [vmem:[#allocation3 + $0x12] sm:$0xff]
    %v238 = vld [vmem:[#allocation3 + $0x1a] sm:$0x3f]
    %v239 = vld [vmem:[#allocation3 + $0x22] sm:$0xff]
    %v240 = vld [vmem:[#allocation3 + $0x2a] sm:$0x3f]
    %v241 = vld [vmem:[#allocation3 + $0x32] sm:$0xff]
    %v242 = vld [vmem:[#allocation3 + $0x3a] sm:$0x3f]
    %v243 = vld [vmem:[#allocation3 + $0x42] sm:$0xff]
    %v244 = vld [vmem:[#allocation3 + $0x4a] sm:$0x3f]
    %v245 = vld [vmem:[#allocation3 + $0x52] sm:$0xff]
    %v246 = vld [vmem:[#allocation3 + $0x5a] sm:$0x3f]
    %v247 = vld [vmem:[#allocation3 + $0x62] sm:$0xff]
    %v248 = vld [vmem:[#allocation3 + $0x6a] sm:$0x3f]
    %v249 = vld [vmem:[#allocation3 + $0x72] sm:$0xff]
    %v250 = vld [vmem:[#allocation3 + $0x7a] sm:$0x3f]
    %v251 = vld [vmem:[#allocation3 + $0x82] sm:$0xff]
    %v252 = vld [vmem:[#allocation3 + $0x8a] sm:$0x3f]
    %v253 = vld [vmem:[#allocation3 + $0x92] sm:$0xff]
    %v254 = vld [vmem:[#allocation3 + $0x9a] sm:$0x3f]
    %v255 = vld [vmem:[#allocation3 + $0xa2] sm:$0xff]
    %v256 = vld [vmem:[#allocation3 + $0xaa] sm:$0x3f]
    %v257 = vld [vmem:[#allocation3 + $0xb2] sm:$0xff]
    %v258 = vld [vmem:[#allocation3 + $0xba] sm:$0x3f]
    %v259 = vld [vmem:[#allocation3 + $0xc2] sm:$0xff]
    %v260 = vld [vmem:[#allocation3 + $0xca] sm:$0x3f]
    %v261 = vld [vmem:[#allocation3 + $0xd2] sm:$0xff]
    %v262 = vld [vmem:[#allocation3 + $0xda] sm:$0x3f]
    %v263 = vstv %s234
    %v264 = vmul.f32 %v263, %v235
    %v265 = vmul.f32 %v263, %v236
    %v266 = vmul.f32 %v263, %v237
    %v267 = vmul.f32 %v263, %v238
    %v268 = vmul.f32 %v263, %v239
    %v269 = vmul.f32 %v263, %v240
    %v270 = vmul.f32 %v263, %v241
    %v271 = vmul.f32 %v263, %v242
    %v272 = vmul.f32 %v263, %v243
    %v273 = vmul.f32 %v263, %v244
    %v274 = vmul.f32 %v263, %v245
    %v275 = vmul.f32 %v263, %v246
    %v276 = vmul.f32 %v263, %v247
    %v277 = vmul.f32 %v263, %v248
    %v278 = vmul.f32 %v263, %v249
    %v279 = vmul.f32 %v263, %v250
    %v280 = vmul.f32 %v263, %v251
    %v281 = vmul.f32 %v263, %v252
    %v282 = vmul.f32 %v263, %v253
    %v283 = vmul.f32 %v263, %v254
    %v284 = vmul.f32 %v263, %v255
    %v285 = vmul.f32 %v263, %v256
    %v286 = vmul.f32 %v263, %v257
    %v287 = vmul.f32 %v263, %v258
    %v288 = vmul.f32 %v263, %v259
    %v289 = vmul.f32 %v263, %v260
    %v290 = vmul.f32 %v263, %v261
    %v291 = vmul.f32 %v263, %v262
    %v292 = vadd.f32 %v206, %v264
    %v293 = vadd.f32 %v207, %v265
    %v294 = vadd.f32 %v208, %v266
    %v295 = vadd.f32 %v209, %v267
    %v296 = vadd.f32 %v210, %v268
    %v297 = vadd.f32 %v211, %v269
    %v298 = vadd.f32 %v212, %v270
    %v299 = vadd.f32 %v213, %v271
    %v300 = vadd.f32 %v214, %v272
    %v301 = vadd.f32 %v215, %v273
    %v302 = vadd.f32 %v216, %v274
    %v303 = vadd.f32 %v217, %v275
    %v304 = vadd.f32 %v218, %v276
    %v305 = vadd.f32 %v219, %v277
    %v306 = vadd.f32 %v220, %v278
    %v307 = vadd.f32 %v221, %v279
    %v308 = vadd.f32 %v222, %v280
    %v309 = vadd.f32 %v223, %v281
    %v310 = vadd.f32 %v224, %v282
    %v311 = vadd.f32 %v225, %v283
    %v312 = vadd.f32 %v226, %v284
    %v313 = vadd.f32 %v227, %v285
    %v314 = vadd.f32 %v228, %v286
    %v315 = vadd.f32 %v229, %v287
    %v316 = vadd.f32 %v230, %v288
    %v317 = vadd.f32 %v231, %v289
    %v318 = vadd.f32 %v232, %v290
    %v319 = vadd.f32 %v233, %v291
    %s320 = sld [smem:[#allocation8 + $0x3]]
    %s321 = scalar_lea.vmem [#allocation3], 16
    %v322 = vld [vmem:[%s321] sm:$0xff]
    %v323 = vld [vmem:[%s321 + $0x8] sm:$0x3f]
    %v324 = vld [vmem:[%s321 + $0x10] sm:$0xff]
    %v325 = vld [vmem:[%s321 + $0x18] sm:$0x3f]
    %v326 = vld [vmem:[%s321 + $0x20] sm:$0xff]
    %v327 = vld [vmem:[%s321 + $0x28] sm:$0x3f]
    %v328 = vld [vmem:[%s321 + $0x30] sm:$0xff]
    %v329 = vld [vmem:[%s321 + $0x38] sm:$0x3f]
    %v330 = vld [vmem:[%s321 + $0x40] sm:$0xff]
    %v331 = vld [vmem:[%s321 + $0x48] sm:$0x3f]
    %v332 = vld [vmem:[%s321 + $0x50] sm:$0xff]
    %v333 = vld [vmem:[%s321 + $0x58] sm:$0x3f]
    %v334 = vld [vmem:[%s321 + $0x60] sm:$0xff]
    %v335 = vld [vmem:[%s321 + $0x68] sm:$0x3f]
    %v336 = vld [vmem:[%s321 + $0x70] sm:$0xff]
    %v337 = vld [vmem:[%s321 + $0x78] sm:$0x3f]
    %v338 = vld [vmem:[%s321 + $0x80] sm:$0xff]
    %v339 = vld [vmem:[%s321 + $0x88] sm:$0x3f]
    %v340 = vld [vmem:[%s321 + $0x90] sm:$0xff]
    %v341 = vld [vmem:[%s321 + $0x98] sm:$0x3f]
    %v342 = vld [vmem:[%s321 + $0xa0] sm:$0xff]
    %v343 = vld [vmem:[%s321 + $0xa8] sm:$0x3f]
    %v344 = vld [vmem:[%s321 + $0xb0] sm:$0xff]
    %v345 = vld [vmem:[%s321 + $0xb8] sm:$0x3f]
    %v346 = vld [vmem:[%s321 + $0xc0] sm:$0xff]
    %v347 = vld [vmem:[%s321 + $0xc8] sm:$0x3f]
    %v348 = vld [vmem:[%s321 + $0xd0] sm:$0xff]
    %v349 = vld [vmem:[%s321 + $0xd8] sm:$0x3f]
    %v350 = vstv %s320
    %v351 = vmul.f32 %v350, %v322
    %v352 = vmul.f32 %v350, %v323
    %v353 = vmul.f32 %v350, %v324
    %v354 = vmul.f32 %v350, %v325
    %v355 = vmul.f32 %v350, %v326
    %v356 = vmul.f32 %v350, %v327
    %v357 = vmul.f32 %v350, %v328
    %v358 = vmul.f32 %v350, %v329
    %v359 = vmul.f32 %v350, %v330
    %v360 = vmul.f32 %v350, %v331
    %v361 = vmul.f32 %v350, %v332
    %v362 = vmul.f32 %v350, %v333
    %v363 = vmul.f32 %v350, %v334
    %v364 = vmul.f32 %v350, %v335
    %v365 = vmul.f32 %v350, %v336
    %v366 = vmul.f32 %v350, %v337
    %v367 = vmul.f32 %v350, %v338
    %v368 = vmul.f32 %v350, %v339
    %v369 = vmul.f32 %v350, %v340
    %v370 = vmul.f32 %v350, %v341
    %v371 = vmul.f32 %v350, %v342
    %v372 = vmul.f32 %v350, %v343
    %v373 = vmul.f32 %v350, %v344
    %v374 = vmul.f32 %v350, %v345
    %v375 = vmul.f32 %v350, %v346
    %v376 = vmul.f32 %v350, %v347
    %v377 = vmul.f32 %v350, %v348
    %v378 = vmul.f32 %v350, %v349
    %v379 = vadd.f32 %v292, %v351
    %v380 = vadd.f32 %v293, %v352
    %v381 = vadd.f32 %v294, %v353
    %v382 = vadd.f32 %v295, %v354
    %v383 = vadd.f32 %v296, %v355
    %v384 = vadd.f32 %v297, %v356
    %v385 = vadd.f32 %v298, %v357
    %v386 = vadd.f32 %v299, %v358
    %v387 = vadd.f32 %v300, %v359
    %v388 = vadd.f32 %v301, %v360
    %v389 = vadd.f32 %v302, %v361
    %v390 = vadd.f32 %v303, %v362
    %v391 = vadd.f32 %v304, %v363
    %v392 = vadd.f32 %v305, %v364
    %v393 = vadd.f32 %v306, %v365
    %v394 = vadd.f32 %v307, %v366
    %v395 = vadd.f32 %v308, %v367
    %v396 = vadd.f32 %v309, %v368
    %v397 = vadd.f32 %v310, %v369
    %v398 = vadd.f32 %v311, %v370
    %v399 = vadd.f32 %v312, %v371
    %v400 = vadd.f32 %v313, %v372
    %v401 = vadd.f32 %v314, %v373
    %v402 = vadd.f32 %v315, %v374
    %v403 = vadd.f32 %v316, %v375
    %v404 = vadd.f32 %v317, %v376
    %v405 = vadd.f32 %v318, %v377
    %v406 = vadd.f32 %v319, %v378
    %s407 = sld [smem:[#allocation8 + $0x4]]
    %v408 = vld [vmem:[%s321 + $0x1] sm:$0xff]
    %v409 = vld [vmem:[%s321 + $0x9] sm:$0x3f]
    %v410 = vld [vmem:[%s321 + $0x11] sm:$0xff]
    %v411 = vld [vmem:[%s321 + $0x19] sm:$0x3f]
    %v412 = vld [vmem:[%s321 + $0x21] sm:$0xff]
    %v413 = vld [vmem:[%s321 + $0x29] sm:$0x3f]
    %v414 = vld [vmem:[%s321 + $0x31] sm:$0xff]
    %v415 = vld [vmem:[%s321 + $0x39] sm:$0x3f]
    %v416 = vld [vmem:[%s321 + $0x41] sm:$0xff]
    %v417 = vld [vmem:[%s321 + $0x49] sm:$0x3f]
    %v418 = vld [vmem:[%s321 + $0x51] sm:$0xff]
    %v419 = vld [vmem:[%s321 + $0x59] sm:$0x3f]
    %v420 = vld [vmem:[%s321 + $0x61] sm:$0xff]
    %v421 = vld [vmem:[%s321 + $0x69] sm:$0x3f]
    %v422 = vld [vmem:[%s321 + $0x71] sm:$0xff]
    %v423 = vld [vmem:[%s321 + $0x79] sm:$0x3f]
    %v424 = vld [vmem:[%s321 + $0x81] sm:$0xff]
    %v425 = vld [vmem:[%s321 + $0x89] sm:$0x3f]
    %v426 = vld [vmem:[%s321 + $0x91] sm:$0xff]
    %v427 = vld [vmem:[%s321 + $0x99] sm:$0x3f]
    %v428 = vld [vmem:[%s321 + $0xa1] sm:$0xff]
    %v429 = vld [vmem:[%s321 + $0xa9] sm:$0x3f]
    %v430 = vld [vmem:[%s321 + $0xb1] sm:$0xff]
    %v431 = vld [vmem:[%s321 + $0xb9] sm:$0x3f]
    %v432 = vld [vmem:[%s321 + $0xc1] sm:$0xff]
    %v433 = vld [vmem:[%s321 + $0xc9] sm:$0x3f]
    %v434 = vld [vmem:[%s321 + $0xd1] sm:$0xff]
    %v435 = vld [vmem:[%s321 + $0xd9] sm:$0x3f]
    %v436 = vstv %s407
    %v437 = vmul.f32 %v436, %v408
    %v438 = vmul.f32 %v436, %v409
    %v439 = vmul.f32 %v436, %v410
    %v440 = vmul.f32 %v436, %v411
    %v441 = vmul.f32 %v436, %v412
    %v442 = vmul.f32 %v436, %v413
    %v443 = vmul.f32 %v436, %v414
    %v444 = vmul.f32 %v436, %v415
    %v445 = vmul.f32 %v436, %v416
    %v446 = vmul.f32 %v436, %v417
    %v447 = vmul.f32 %v436, %v418
    %v448 = vmul.f32 %v436, %v419
    %v449 = vmul.f32 %v436, %v420
    %v450 = vmul.f32 %v436, %v421
    %v451 = vmul.f32 %v436, %v422
    %v452 = vmul.f32 %v436, %v423
    %v453 = vmul.f32 %v436, %v424
    %v454 = vmul.f32 %v436, %v425
    %v455 = vmul.f32 %v436, %v426
    %v456 = vmul.f32 %v436, %v427
    %v457 = vmul.f32 %v436, %v428
    %v458 = vmul.f32 %v436, %v429
    %v459 = vmul.f32 %v436, %v430
    %v460 = vmul.f32 %v436, %v431
    %v461 = vmul.f32 %v436, %v432
    %v462 = vmul.f32 %v436, %v433
    %v463 = vmul.f32 %v436, %v434
    %v464 = vmul.f32 %v436, %v435
    %v465 = vadd.f32 %v379, %v437
    %v466 = vadd.f32 %v380, %v438
    %v467 = vadd.f32 %v381, %v439
    %v468 = vadd.f32 %v382, %v440
    %v469 = vadd.f32 %v383, %v441
    %v470 = vadd.f32 %v384, %v442
    %v471 = vadd.f32 %v385, %v443
    %v472 = vadd.f32 %v386, %v444
    %v473 = vadd.f32 %v387, %v445
    %v474 = vadd.f32 %v388, %v446
    %v475 = vadd.f32 %v389, %v447
    %v476 = vadd.f32 %v390, %v448
    %v477 = vadd.f32 %v391, %v449
    %v478 = vadd.f32 %v392, %v450
    %v479 = vadd.f32 %v393, %v451
    %v480 = vadd.f32 %v394, %v452
    %v481 = vadd.f32 %v395, %v453
    %v482 = vadd.f32 %v396, %v454
    %v483 = vadd.f32 %v397, %v455
    %v484 = vadd.f32 %v398, %v456
    %v485 = vadd.f32 %v399, %v457
    %v486 = vadd.f32 %v400, %v458
    %v487 = vadd.f32 %v401, %v459
    %v488 = vadd.f32 %v402, %v460
    %v489 = vadd.f32 %v403, %v461
    %v490 = vadd.f32 %v404, %v462
    %v491 = vadd.f32 %v405, %v463
    %v492 = vadd.f32 %v406, %v464
    %s493 = sld [smem:[#allocation8 + $0x5]]
    %v494 = vld [vmem:[%s321 + $0x2] sm:$0xff]
    %v495 = vld [vmem:[%s321 + $0xa] sm:$0x3f]
    %v496 = vld [vmem:[%s321 + $0x12] sm:$0xff]
    %v497 = vld [vmem:[%s321 + $0x1a] sm:$0x3f]
    %v498 = vld [vmem:[%s321 + $0x22] sm:$0xff]
    %v499 = vld [vmem:[%s321 + $0x2a] sm:$0x3f]
    %v500 = vld [vmem:[%s321 + $0x32] sm:$0xff]
    %v501 = vld [vmem:[%s321 + $0x3a] sm:$0x3f]
    %v502 = vld [vmem:[%s321 + $0x42] sm:$0xff]
    %v503 = vld [vmem:[%s321 + $0x4a] sm:$0x3f]
    %v504 = vld [vmem:[%s321 + $0x52] sm:$0xff]
    %v505 = vld [vmem:[%s321 + $0x5a] sm:$0x3f]
    %v506 = vld [vmem:[%s321 + $0x62] sm:$0xff]
    %v507 = vld [vmem:[%s321 + $0x6a] sm:$0x3f]
    %v508 = vld [vmem:[%s321 + $0x72] sm:$0xff]
    %v509 = vld [vmem:[%s321 + $0x7a] sm:$0x3f]
    %v510 = vld [vmem:[%s321 + $0x82] sm:$0xff]
    %v511 = vld [vmem:[%s321 + $0x8a] sm:$0x3f]
    %v512 = vld [vmem:[%s321 + $0x92] sm:$0xff]
    %v513 = vld [vmem:[%s321 + $0x9a] sm:$0x3f]
    %v514 = vld [vmem:[%s321 + $0xa2] sm:$0xff]
    %v515 = vld [vmem:[%s321 + $0xaa] sm:$0x3f]
    %v516 = vld [vmem:[%s321 + $0xb2] sm:$0xff]
    %v517 = vld [vmem:[%s321 + $0xba] sm:$0x3f]
    %v518 = vld [vmem:[%s321 + $0xc2] sm:$0xff]
    %v519 = vld [vmem:[%s321 + $0xca] sm:$0x3f]
    %v520 = vld [vmem:[%s321 + $0xd2] sm:$0xff]
    %v521 = vld [vmem:[%s321 + $0xda] sm:$0x3f]
    %v522 = vstv %s493
    %v523 = vmul.f32 %v522, %v494
    %v524 = vmul.f32 %v522, %v495
    %v525 = vmul.f32 %v522, %v496
    %v526 = vmul.f32 %v522, %v497
    %v527 = vmul.f32 %v522, %v498
    %v528 = vmul.f32 %v522, %v499
    %v529 = vmul.f32 %v522, %v500
    %v530 = vmul.f32 %v522, %v501
    %v531 = vmul.f32 %v522, %v502
    %v532 = vmul.f32 %v522, %v503
    %v533 = vmul.f32 %v522, %v504
    %v534 = vmul.f32 %v522, %v505
    %v535 = vmul.f32 %v522, %v506
    %v536 = vmul.f32 %v522, %v507
    %v537 = vmul.f32 %v522, %v508
    %v538 = vmul.f32 %v522, %v509
    %v539 = vmul.f32 %v522, %v510
    %v540 = vmul.f32 %v522, %v511
    %v541 = vmul.f32 %v522, %v512
    %v542 = vmul.f32 %v522, %v513
    %v543 = vmul.f32 %v522, %v514
    %v544 = vmul.f32 %v522, %v515
    %v545 = vmul.f32 %v522, %v516
    %v546 = vmul.f32 %v522, %v517
    %v547 = vmul.f32 %v522, %v518
    %v548 = vmul.f32 %v522, %v519
    %v549 = vmul.f32 %v522, %v520
    %v550 = vmul.f32 %v522, %v521
    %v551 = vadd.f32 %v465, %v523
    %v552 = vadd.f32 %v466, %v524
    %v553 = vadd.f32 %v467, %v525
    %v554 = vadd.f32 %v468, %v526
    %v555 = vadd.f32 %v469, %v527
    %v556 = vadd.f32 %v470, %v528
    %v557 = vadd.f32 %v471, %v529
    %v558 = vadd.f32 %v472, %v530
    %v559 = vadd.f32 %v473, %v531
    %v560 = vadd.f32 %v474, %v532
    %v561 = vadd.f32 %v475, %v533
    %v562 = vadd.f32 %v476, %v534
    %v563 = vadd.f32 %v477, %v535
    %v564 = vadd.f32 %v478, %v536
    %v565 = vadd.f32 %v479, %v537
    %v566 = vadd.f32 %v480, %v538
    %v567 = vadd.f32 %v481, %v539
    %v568 = vadd.f32 %v482, %v540
    %v569 = vadd.f32 %v483, %v541
    %v570 = vadd.f32 %v484, %v542
    %v571 = vadd.f32 %v485, %v543
    %v572 = vadd.f32 %v486, %v544
    %v573 = vadd.f32 %v487, %v545
    %v574 = vadd.f32 %v488, %v546
    %v575 = vadd.f32 %v489, %v547
    %v576 = vadd.f32 %v490, %v548
    %v577 = vadd.f32 %v491, %v549
    %v578 = vadd.f32 %v492, %v550
    %s579 = sld [smem:[#allocation8 + $0x6]]
    %s580 = scalar_lea.vmem [#allocation3], 32
    %v581 = vld [vmem:[%s580] sm:$0xff]
    %v582 = vld [vmem:[%s580 + $0x8] sm:$0x3f]
    %v583 = vld [vmem:[%s580 + $0x10] sm:$0xff]
    %v584 = vld [vmem:[%s580 + $0x18] sm:$0x3f]
    %v585 = vld [vmem:[%s580 + $0x20] sm:$0xff]
    %v586 = vld [vmem:[%s580 + $0x28] sm:$0x3f]
    %v587 = vld [vmem:[%s580 + $0x30] sm:$0xff]
    %v588 = vld [vmem:[%s580 + $0x38] sm:$0x3f]
    %v589 = vld [vmem:[%s580 + $0x40] sm:$0xff]
    %v590 = vld [vmem:[%s580 + $0x48] sm:$0x3f]
    %v591 = vld [vmem:[%s580 + $0x50] sm:$0xff]
    %v592 = vld [vmem:[%s580 + $0x58] sm:$0x3f]
    %v593 = vld [vmem:[%s580 + $0x60] sm:$0xff]
    %v594 = vld [vmem:[%s580 + $0x68] sm:$0x3f]
    %v595 = vld [vmem:[%s580 + $0x70] sm:$0xff]
    %v596 = vld [vmem:[%s580 + $0x78] sm:$0x3f]
    %v597 = vld [vmem:[%s580 + $0x80] sm:$0xff]
    %v598 = vld [vmem:[%s580 + $0x88] sm:$0x3f]
    %v599 = vld [vmem:[%s580 + $0x90] sm:$0xff]
    %v600 = vld [vmem:[%s580 + $0x98] sm:$0x3f]
    %v601 = vld [vmem:[%s580 + $0xa0] sm:$0xff]
    %v602 = vld [vmem:[%s580 + $0xa8] sm:$0x3f]
    %v603 = vld [vmem:[%s580 + $0xb0] sm:$0xff]
    %v604 = vld [vmem:[%s580 + $0xb8] sm:$0x3f]
    %v605 = vld [vmem:[%s580 + $0xc0] sm:$0xff]
    %v606 = vld [vmem:[%s580 + $0xc8] sm:$0x3f]
    %v607 = vld [vmem:[%s580 + $0xd0] sm:$0xff]
    %v608 = vld [vmem:[%s580 + $0xd8] sm:$0x3f]
    %v609 = vstv %s579
    %v610 = vmul.f32 %v609, %v581
    %v611 = vmul.f32 %v609, %v582
    %v612 = vmul.f32 %v609, %v583
    %v613 = vmul.f32 %v609, %v584
    %v614 = vmul.f32 %v609, %v585
    %v615 = vmul.f32 %v609, %v586
    %v616 = vmul.f32 %v609, %v587
    %v617 = vmul.f32 %v609, %v588
    %v618 = vmul.f32 %v609, %v589
    %v619 = vmul.f32 %v609, %v590
    %v620 = vmul.f32 %v609, %v591
    %v621 = vmul.f32 %v609, %v592
    %v622 = vmul.f32 %v609, %v593
    %v623 = vmul.f32 %v609, %v594
    %v624 = vmul.f32 %v609, %v595
    %v625 = vmul.f32 %v609, %v596
    %v626 = vmul.f32 %v609, %v597
    %v627 = vmul.f32 %v609, %v598
    %v628 = vmul.f32 %v609, %v599
    %v629 = vmul.f32 %v609, %v600
    %v630 = vmul.f32 %v609, %v601
    %v631 = vmul.f32 %v609, %v602
    %v632 = vmul.f32 %v609, %v603
    %v633 = vmul.f32 %v609, %v604
    %v634 = vmul.f32 %v609, %v605
    %v635 = vmul.f32 %v609, %v606
    %v636 = vmul.f32 %v609, %v607
    %v637 = vmul.f32 %v609, %v608
    %v638 = vadd.f32 %v551, %v610
    %v639 = vadd.f32 %v552, %v611
    %v640 = vadd.f32 %v553, %v612
    %v641 = vadd.f32 %v554, %v613
    %v642 = vadd.f32 %v555, %v614
    %v643 = vadd.f32 %v556, %v615
    %v644 = vadd.f32 %v557, %v616
    %v645 = vadd.f32 %v558, %v617
    %v646 = vadd.f32 %v559, %v618
    %v647 = vadd.f32 %v560, %v619
    %v648 = vadd.f32 %v561, %v620
    %v649 = vadd.f32 %v562, %v621
    %v650 = vadd.f32 %v563, %v622
    %v651 = vadd.f32 %v564, %v623
    %v652 = vadd.f32 %v565, %v624
    %v653 = vadd.f32 %v566, %v625
    %v654 = vadd.f32 %v567, %v626
    %v655 = vadd.f32 %v568, %v627
    %v656 = vadd.f32 %v569, %v628
    %v657 = vadd.f32 %v570, %v629
    %v658 = vadd.f32 %v571, %v630
    %v659 = vadd.f32 %v572, %v631
    %v660 = vadd.f32 %v573, %v632
    %v661 = vadd.f32 %v574, %v633
    %v662 = vadd.f32 %v575, %v634
    %v663 = vadd.f32 %v576, %v635
    %v664 = vadd.f32 %v577, %v636
    %v665 = vadd.f32 %v578, %v637
    %s666 = sld [smem:[#allocation8 + $0x7]]
    %v667 = vld [vmem:[%s580 + $0x1] sm:$0xff]
    %v668 = vld [vmem:[%s580 + $0x9] sm:$0x3f]
    %v669 = vld [vmem:[%s580 + $0x11] sm:$0xff]
    %v670 = vld [vmem:[%s580 + $0x19] sm:$0x3f]
    %v671 = vld [vmem:[%s580 + $0x21] sm:$0xff]
    %v672 = vld [vmem:[%s580 + $0x29] sm:$0x3f]
    %v673 = vld [vmem:[%s580 + $0x31] sm:$0xff]
    %v674 = vld [vmem:[%s580 + $0x39] sm:$0x3f]
    %v675 = vld [vmem:[%s580 + $0x41] sm:$0xff]
    %v676 = vld [vmem:[%s580 + $0x49] sm:$0x3f]
    %v677 = vld [vmem:[%s580 + $0x51] sm:$0xff]
    %v678 = vld [vmem:[%s580 + $0x59] sm:$0x3f]
    %v679 = vld [vmem:[%s580 + $0x61] sm:$0xff]
    %v680 = vld [vmem:[%s580 + $0x69] sm:$0x3f]
    %v681 = vld [vmem:[%s580 + $0x71] sm:$0xff]
    %v682 = vld [vmem:[%s580 + $0x79] sm:$0x3f]
    %v683 = vld [vmem:[%s580 + $0x81] sm:$0xff]
    %v684 = vld [vmem:[%s580 + $0x89] sm:$0x3f]
    %v685 = vld [vmem:[%s580 + $0x91] sm:$0xff]
    %v686 = vld [vmem:[%s580 + $0x99] sm:$0x3f]
    %v687 = vld [vmem:[%s580 + $0xa1] sm:$0xff]
    %v688 = vld [vmem:[%s580 + $0xa9] sm:$0x3f]
    %v689 = vld [vmem:[%s580 + $0xb1] sm:$0xff]
    %v690 = vld [vmem:[%s580 + $0xb9] sm:$0x3f]
    %v691 = vld [vmem:[%s580 + $0xc1] sm:$0xff]
    %v692 = vld [vmem:[%s580 + $0xc9] sm:$0x3f]
    %v693 = vld [vmem:[%s580 + $0xd1] sm:$0xff]
    %v694 = vld [vmem:[%s580 + $0xd9] sm:$0x3f]
    %v695 = vstv %s666
    %v696 = vmul.f32 %v695, %v667
    %v697 = vmul.f32 %v695, %v668
    %v698 = vmul.f32 %v695, %v669
    %v699 = vmul.f32 %v695, %v670
    %v700 = vmul.f32 %v695, %v671
    %v701 = vmul.f32 %v695, %v672
    %v702 = vmul.f32 %v695, %v673
    %v703 = vmul.f32 %v695, %v674
    %v704 = vmul.f32 %v695, %v675
    %v705 = vmul.f32 %v695, %v676
    %v706 = vmul.f32 %v695, %v677
    %v707 = vmul.f32 %v695, %v678
    %v708 = vmul.f32 %v695, %v679
    %v709 = vmul.f32 %v695, %v680
    %v710 = vmul.f32 %v695, %v681
    %v711 = vmul.f32 %v695, %v682
    %v712 = vmul.f32 %v695, %v683
    %v713 = vmul.f32 %v695, %v684
    %v714 = vmul.f32 %v695, %v685
    %v715 = vmul.f32 %v695, %v686
    %v716 = vmul.f32 %v695, %v687
    %v717 = vmul.f32 %v695, %v688
    %v718 = vmul.f32 %v695, %v689
    %v719 = vmul.f32 %v695, %v690
    %v720 = vmul.f32 %v695, %v691
    %v721 = vmul.f32 %v695, %v692
    %v722 = vmul.f32 %v695, %v693
    %v723 = vmul.f32 %v695, %v694
    %v724 = vadd.f32 %v638, %v696
    %v725 = vadd.f32 %v639, %v697
    %v726 = vadd.f32 %v640, %v698
    %v727 = vadd.f32 %v641, %v699
    %v728 = vadd.f32 %v642, %v700
    %v729 = vadd.f32 %v643, %v701
    %v730 = vadd.f32 %v644, %v702
    %v731 = vadd.f32 %v645, %v703
    %v732 = vadd.f32 %v646, %v704
    %v733 = vadd.f32 %v647, %v705
    %v734 = vadd.f32 %v648, %v706
    %v735 = vadd.f32 %v649, %v707
    %v736 = vadd.f32 %v650, %v708
    %v737 = vadd.f32 %v651, %v709
    %v738 = vadd.f32 %v652, %v710
    %v739 = vadd.f32 %v653, %v711
    %v740 = vadd.f32 %v654, %v712
    %v741 = vadd.f32 %v655, %v713
    %v742 = vadd.f32 %v656, %v714
    %v743 = vadd.f32 %v657, %v715
    %v744 = vadd.f32 %v658, %v716
    %v745 = vadd.f32 %v659, %v717
    %v746 = vadd.f32 %v660, %v718
    %v747 = vadd.f32 %v661, %v719
    %v748 = vadd.f32 %v662, %v720
    %v749 = vadd.f32 %v663, %v721
    %v750 = vadd.f32 %v664, %v722
    %v751 = vadd.f32 %v665, %v723
    %s752 = sld [smem:[#allocation8 + $0x8]]
    %v753 = vld [vmem:[%s580 + $0x2] sm:$0xff]
    %v754 = vld [vmem:[%s580 + $0xa] sm:$0x3f]
    %v755 = vld [vmem:[%s580 + $0x12] sm:$0xff]
    %v756 = vld [vmem:[%s580 + $0x1a] sm:$0x3f]
    %v757 = vld [vmem:[%s580 + $0x22] sm:$0xff]
    %v758 = vld [vmem:[%s580 + $0x2a] sm:$0x3f]
    %v759 = vld [vmem:[%s580 + $0x32] sm:$0xff]
    %v760 = vld [vmem:[%s580 + $0x3a] sm:$0x3f]
    %v761 = vld [vmem:[%s580 + $0x42] sm:$0xff]
    %v762 = vld [vmem:[%s580 + $0x4a] sm:$0x3f]
    %v763 = vld [vmem:[%s580 + $0x52] sm:$0xff]
    %v764 = vld [vmem:[%s580 + $0x5a] sm:$0x3f]
    %v765 = vld [vmem:[%s580 + $0x62] sm:$0xff]
    %v766 = vld [vmem:[%s580 + $0x6a] sm:$0x3f]
    %v767 = vld [vmem:[%s580 + $0x72] sm:$0xff]
    %v768 = vld [vmem:[%s580 + $0x7a] sm:$0x3f]
    %v769 = vld [vmem:[%s580 + $0x82] sm:$0xff]
    %v770 = vld [vmem:[%s580 + $0x8a] sm:$0x3f]
    %v771 = vld [vmem:[%s580 + $0x92] sm:$0xff]
    %v772 = vld [vmem:[%s580 + $0x9a] sm:$0x3f]
    %v773 = vld [vmem:[%s580 + $0xa2] sm:$0xff]
    %v774 = vld [vmem:[%s580 + $0xaa] sm:$0x3f]
    %v775 = vld [vmem:[%s580 + $0xb2] sm:$0xff]
    %v776 = vld [vmem:[%s580 + $0xba] sm:$0x3f]
    %v777 = vld [vmem:[%s580 + $0xc2] sm:$0xff]
    %v778 = vld [vmem:[%s580 + $0xca] sm:$0x3f]
    %v779 = vld [vmem:[%s580 + $0xd2] sm:$0xff]
    %v780 = vld [vmem:[%s580 + $0xda] sm:$0x3f]
    %v781 = vstv %s752
    %v782 = vmul.f32 %v781, %v753
    %v783 = vmul.f32 %v781, %v754
    %v784 = vmul.f32 %v781, %v755
    %v785 = vmul.f32 %v781, %v756
    %v786 = vmul.f32 %v781, %v757
    %v787 = vmul.f32 %v781, %v758
    %v788 = vmul.f32 %v781, %v759
    %v789 = vmul.f32 %v781, %v760
    %v790 = vmul.f32 %v781, %v761
    %v791 = vmul.f32 %v781, %v762
    %v792 = vmul.f32 %v781, %v763
    %v793 = vmul.f32 %v781, %v764
    %v794 = vmul.f32 %v781, %v765
    %v795 = vmul.f32 %v781, %v766
    %v796 = vmul.f32 %v781, %v767
    %v797 = vmul.f32 %v781, %v768
    %v798 = vmul.f32 %v781, %v769
    %v799 = vmul.f32 %v781, %v770
    %v800 = vmul.f32 %v781, %v771
    %v801 = vmul.f32 %v781, %v772
    %v802 = vmul.f32 %v781, %v773
    %v803 = vmul.f32 %v781, %v774
    %v804 = vmul.f32 %v781, %v775
    %v805 = vmul.f32 %v781, %v776
    %v806 = vmul.f32 %v781, %v777
    %v807 = vmul.f32 %v781, %v778
    %v808 = vmul.f32 %v781, %v779
    %v809 = vmul.f32 %v781, %v780
    %v810 = vadd.f32 %v724, %v782
    %v811 = vadd.f32 %v725, %v783
    %v812 = vadd.f32 %v726, %v784
    %v813 = vadd.f32 %v727, %v785
    %v814 = vadd.f32 %v728, %v786
    %v815 = vadd.f32 %v729, %v787
    %v816 = vadd.f32 %v730, %v788
    %v817 = vadd.f32 %v731, %v789
    %v818 = vadd.f32 %v732, %v790
    %v819 = vadd.f32 %v733, %v791
    %v820 = vadd.f32 %v734, %v792
    %v821 = vadd.f32 %v735, %v793
    %v822 = vadd.f32 %v736, %v794
    %v823 = vadd.f32 %v737, %v795
    %v824 = vadd.f32 %v738, %v796
    %v825 = vadd.f32 %v739, %v797
    %v826 = vadd.f32 %v740, %v798
    %v827 = vadd.f32 %v741, %v799
    %v828 = vadd.f32 %v742, %v800
    %v829 = vadd.f32 %v743, %v801
    %v830 = vadd.f32 %v744, %v802
    %v831 = vadd.f32 %v745, %v803
    %v832 = vadd.f32 %v746, %v804
    %v833 = vadd.f32 %v747, %v805
    %v834 = vadd.f32 %v748, %v806
    %v835 = vadd.f32 %v749, %v807
    %v836 = vadd.f32 %v750, %v808
    %v837 = vadd.f32 %v751, %v809
    %v838 = vmax.f32 %v810, %v814
    %v839 = vmax.f32 %v812, %v816
    %v840 = vmax.f32 %v838, %v818
    %v841 = vmax.f32 %v839, %v820
    %v842 = vmax.f32 %v840, %v822
    %v843 = vmax.f32 %v841, %v824
    %v844 = vmax.f32 %v842, %v826
    %v845 = vmax.f32 %v843, %v828
    %v846 = vmax.f32 %v844, %v830
    %v847 = vmax.f32 %v845, %v832
    %v848 = vmax.f32 %v846, %v834
    %v849 = vmax.f32 %v847, %v836
    %v850 = vmax.f32 %v848, %v849
    %vm851 = vcmask 1045504
    %v852 = vsel %vm851, %v811, -inf
    %v853 = vsel %vm851, %v813, -inf
    %v854 = vsel %vm851, %v815, -inf
    %v855 = vmax.f32 %v852, %v854
    %v856 = vsel %vm851, %v817, -inf
    %v857 = vmax.f32 %v853, %v856
    %v858 = vsel %vm851, %v819, -inf
    %v859 = vmax.f32 %v855, %v858
    %v860 = vsel %vm851, %v821, -inf
    %v861 = vmax.f32 %v857, %v860
    %v862 = vsel %vm851, %v823, -inf
    %v863 = vmax.f32 %v859, %v862
    %v864 = vsel %vm851, %v825, -inf
    %v865 = vmax.f32 %v861, %v864
    %v866 = vsel %vm851, %v827, -inf
    %v867 = vmax.f32 %v863, %v866
    %v868 = vsel %vm851, %v829, -inf
    %v869 = vmax.f32 %v865, %v868
    %v870 = vsel %vm851, %v831, -inf
    %v871 = vmax.f32 %v867, %v870
    %v872 = vsel %vm851, %v833, -inf
    %v873 = vmax.f32 %v869, %v872
    %v874 = vsel %vm851, %v835, -inf
    %v875 = vmax.f32 %v871, %v874
    %v876 = vsel %vm851, %v837, -inf
    %v877 = vmax.f32 %v873, %v876
    %v878 = vmax.f32 %v875, %v877
    %v879 = vsel %vm851, %v878, -inf
    %v880 = vmax.f32 %v850, %v879
    %v881 = vrot.slane %v880, 4
    %v882 = vmax.f32 %v880, %v881
    %v883 = vrot.slane %v882, 2
    %v884 = vmax.f32 %v882, %v883
    %v885 = vrot.slane %v884, 1
    %v886 = vmax.f32 %v884, %v885
    %s887 = sld [smem:[#allocation9]]
    %v888 = vstv %s887
    %v889 = vmul.f32 %v886, %v888
    %v890 = vadd.f32 %v61, %v889
    %s891 = sld [smem:[#allocation8 + $0x80]]
    %v892 = vstv %s891
    %v893 = vmul.f32 %v892, %v63
    %v894 = vmul.f32 %v892, %v64
    %v895 = vmul.f32 %v892, %v65
    %v896 = vmul.f32 %v892, %v66
    %v897 = vmul.f32 %v892, %v67
    %v898 = vmul.f32 %v892, %v68
    %v899 = vmul.f32 %v892, %v69
    %v900 = vmul.f32 %v892, %v70
    %v901 = vmul.f32 %v892, %v71
    %v902 = vmul.f32 %v892, %v72
    %v903 = vmul.f32 %v892, %v73
    %v904 = vmul.f32 %v892, %v74
    %v905 = vmul.f32 %v892, %v75
    %v906 = vmul.f32 %v892, %v76
    %v907 = vmul.f32 %v892, %v77
    %v908 = vmul.f32 %v892, %v78
    %v909 = vmul.f32 %v892, %v79
    %v910 = vmul.f32 %v892, %v80
    %v911 = vmul.f32 %v892, %v81
    %v912 = vmul.f32 %v892, %v82
    %v913 = vmul.f32 %v892, %v83
    %v914 = vmul.f32 %v892, %v84
    %v915 = vmul.f32 %v892, %v85
    %v916 = vmul.f32 %v892, %v86
    %v917 = vmul.f32 %v892, %v87
    %v918 = vmul.f32 %v892, %v88
    %v919 = vmul.f32 %v892, %v89
    %v920 = vmul.f32 %v892, %v90
    %v921 = vadd.f32 %v893, 0.0
    %v922 = vadd.f32 %v894, 0.0
    %v923 = vadd.f32 %v895, 0.0
    %v924 = vadd.f32 %v896, 0.0
    %v925 = vadd.f32 %v897, 0.0
    %v926 = vadd.f32 %v898, 0.0
    %v927 = vadd.f32 %v899, 0.0
    %v928 = vadd.f32 %v900, 0.0
    %v929 = vadd.f32 %v901, 0.0
    %v930 = vadd.f32 %v902, 0.0
    %v931 = vadd.f32 %v903, 0.0
    %v932 = vadd.f32 %v904, 0.0
    %v933 = vadd.f32 %v905, 0.0
    %v934 = vadd.f32 %v906, 0.0
    %v935 = vadd.f32 %v907, 0.0
    %v936 = vadd.f32 %v908, 0.0
    %v937 = vadd.f32 %v909, 0.0
    %v938 = vadd.f32 %v910, 0.0
    %v939 = vadd.f32 %v911, 0.0
    %v940 = vadd.f32 %v912, 0.0
    %v941 = vadd.f32 %v913, 0.0
    %v942 = vadd.f32 %v914, 0.0
    %v943 = vadd.f32 %v915, 0.0
    %v944 = vadd.f32 %v916, 0.0
    %v945 = vadd.f32 %v917, 0.0
    %v946 = vadd.f32 %v918, 0.0
    %v947 = vadd.f32 %v919, 0.0
    %v948 = vadd.f32 %v920, 0.0
    %s949 = sld [smem:[#allocation8 + $0x81]]
    %v950 = vstv %s949
    %v951 = vmul.f32 %v950, %v149
    %v952 = vmul.f32 %v950, %v150
    %v953 = vmul.f32 %v950, %v151
    %v954 = vmul.f32 %v950, %v152
    %v955 = vmul.f32 %v950, %v153
    %v956 = vmul.f32 %v950, %v154
    %v957 = vmul.f32 %v950, %v155
    %v958 = vmul.f32 %v950, %v156
    %v959 = vmul.f32 %v950, %v157
    %v960 = vmul.f32 %v950, %v158
    %v961 = vmul.f32 %v950, %v159
    %v962 = vmul.f32 %v950, %v160
    %v963 = vmul.f32 %v950, %v161
    %v964 = vmul.f32 %v950, %v162
    %v965 = vmul.f32 %v950, %v163
    %v966 = vmul.f32 %v950, %v164
    %v967 = vmul.f32 %v950, %v165
    %v968 = vmul.f32 %v950, %v166
    %v969 = vmul.f32 %v950, %v167
    %v970 = vmul.f32 %v950, %v168
    %v971 = vmul.f32 %v950, %v169
    %v972 = vmul.f32 %v950, %v170
    %v973 = vmul.f32 %v950, %v171
    %v974 = vmul.f32 %v950, %v172
    %v975 = vmul.f32 %v950, %v173
    %v976 = vmul.f32 %v950, %v174
    %v977 = vmul.f32 %v950, %v175
    %v978 = vmul.f32 %v950, %v176
    %v979 = vadd.f32 %v921, %v951
    %v980 = vadd.f32 %v922, %v952
    %v981 = vadd.f32 %v923, %v953
    %v982 = vadd.f32 %v924, %v954
    %v983 = vadd.f32 %v925, %v955
    %v984 = vadd.f32 %v926, %v956
    %v985 = vadd.f32 %v927, %v957
    %v986 = vadd.f32 %v928, %v958
    %v987 = vadd.f32 %v929, %v959
    %v988 = vadd.f32 %v930, %v960
    %v989 = vadd.f32 %v931, %v961
    %v990 = vadd.f32 %v932, %v962
    %v991 = vadd.f32 %v933, %v963
    %v992 = vadd.f32 %v934, %v964
    %v993 = vadd.f32 %v935, %v965
    %v994 = vadd.f32 %v936, %v966
    %v995 = vadd.f32 %v937, %v967
    %v996 = vadd.f32 %v938, %v968
    %v997 = vadd.f32 %v939, %v969
    %v998 = vadd.f32 %v940, %v970
    %v999 = vadd.f32 %v941, %v971
    %v1000 = vadd.f32 %v942, %v972
    %v1001 = vadd.f32 %v943, %v973
    %v1002 = vadd.f32 %v944, %v974
    %v1003 = vadd.f32 %v945, %v975
    %v1004 = vadd.f32 %v946, %v976
    %v1005 = vadd.f32 %v947, %v977
    %v1006 = vadd.f32 %v948, %v978
    %s1007 = sld [smem:[#allocation8 + $0x82]]
    %v1008 = vstv %s1007
    %v1009 = vmul.f32 %v1008, %v235
    %v1010 = vmul.f32 %v1008, %v236
    %v1011 = vmul.f32 %v1008, %v237
    %v1012 = vmul.f32 %v1008, %v238
    %v1013 = vmul.f32 %v1008, %v239
    %v1014 = vmul.f32 %v1008, %v240
    %v1015 = vmul.f32 %v1008, %v241
    %v1016 = vmul.f32 %v1008, %v242
    %v1017 = vmul.f32 %v1008, %v243
    %v1018 = vmul.f32 %v1008, %v244
    %v1019 = vmul.f32 %v1008, %v245
    %v1020 = vmul.f32 %v1008, %v246
    %v1021 = vmul.f32 %v1008, %v247
    %v1022 = vmul.f32 %v1008, %v248
    %v1023 = vmul.f32 %v1008, %v249
    %v1024 = vmul.f32 %v1008, %v250
    %v1025 = vmul.f32 %v1008, %v251
    %v1026 = vmul.f32 %v1008, %v252
    %v1027 = vmul.f32 %v1008, %v253
    %v1028 = vmul.f32 %v1008, %v254
    %v1029 = vmul.f32 %v1008, %v255
    %v1030 = vmul.f32 %v1008, %v256
    %v1031 = vmul.f32 %v1008, %v257
    %v1032 = vmul.f32 %v1008, %v258
    %v1033 = vmul.f32 %v1008, %v259
    %v1034 = vmul.f32 %v1008, %v260
    %v1035 = vmul.f32 %v1008, %v261
    %v1036 = vmul.f32 %v1008, %v262
    %v1037 = vadd.f32 %v979, %v1009
    %v1038 = vadd.f32 %v980, %v1010
    %v1039 = vadd.f32 %v981, %v1011
    %v1040 = vadd.f32 %v982, %v1012
    %v1041 = vadd.f32 %v983, %v1013
    %v1042 = vadd.f32 %v984, %v1014
    %v1043 = vadd.f32 %v985, %v1015
    %v1044 = vadd.f32 %v986, %v1016
    %v1045 = vadd.f32 %v987, %v1017
    %v1046 = vadd.f32 %v988, %v1018
    %v1047 = vadd.f32 %v989, %v1019
    %v1048 = vadd.f32 %v990, %v1020
    %v1049 = vadd.f32 %v991, %v1021
    %v1050 = vadd.f32 %v992, %v1022
    %v1051 = vadd.f32 %v993, %v1023
    %v1052 = vadd.f32 %v994, %v1024
    %v1053 = vadd.f32 %v995, %v1025
    %v1054 = vadd.f32 %v996, %v1026
    %v1055 = vadd.f32 %v997, %v1027
    %v1056 = vadd.f32 %v998, %v1028
    %v1057 = vadd.f32 %v999, %v1029
    %v1058 = vadd.f32 %v1000, %v1030
    %v1059 = vadd.f32 %v1001, %v1031
    %v1060 = vadd.f32 %v1002, %v1032
    %v1061 = vadd.f32 %v1003, %v1033
    %v1062 = vadd.f32 %v1004, %v1034
    %v1063 = vadd.f32 %v1005, %v1035
    %v1064 = vadd.f32 %v1006, %v1036
    %s1065 = sld [smem:[#allocation8 + $0x83]]
    %v1066 = vstv %s1065
    %v1067 = vmul.f32 %v1066, %v322
    %v1068 = vmul.f32 %v1066, %v323
    %v1069 = vmul.f32 %v1066, %v324
    %v1070 = vmul.f32 %v1066, %v325
    %v1071 = vmul.f32 %v1066, %v326
    %v1072 = vmul.f32 %v1066, %v327
    %v1073 = vmul.f32 %v1066, %v328
    %v1074 = vmul.f32 %v1066, %v329
    %v1075 = vmul.f32 %v1066, %v330
    %v1076 = vmul.f32 %v1066, %v331
    %v1077 = vmul.f32 %v1066, %v332
    %v1078 = vmul.f32 %v1066, %v333
    %v1079 = vmul.f32 %v1066, %v334
    %v1080 = vmul.f32 %v1066, %v335
    %v1081 = vmul.f32 %v1066, %v336
    %v1082 = vmul.f32 %v1066, %v337
    %v1083 = vmul.f32 %v1066, %v338
    %v1084 = vmul.f32 %v1066, %v339
    %v1085 = vmul.f32 %v1066, %v340
    %v1086 = vmul.f32 %v1066, %v341
    %v1087 = vmul.f32 %v1066, %v342
    %v1088 = vmul.f32 %v1066, %v343
    %v1089 = vmul.f32 %v1066, %v344
    %v1090 = vmul.f32 %v1066, %v345
    %v1091 = vmul.f32 %v1066, %v346
    %v1092 = vmul.f32 %v1066, %v347
    %v1093 = vmul.f32 %v1066, %v348
    %v1094 = vmul.f32 %v1066, %v349
    %v1095 = vadd.f32 %v1037, %v1067
    %v1096 = vadd.f32 %v1038, %v1068
    %v1097 = vadd.f32 %v1039, %v1069
    %v1098 = vadd.f32 %v1040, %v1070
    %v1099 = vadd.f32 %v1041, %v1071
    %v1100 = vadd.f32 %v1042, %v1072
    %v1101 = vadd.f32 %v1043, %v1073
    %v1102 = vadd.f32 %v1044, %v1074
    %v1103 = vadd.f32 %v1045, %v1075
    %v1104 = vadd.f32 %v1046, %v1076
    %v1105 = vadd.f32 %v1047, %v1077
    %v1106 = vadd.f32 %v1048, %v1078
    %v1107 = vadd.f32 %v1049, %v1079
    %v1108 = vadd.f32 %v1050, %v1080
    %v1109 = vadd.f32 %v1051, %v1081
    %v1110 = vadd.f32 %v1052, %v1082
    %v1111 = vadd.f32 %v1053, %v1083
    %v1112 = vadd.f32 %v1054, %v1084
    %v1113 = vadd.f32 %v1055, %v1085
    %v1114 = vadd.f32 %v1056, %v1086
    %v1115 = vadd.f32 %v1057, %v1087
    %v1116 = vadd.f32 %v1058, %v1088
    %v1117 = vadd.f32 %v1059, %v1089
    %v1118 = vadd.f32 %v1060, %v1090
    %v1119 = vadd.f32 %v1061, %v1091
    %v1120 = vadd.f32 %v1062, %v1092
    %v1121 = vadd.f32 %v1063, %v1093
    %v1122 = vadd.f32 %v1064, %v1094
    %s1123 = sld [smem:[#allocation8 + $0x84]]
    %v1124 = vstv %s1123
    %v1125 = vmul.f32 %v1124, %v408
    %v1126 = vmul.f32 %v1124, %v409
    %v1127 = vmul.f32 %v1124, %v410
    %v1128 = vmul.f32 %v1124, %v411
    %v1129 = vmul.f32 %v1124, %v412
    %v1130 = vmul.f32 %v1124, %v413
    %v1131 = vmul.f32 %v1124, %v414
    %v1132 = vmul.f32 %v1124, %v415
    %v1133 = vmul.f32 %v1124, %v416
    %v1134 = vmul.f32 %v1124, %v417
    %v1135 = vmul.f32 %v1124, %v418
    %v1136 = vmul.f32 %v1124, %v419
    %v1137 = vmul.f32 %v1124, %v420
    %v1138 = vmul.f32 %v1124, %v421
    %v1139 = vmul.f32 %v1124, %v422
    %v1140 = vmul.f32 %v1124, %v423
    %v1141 = vmul.f32 %v1124, %v424
    %v1142 = vmul.f32 %v1124, %v425
    %v1143 = vmul.f32 %v1124, %v426
    %v1144 = vmul.f32 %v1124, %v427
    %v1145 = vmul.f32 %v1124, %v428
    %v1146 = vmul.f32 %v1124, %v429
    %v1147 = vmul.f32 %v1124, %v430
    %v1148 = vmul.f32 %v1124, %v431
    %v1149 = vmul.f32 %v1124, %v432
    %v1150 = vmul.f32 %v1124, %v433
    %v1151 = vmul.f32 %v1124, %v434
    %v1152 = vmul.f32 %v1124, %v435
    %v1153 = vadd.f32 %v1095, %v1125
    %v1154 = vadd.f32 %v1096, %v1126
    %v1155 = vadd.f32 %v1097, %v1127
    %v1156 = vadd.f32 %v1098, %v1128
    %v1157 = vadd.f32 %v1099, %v1129
    %v1158 = vadd.f32 %v1100, %v1130
    %v1159 = vadd.f32 %v1101, %v1131
    %v1160 = vadd.f32 %v1102, %v1132
    %v1161 = vadd.f32 %v1103, %v1133
    %v1162 = vadd.f32 %v1104, %v1134
    %v1163 = vadd.f32 %v1105, %v1135
    %v1164 = vadd.f32 %v1106, %v1136
    %v1165 = vadd.f32 %v1107, %v1137
    %v1166 = vadd.f32 %v1108, %v1138
    %v1167 = vadd.f32 %v1109, %v1139
    %v1168 = vadd.f32 %v1110, %v1140
    %v1169 = vadd.f32 %v1111, %v1141
    %v1170 = vadd.f32 %v1112, %v1142
    %v1171 = vadd.f32 %v1113, %v1143
    %v1172 = vadd.f32 %v1114, %v1144
    %v1173 = vadd.f32 %v1115, %v1145
    %v1174 = vadd.f32 %v1116, %v1146
    %v1175 = vadd.f32 %v1117, %v1147
    %v1176 = vadd.f32 %v1118, %v1148
    %v1177 = vadd.f32 %v1119, %v1149
    %v1178 = vadd.f32 %v1120, %v1150
    %v1179 = vadd.f32 %v1121, %v1151
    %v1180 = vadd.f32 %v1122, %v1152
    %s1181 = sld [smem:[#allocation8 + $0x85]]
    %v1182 = vstv %s1181
    %v1183 = vmul.f32 %v1182, %v494
    %v1184 = vmul.f32 %v1182, %v495
    %v1185 = vmul.f32 %v1182, %v496
    %v1186 = vmul.f32 %v1182, %v497
    %v1187 = vmul.f32 %v1182, %v498
    %v1188 = vmul.f32 %v1182, %v499
    %v1189 = vmul.f32 %v1182, %v500
    %v1190 = vmul.f32 %v1182, %v501
    %v1191 = vmul.f32 %v1182, %v502
    %v1192 = vmul.f32 %v1182, %v503
    %v1193 = vmul.f32 %v1182, %v504
    %v1194 = vmul.f32 %v1182, %v505
    %v1195 = vmul.f32 %v1182, %v506
    %v1196 = vmul.f32 %v1182, %v507
    %v1197 = vmul.f32 %v1182, %v508
    %v1198 = vmul.f32 %v1182, %v509
    %v1199 = vmul.f32 %v1182, %v510
    %v1200 = vmul.f32 %v1182, %v511
    %v1201 = vmul.f32 %v1182, %v512
    %v1202 = vmul.f32 %v1182, %v513
    %v1203 = vmul.f32 %v1182, %v514
    %v1204 = vmul.f32 %v1182, %v515
    %v1205 = vmul.f32 %v1182, %v516
    %v1206 = vmul.f32 %v1182, %v517
    %v1207 = vmul.f32 %v1182, %v518
    %v1208 = vmul.f32 %v1182, %v519
    %v1209 = vmul.f32 %v1182, %v520
    %v1210 = vmul.f32 %v1182, %v521
    %v1211 = vadd.f32 %v1153, %v1183
    %v1212 = vadd.f32 %v1154, %v1184
    %v1213 = vadd.f32 %v1155, %v1185
    %v1214 = vadd.f32 %v1156, %v1186
    %v1215 = vadd.f32 %v1157, %v1187
    %v1216 = vadd.f32 %v1158, %v1188
    %v1217 = vadd.f32 %v1159, %v1189
    %v1218 = vadd.f32 %v1160, %v1190
    %v1219 = vadd.f32 %v1161, %v1191
    %v1220 = vadd.f32 %v1162, %v1192
    %v1221 = vadd.f32 %v1163, %v1193
    %v1222 = vadd.f32 %v1164, %v1194
    %v1223 = vadd.f32 %v1165, %v1195
    %v1224 = vadd.f32 %v1166, %v1196
    %v1225 = vadd.f32 %v1167, %v1197
    %v1226 = vadd.f32 %v1168, %v1198
    %v1227 = vadd.f32 %v1169, %v1199
    %v1228 = vadd.f32 %v1170, %v1200
    %v1229 = vadd.f32 %v1171, %v1201
    %v1230 = vadd.f32 %v1172, %v1202
    %v1231 = vadd.f32 %v1173, %v1203
    %v1232 = vadd.f32 %v1174, %v1204
    %v1233 = vadd.f32 %v1175, %v1205
    %v1234 = vadd.f32 %v1176, %v1206
    %v1235 = vadd.f32 %v1177, %v1207
    %v1236 = vadd.f32 %v1178, %v1208
    %v1237 = vadd.f32 %v1179, %v1209
    %v1238 = vadd.f32 %v1180, %v1210
    %s1239 = sld [smem:[#allocation8 + $0x86]]
    %v1240 = vstv %s1239
    %v1241 = vmul.f32 %v1240, %v581
    %v1242 = vmul.f32 %v1240, %v582
    %v1243 = vmul.f32 %v1240, %v583
    %v1244 = vmul.f32 %v1240, %v584
    %v1245 = vmul.f32 %v1240, %v585
    %v1246 = vmul.f32 %v1240, %v586
    %v1247 = vmul.f32 %v1240, %v587
    %v1248 = vmul.f32 %v1240, %v588
    %v1249 = vmul.f32 %v1240, %v589
    %v1250 = vmul.f32 %v1240, %v590
    %v1251 = vmul.f32 %v1240, %v591
    %v1252 = vmul.f32 %v1240, %v592
    %v1253 = vmul.f32 %v1240, %v593
    %v1254 = vmul.f32 %v1240, %v594
    %v1255 = vmul.f32 %v1240, %v595
    %v1256 = vmul.f32 %v1240, %v596
    %v1257 = vmul.f32 %v1240, %v597
    %v1258 = vmul.f32 %v1240, %v598
    %v1259 = vmul.f32 %v1240, %v599
    %v1260 = vmul.f32 %v1240, %v600
    %v1261 = vmul.f32 %v1240, %v601
    %v1262 = vmul.f32 %v1240, %v602
    %v1263 = vmul.f32 %v1240, %v603
    %v1264 = vmul.f32 %v1240, %v604
    %v1265 = vmul.f32 %v1240, %v605
    %v1266 = vmul.f32 %v1240, %v606
    %v1267 = vmul.f32 %v1240, %v607
    %v1268 = vmul.f32 %v1240, %v608
    %v1269 = vadd.f32 %v1211, %v1241
    %v1270 = vadd.f32 %v1212, %v1242
    %v1271 = vadd.f32 %v1213, %v1243
    %v1272 = vadd.f32 %v1214, %v1244
    %v1273 = vadd.f32 %v1215, %v1245
    %v1274 = vadd.f32 %v1216, %v1246
    %v1275 = vadd.f32 %v1217, %v1247
    %v1276 = vadd.f32 %v1218, %v1248
    %v1277 = vadd.f32 %v1219, %v1249
    %v1278 = vadd.f32 %v1220, %v1250
    %v1279 = vadd.f32 %v1221, %v1251
    %v1280 = vadd.f32 %v1222, %v1252
    %v1281 = vadd.f32 %v1223, %v1253
    %v1282 = vadd.f32 %v1224, %v1254
    %v1283 = vadd.f32 %v1225, %v1255
    %v1284 = vadd.f32 %v1226, %v1256
    %v1285 = vadd.f32 %v1227, %v1257
    %v1286 = vadd.f32 %v1228, %v1258
    %v1287 = vadd.f32 %v1229, %v1259
    %v1288 = vadd.f32 %v1230, %v1260
    %v1289 = vadd.f32 %v1231, %v1261
    %v1290 = vadd.f32 %v1232, %v1262
    %v1291 = vadd.f32 %v1233, %v1263
    %v1292 = vadd.f32 %v1234, %v1264
    %v1293 = vadd.f32 %v1235, %v1265
    %v1294 = vadd.f32 %v1236, %v1266
    %v1295 = vadd.f32 %v1237, %v1267
    %v1296 = vadd.f32 %v1238, %v1268
    %s1297 = sld [smem:[#allocation8 + $0x87]]
    %v1298 = vstv %s1297
    %v1299 = vmul.f32 %v1298, %v667
    %v1300 = vmul.f32 %v1298, %v668
    %v1301 = vmul.f32 %v1298, %v669
    %v1302 = vmul.f32 %v1298, %v670
    %v1303 = vmul.f32 %v1298, %v671
    %v1304 = vmul.f32 %v1298, %v672
    %v1305 = vmul.f32 %v1298, %v673
    %v1306 = vmul.f32 %v1298, %v674
    %v1307 = vmul.f32 %v1298, %v675
    %v1308 = vmul.f32 %v1298, %v676
    %v1309 = vmul.f32 %v1298, %v677
    %v1310 = vmul.f32 %v1298, %v678
    %v1311 = vmul.f32 %v1298, %v679
    %v1312 = vmul.f32 %v1298, %v680
    %v1313 = vmul.f32 %v1298, %v681
    %v1314 = vmul.f32 %v1298, %v682
    %v1315 = vmul.f32 %v1298, %v683
    %v1316 = vmul.f32 %v1298, %v684
    %v1317 = vmul.f32 %v1298, %v685
    %v1318 = vmul.f32 %v1298, %v686
    %v1319 = vmul.f32 %v1298, %v687
    %v1320 = vmul.f32 %v1298, %v688
    %v1321 = vmul.f32 %v1298, %v689
    %v1322 = vmul.f32 %v1298, %v690
    %v1323 = vmul.f32 %v1298, %v691
    %v1324 = vmul.f32 %v1298, %v692
    %v1325 = vmul.f32 %v1298, %v693
    %v1326 = vmul.f32 %v1298, %v694
    %v1327 = vadd.f32 %v1269, %v1299
    %v1328 = vadd.f32 %v1270, %v1300
    %v1329 = vadd.f32 %v1271, %v1301
    %v1330 = vadd.f32 %v1272, %v1302
    %v1331 = vadd.f32 %v1273, %v1303
    %v1332 = vadd.f32 %v1274, %v1304
    %v1333 = vadd.f32 %v1275, %v1305
    %v1334 = vadd.f32 %v1276, %v1306
    %v1335 = vadd.f32 %v1277, %v1307
    %v1336 = vadd.f32 %v1278, %v1308
    %v1337 = vadd.f32 %v1279, %v1309
    %v1338 = vadd.f32 %v1280, %v1310
    %v1339 = vadd.f32 %v1281, %v1311
    %v1340 = vadd.f32 %v1282, %v1312
    %v1341 = vadd.f32 %v1283, %v1313
    %v1342 = vadd.f32 %v1284, %v1314
    %v1343 = vadd.f32 %v1285, %v1315
    %v1344 = vadd.f32 %v1286, %v1316
    %v1345 = vadd.f32 %v1287, %v1317
    %v1346 = vadd.f32 %v1288, %v1318
    %v1347 = vadd.f32 %v1289, %v1319
    %v1348 = vadd.f32 %v1290, %v1320
    %v1349 = vadd.f32 %v1291, %v1321
    %v1350 = vadd.f32 %v1292, %v1322
    %v1351 = vadd.f32 %v1293, %v1323
    %v1352 = vadd.f32 %v1294, %v1324
    %v1353 = vadd.f32 %v1295, %v1325
    %v1354 = vadd.f32 %v1296, %v1326
    %s1355 = sld [smem:[#allocation8 + $0x88]]
    %v1356 = vstv %s1355
    %v1357 = vmul.f32 %v1356, %v753
    %v1358 = vmul.f32 %v1356, %v754
    %v1359 = vmul.f32 %v1356, %v755
    %v1360 = vmul.f32 %v1356, %v756
    %v1361 = vmul.f32 %v1356, %v757
    %v1362 = vmul.f32 %v1356, %v758
    %v1363 = vmul.f32 %v1356, %v759
    %v1364 = vmul.f32 %v1356, %v760
    %v1365 = vmul.f32 %v1356, %v761
    %v1366 = vmul.f32 %v1356, %v762
    %v1367 = vmul.f32 %v1356, %v763
    %v1368 = vmul.f32 %v1356, %v764
    %v1369 = vmul.f32 %v1356, %v765
    %v1370 = vmul.f32 %v1356, %v766
    %v1371 = vmul.f32 %v1356, %v767
    %v1372 = vmul.f32 %v1356, %v768
    %v1373 = vmul.f32 %v1356, %v769
    %v1374 = vmul.f32 %v1356, %v770
    %v1375 = vmul.f32 %v1356, %v771
    %v1376 = vmul.f32 %v1356, %v772
    %v1377 = vmul.f32 %v1356, %v773
    %v1378 = vmul.f32 %v1356, %v774
    %v1379 = vmul.f32 %v1356, %v775
    %v1380 = vmul.f32 %v1356, %v776
    %v1381 = vmul.f32 %v1356, %v777
    %v1382 = vmul.f32 %v1356, %v778
    %v1383 = vmul.f32 %v1356, %v779
    %v1384 = vmul.f32 %v1356, %v780
    %v1385 = vadd.f32 %v1327, %v1357
    %v1386 = vadd.f32 %v1328, %v1358
    %v1387 = vadd.f32 %v1329, %v1359
    %v1388 = vadd.f32 %v1330, %v1360
    %v1389 = vadd.f32 %v1331, %v1361
    %v1390 = vadd.f32 %v1332, %v1362
    %v1391 = vadd.f32 %v1333, %v1363
    %v1392 = vadd.f32 %v1334, %v1364
    %v1393 = vadd.f32 %v1335, %v1365
    %v1394 = vadd.f32 %v1336, %v1366
    %v1395 = vadd.f32 %v1337, %v1367
    %v1396 = vadd.f32 %v1338, %v1368
    %v1397 = vadd.f32 %v1339, %v1369
    %v1398 = vadd.f32 %v1340, %v1370
    %v1399 = vadd.f32 %v1341, %v1371
    %v1400 = vadd.f32 %v1342, %v1372
    %v1401 = vadd.f32 %v1343, %v1373
    %v1402 = vadd.f32 %v1344, %v1374
    %v1403 = vadd.f32 %v1345, %v1375
    %v1404 = vadd.f32 %v1346, %v1376
    %v1405 = vadd.f32 %v1347, %v1377
    %v1406 = vadd.f32 %v1348, %v1378
    %v1407 = vadd.f32 %v1349, %v1379
    %v1408 = vadd.f32 %v1350, %v1380
    %v1409 = vadd.f32 %v1351, %v1381
    %v1410 = vadd.f32 %v1352, %v1382
    %v1411 = vadd.f32 %v1353, %v1383
    %v1412 = vadd.f32 %v1354, %v1384
    %v1413 = vmax.f32 %v1385, %v1389
    %v1414 = vmax.f32 %v1387, %v1391
    %v1415 = vmax.f32 %v1413, %v1393
    %v1416 = vmax.f32 %v1414, %v1395
    %v1417 = vmax.f32 %v1415, %v1397
    %v1418 = vmax.f32 %v1416, %v1399
    %v1419 = vmax.f32 %v1417, %v1401
    %v1420 = vmax.f32 %v1418, %v1403
    %v1421 = vmax.f32 %v1419, %v1405
    %v1422 = vmax.f32 %v1420, %v1407
    %v1423 = vmax.f32 %v1421, %v1409
    %v1424 = vmax.f32 %v1422, %v1411
    %v1425 = vmax.f32 %v1423, %v1424
    %v1426 = vsel %vm851, %v1386, -inf
    %v1427 = vsel %vm851, %v1388, -inf
    %v1428 = vsel %vm851, %v1390, -inf
    %v1429 = vmax.f32 %v1426, %v1428
    %v1430 = vsel %vm851, %v1392, -inf
    %v1431 = vmax.f32 %v1427, %v1430
    %v1432 = vsel %vm851, %v1394, -inf
    %v1433 = vmax.f32 %v1429, %v1432
    %v1434 = vsel %vm851, %v1396, -inf
    %v1435 = vmax.f32 %v1431, %v1434
    %v1436 = vsel %vm851, %v1398, -inf
    %v1437 = vmax.f32 %v1433, %v1436
    %v1438 = vsel %vm851, %v1400, -inf
    %v1439 = vmax.f32 %v1435, %v1438
    %v1440 = vsel %vm851, %v1402, -inf
    %v1441 = vmax.f32 %v1437, %v1440
    %v1442 = vsel %vm851, %v1404, -inf
    %v1443 = vmax.f32 %v1439, %v1442
    %v1444 = vsel %vm851, %v1406, -inf
    %v1445 = vmax.f32 %v1441, %v1444
    %v1446 = vsel %vm851, %v1408, -inf
    %v1447 = vmax.f32 %v1443, %v1446
    %v1448 = vsel %vm851, %v1410, -inf
    %v1449 = vmax.f32 %v1445, %v1448
    %v1450 = vsel %vm851, %v1412, -inf
    %v1451 = vmax.f32 %v1447, %v1450
    %v1452 = vmax.f32 %v1449, %v1451
    %v1453 = vsel %vm851, %v1452, -inf
    %v1454 = vmax.f32 %v1425, %v1453
    %v1455 = vrot.slane %v1454, 4
    %v1456 = vmax.f32 %v1454, %v1455
    %v1457 = vrot.slane %v1456, 2
    %v1458 = vmax.f32 %v1456, %v1457
    %v1459 = vrot.slane %v1458, 1
    %v1460 = vmax.f32 %v1458, %v1459
    %s1461 = sld [smem:[#allocation9 + $0x1]]
    %v1462 = vstv %s1461
    %v1463 = vmul.f32 %v1460, %v1462
    %v1464 = vadd.f32 %v890, %v1463
    %s1465 = sld [smem:[#allocation8 + $0x100]]
    %v1466 = vstv %s1465
    %v1467 = vmul.f32 %v1466, %v63
    %v1468 = vmul.f32 %v1466, %v64
    %v1469 = vmul.f32 %v1466, %v65
    %v1470 = vmul.f32 %v1466, %v66
    %v1471 = vmul.f32 %v1466, %v67
    %v1472 = vmul.f32 %v1466, %v68
    %v1473 = vmul.f32 %v1466, %v69
    %v1474 = vmul.f32 %v1466, %v70
    %v1475 = vmul.f32 %v1466, %v71
    %v1476 = vmul.f32 %v1466, %v72
    %v1477 = vmul.f32 %v1466, %v73
    %v1478 = vmul.f32 %v1466, %v74
    %v1479 = vmul.f32 %v1466, %v75
    %v1480 = vmul.f32 %v1466, %v76
    %v1481 = vmul.f32 %v1466, %v77
    %v1482 = vmul.f32 %v1466, %v78
    %v1483 = vmul.f32 %v1466, %v79
    %v1484 = vmul.f32 %v1466, %v80
    %v1485 = vmul.f32 %v1466, %v81
    %v1486 = vmul.f32 %v1466, %v82
    %v1487 = vmul.f32 %v1466, %v83
    %v1488 = vmul.f32 %v1466, %v84
    %v1489 = vmul.f32 %v1466, %v85
    %v1490 = vmul.f32 %v1466, %v86
    %v1491 = vmul.f32 %v1466, %v87
    %v1492 = vmul.f32 %v1466, %v88
    %v1493 = vmul.f32 %v1466, %v89
    %v1494 = vmul.f32 %v1466, %v90
    %v1495 = vadd.f32 %v1467, 0.0
    %v1496 = vadd.f32 %v1468, 0.0
    %v1497 = vadd.f32 %v1469, 0.0
    %v1498 = vadd.f32 %v1470, 0.0
    %v1499 = vadd.f32 %v1471, 0.0
    %v1500 = vadd.f32 %v1472, 0.0
    %v1501 = vadd.f32 %v1473, 0.0
    %v1502 = vadd.f32 %v1474, 0.0
    %v1503 = vadd.f32 %v1475, 0.0
    %v1504 = vadd.f32 %v1476, 0.0
    %v1505 = vadd.f32 %v1477, 0.0
    %v1506 = vadd.f32 %v1478, 0.0
    %v1507 = vadd.f32 %v1479, 0.0
    %v1508 = vadd.f32 %v1480, 0.0
    %v1509 = vadd.f32 %v1481, 0.0
    %v1510 = vadd.f32 %v1482, 0.0
    %v1511 = vadd.f32 %v1483, 0.0
    %v1512 = vadd.f32 %v1484, 0.0
    %v1513 = vadd.f32 %v1485, 0.0
    %v1514 = vadd.f32 %v1486, 0.0
    %v1515 = vadd.f32 %v1487, 0.0
    %v1516 = vadd.f32 %v1488, 0.0
    %v1517 = vadd.f32 %v1489, 0.0
    %v1518 = vadd.f32 %v1490, 0.0
    %v1519 = vadd.f32 %v1491, 0.0
    %v1520 = vadd.f32 %v1492, 0.0
    %v1521 = vadd.f32 %v1493, 0.0
    %v1522 = vadd.f32 %v1494, 0.0
    %s1523 = sld [smem:[#allocation8 + $0x101]]
    %v1524 = vstv %s1523
    %v1525 = vmul.f32 %v1524, %v149
    %v1526 = vmul.f32 %v1524, %v150
    %v1527 = vmul.f32 %v1524, %v151
    %v1528 = vmul.f32 %v1524, %v152
    %v1529 = vmul.f32 %v1524, %v153
    %v1530 = vmul.f32 %v1524, %v154
    %v1531 = vmul.f32 %v1524, %v155
    %v1532 = vmul.f32 %v1524, %v156
    %v1533 = vmul.f32 %v1524, %v157
    %v1534 = vmul.f32 %v1524, %v158
    %v1535 = vmul.f32 %v1524, %v159
    %v1536 = vmul.f32 %v1524, %v160
    %v1537 = vmul.f32 %v1524, %v161
    %v1538 = vmul.f32 %v1524, %v162
    %v1539 = vmul.f32 %v1524, %v163
    %v1540 = vmul.f32 %v1524, %v164
    %v1541 = vmul.f32 %v1524, %v165
    %v1542 = vmul.f32 %v1524, %v166
    %v1543 = vmul.f32 %v1524, %v167
    %v1544 = vmul.f32 %v1524, %v168
    %v1545 = vmul.f32 %v1524, %v169
    %v1546 = vmul.f32 %v1524, %v170
    %v1547 = vmul.f32 %v1524, %v171
    %v1548 = vmul.f32 %v1524, %v172
    %v1549 = vmul.f32 %v1524, %v173
    %v1550 = vmul.f32 %v1524, %v174
    %v1551 = vmul.f32 %v1524, %v175
    %v1552 = vmul.f32 %v1524, %v176
    %v1553 = vadd.f32 %v1495, %v1525
    %v1554 = vadd.f32 %v1496, %v1526
    %v1555 = vadd.f32 %v1497, %v1527
    %v1556 = vadd.f32 %v1498, %v1528
    %v1557 = vadd.f32 %v1499, %v1529
    %v1558 = vadd.f32 %v1500, %v1530
    %v1559 = vadd.f32 %v1501, %v1531
    %v1560 = vadd.f32 %v1502, %v1532
    %v1561 = vadd.f32 %v1503, %v1533
    %v1562 = vadd.f32 %v1504, %v1534
    %v1563 = vadd.f32 %v1505, %v1535
    %v1564 = vadd.f32 %v1506, %v1536
    %v1565 = vadd.f32 %v1507, %v1537
    %v1566 = vadd.f32 %v1508, %v1538
    %v1567 = vadd.f32 %v1509, %v1539
    %v1568 = vadd.f32 %v1510, %v1540
    %v1569 = vadd.f32 %v1511, %v1541
    %v1570 = vadd.f32 %v1512, %v1542
    %v1571 = vadd.f32 %v1513, %v1543
    %v1572 = vadd.f32 %v1514, %v1544
    %v1573 = vadd.f32 %v1515, %v1545
    %v1574 = vadd.f32 %v1516, %v1546
    %v1575 = vadd.f32 %v1517, %v1547
    %v1576 = vadd.f32 %v1518, %v1548
    %v1577 = vadd.f32 %v1519, %v1549
    %v1578 = vadd.f32 %v1520, %v1550
    %v1579 = vadd.f32 %v1521, %v1551
    %v1580 = vadd.f32 %v1522, %v1552
    %s1581 = sld [smem:[#allocation8 + $0x102]]
    %v1582 = vstv %s1581
    %v1583 = vmul.f32 %v1582, %v235
    %v1584 = vmul.f32 %v1582, %v236
    %v1585 = vmul.f32 %v1582, %v237
    %v1586 = vmul.f32 %v1582, %v238
    %v1587 = vmul.f32 %v1582, %v239
    %v1588 = vmul.f32 %v1582, %v240
    %v1589 = vmul.f32 %v1582, %v241
    %v1590 = vmul.f32 %v1582, %v242
    %v1591 = vmul.f32 %v1582, %v243
    %v1592 = vmul.f32 %v1582, %v244
    %v1593 = vmul.f32 %v1582, %v245
    %v1594 = vmul.f32 %v1582, %v246
    %v1595 = vmul.f32 %v1582, %v247
    %v1596 = vmul.f32 %v1582, %v248
    %v1597 = vmul.f32 %v1582, %v249
    %v1598 = vmul.f32 %v1582, %v250
    %v1599 = vmul.f32 %v1582, %v251
    %v1600 = vmul.f32 %v1582, %v252
    %v1601 = vmul.f32 %v1582, %v253
    %v1602 = vmul.f32 %v1582, %v254
    %v1603 = vmul.f32 %v1582, %v255
    %v1604 = vmul.f32 %v1582, %v256
    %v1605 = vmul.f32 %v1582, %v257
    %v1606 = vmul.f32 %v1582, %v258
    %v1607 = vmul.f32 %v1582, %v259
    %v1608 = vmul.f32 %v1582, %v260
    %v1609 = vmul.f32 %v1582, %v261
    %v1610 = vmul.f32 %v1582, %v262
    %v1611 = vadd.f32 %v1553, %v1583
    %v1612 = vadd.f32 %v1554, %v1584
    %v1613 = vadd.f32 %v1555, %v1585
    %v1614 = vadd.f32 %v1556, %v1586
    %v1615 = vadd.f32 %v1557, %v1587
    %v1616 = vadd.f32 %v1558, %v1588
    %v1617 = vadd.f32 %v1559, %v1589
    %v1618 = vadd.f32 %v1560, %v1590
    %v1619 = vadd.f32 %v1561, %v1591
    %v1620 = vadd.f32 %v1562, %v1592
    %v1621 = vadd.f32 %v1563, %v1593
    %v1622 = vadd.f32 %v1564, %v1594
    %v1623 = vadd.f32 %v1565, %v1595
    %v1624 = vadd.f32 %v1566, %v1596
    %v1625 = vadd.f32 %v1567, %v1597
    %v1626 = vadd.f32 %v1568, %v1598
    %v1627 = vadd.f32 %v1569, %v1599
    %v1628 = vadd.f32 %v1570, %v1600
    %v1629 = vadd.f32 %v1571, %v1601
    %v1630 = vadd.f32 %v1572, %v1602
    %v1631 = vadd.f32 %v1573, %v1603
    %v1632 = vadd.f32 %v1574, %v1604
    %v1633 = vadd.f32 %v1575, %v1605
    %v1634 = vadd.f32 %v1576, %v1606
    %v1635 = vadd.f32 %v1577, %v1607
    %v1636 = vadd.f32 %v1578, %v1608
    %v1637 = vadd.f32 %v1579, %v1609
    %v1638 = vadd.f32 %v1580, %v1610
    %s1639 = sld [smem:[#allocation8 + $0x103]]
    %v1640 = vstv %s1639
    %v1641 = vmul.f32 %v1640, %v322
    %v1642 = vmul.f32 %v1640, %v323
    %v1643 = vmul.f32 %v1640, %v324
    %v1644 = vmul.f32 %v1640, %v325
    %v1645 = vmul.f32 %v1640, %v326
    %v1646 = vmul.f32 %v1640, %v327
    %v1647 = vmul.f32 %v1640, %v328
    %v1648 = vmul.f32 %v1640, %v329
    %v1649 = vmul.f32 %v1640, %v330
    %v1650 = vmul.f32 %v1640, %v331
    %v1651 = vmul.f32 %v1640, %v332
    %v1652 = vmul.f32 %v1640, %v333
    %v1653 = vmul.f32 %v1640, %v334
    %v1654 = vmul.f32 %v1640, %v335
    %v1655 = vmul.f32 %v1640, %v336
    %v1656 = vmul.f32 %v1640, %v337
    %v1657 = vmul.f32 %v1640, %v338
    %v1658 = vmul.f32 %v1640, %v339
    %v1659 = vmul.f32 %v1640, %v340
    %v1660 = vmul.f32 %v1640, %v341
    %v1661 = vmul.f32 %v1640, %v342
    %v1662 = vmul.f32 %v1640, %v343
    %v1663 = vmul.f32 %v1640, %v344
    %v1664 = vmul.f32 %v1640, %v345
    %v1665 = vmul.f32 %v1640, %v346
    %v1666 = vmul.f32 %v1640, %v347
    %v1667 = vmul.f32 %v1640, %v348
    %v1668 = vmul.f32 %v1640, %v349
    %v1669 = vadd.f32 %v1611, %v1641
    %v1670 = vadd.f32 %v1612, %v1642
    %v1671 = vadd.f32 %v1613, %v1643
    %v1672 = vadd.f32 %v1614, %v1644
    %v1673 = vadd.f32 %v1615, %v1645
    %v1674 = vadd.f32 %v1616, %v1646
    %v1675 = vadd.f32 %v1617, %v1647
    %v1676 = vadd.f32 %v1618, %v1648
    %v1677 = vadd.f32 %v1619, %v1649
    %v1678 = vadd.f32 %v1620, %v1650
    %v1679 = vadd.f32 %v1621, %v1651
    %v1680 = vadd.f32 %v1622, %v1652
    %v1681 = vadd.f32 %v1623, %v1653
    %v1682 = vadd.f32 %v1624, %v1654
    %v1683 = vadd.f32 %v1625, %v1655
    %v1684 = vadd.f32 %v1626, %v1656
    %v1685 = vadd.f32 %v1627, %v1657
    %v1686 = vadd.f32 %v1628, %v1658
    %v1687 = vadd.f32 %v1629, %v1659
    %v1688 = vadd.f32 %v1630, %v1660
    %v1689 = vadd.f32 %v1631, %v1661
    %v1690 = vadd.f32 %v1632, %v1662
    %v1691 = vadd.f32 %v1633, %v1663
    %v1692 = vadd.f32 %v1634, %v1664
    %v1693 = vadd.f32 %v1635, %v1665
    %v1694 = vadd.f32 %v1636, %v1666
    %v1695 = vadd.f32 %v1637, %v1667
    %v1696 = vadd.f32 %v1638, %v1668
    %s1697 = sld [smem:[#allocation8 + $0x104]]
    %v1698 = vstv %s1697
    %v1699 = vmul.f32 %v1698, %v408
    %v1700 = vmul.f32 %v1698, %v409
    %v1701 = vmul.f32 %v1698, %v410
    %v1702 = vmul.f32 %v1698, %v411
    %v1703 = vmul.f32 %v1698, %v412
    %v1704 = vmul.f32 %v1698, %v413
    %v1705 = vmul.f32 %v1698, %v414
    %v1706 = vmul.f32 %v1698, %v415
    %v1707 = vmul.f32 %v1698, %v416
    %v1708 = vmul.f32 %v1698, %v417
    %v1709 = vmul.f32 %v1698, %v418
    %v1710 = vmul.f32 %v1698, %v419
    %v1711 = vmul.f32 %v1698, %v420
    %v1712 = vmul.f32 %v1698, %v421
    %v1713 = vmul.f32 %v1698, %v422
    %v1714 = vmul.f32 %v1698, %v423
    %v1715 = vmul.f32 %v1698, %v424
    %v1716 = vmul.f32 %v1698, %v425
    %v1717 = vmul.f32 %v1698, %v426
    %v1718 = vmul.f32 %v1698, %v427
    %v1719 = vmul.f32 %v1698, %v428
    %v1720 = vmul.f32 %v1698, %v429
    %v1721 = vmul.f32 %v1698, %v430
    %v1722 = vmul.f32 %v1698, %v431
    %v1723 = vmul.f32 %v1698, %v432
    %v1724 = vmul.f32 %v1698, %v433
    %v1725 = vmul.f32 %v1698, %v434
    %v1726 = vmul.f32 %v1698, %v435
    %v1727 = vadd.f32 %v1669, %v1699
    %v1728 = vadd.f32 %v1670, %v1700
    %v1729 = vadd.f32 %v1671, %v1701
    %v1730 = vadd.f32 %v1672, %v1702
    %v1731 = vadd.f32 %v1673, %v1703
    %v1732 = vadd.f32 %v1674, %v1704
    %v1733 = vadd.f32 %v1675, %v1705
    %v1734 = vadd.f32 %v1676, %v1706
    %v1735 = vadd.f32 %v1677, %v1707
    %v1736 = vadd.f32 %v1678, %v1708
    %v1737 = vadd.f32 %v1679, %v1709
    %v1738 = vadd.f32 %v1680, %v1710
    %v1739 = vadd.f32 %v1681, %v1711
    %v1740 = vadd.f32 %v1682, %v1712
    %v1741 = vadd.f32 %v1683, %v1713
    %v1742 = vadd.f32 %v1684, %v1714
    %v1743 = vadd.f32 %v1685, %v1715
    %v1744 = vadd.f32 %v1686, %v1716
    %v1745 = vadd.f32 %v1687, %v1717
    %v1746 = vadd.f32 %v1688, %v1718
    %v1747 = vadd.f32 %v1689, %v1719
    %v1748 = vadd.f32 %v1690, %v1720
    %v1749 = vadd.f32 %v1691, %v1721
    %v1750 = vadd.f32 %v1692, %v1722
    %v1751 = vadd.f32 %v1693, %v1723
    %v1752 = vadd.f32 %v1694, %v1724
    %v1753 = vadd.f32 %v1695, %v1725
    %v1754 = vadd.f32 %v1696, %v1726
    %s1755 = sld [smem:[#allocation8 + $0x105]]
    %v1756 = vstv %s1755
    %v1757 = vmul.f32 %v1756, %v494
    %v1758 = vmul.f32 %v1756, %v495
    %v1759 = vmul.f32 %v1756, %v496
    %v1760 = vmul.f32 %v1756, %v497
    %v1761 = vmul.f32 %v1756, %v498
    %v1762 = vmul.f32 %v1756, %v499
    %v1763 = vmul.f32 %v1756, %v500
    %v1764 = vmul.f32 %v1756, %v501
    %v1765 = vmul.f32 %v1756, %v502
    %v1766 = vmul.f32 %v1756, %v503
    %v1767 = vmul.f32 %v1756, %v504
    %v1768 = vmul.f32 %v1756, %v505
    %v1769 = vmul.f32 %v1756, %v506
    %v1770 = vmul.f32 %v1756, %v507
    %v1771 = vmul.f32 %v1756, %v508
    %v1772 = vmul.f32 %v1756, %v509
    %v1773 = vmul.f32 %v1756, %v510
    %v1774 = vmul.f32 %v1756, %v511
    %v1775 = vmul.f32 %v1756, %v512
    %v1776 = vmul.f32 %v1756, %v513
    %v1777 = vmul.f32 %v1756, %v514
    %v1778 = vmul.f32 %v1756, %v515
    %v1779 = vmul.f32 %v1756, %v516
    %v1780 = vmul.f32 %v1756, %v517
    %v1781 = vmul.f32 %v1756, %v518
    %v1782 = vmul.f32 %v1756, %v519
    %v1783 = vmul.f32 %v1756, %v520
    %v1784 = vmul.f32 %v1756, %v521
    %v1785 = vadd.f32 %v1727, %v1757
    %v1786 = vadd.f32 %v1728, %v1758
    %v1787 = vadd.f32 %v1729, %v1759
    %v1788 = vadd.f32 %v1730, %v1760
    %v1789 = vadd.f32 %v1731, %v1761
    %v1790 = vadd.f32 %v1732, %v1762
    %v1791 = vadd.f32 %v1733, %v1763
    %v1792 = vadd.f32 %v1734, %v1764
    %v1793 = vadd.f32 %v1735, %v1765
    %v1794 = vadd.f32 %v1736, %v1766
    %v1795 = vadd.f32 %v1737, %v1767
    %v1796 = vadd.f32 %v1738, %v1768
    %v1797 = vadd.f32 %v1739, %v1769
    %v1798 = vadd.f32 %v1740, %v1770
    %v1799 = vadd.f32 %v1741, %v1771
    %v1800 = vadd.f32 %v1742, %v1772
    %v1801 = vadd.f32 %v1743, %v1773
    %v1802 = vadd.f32 %v1744, %v1774
    %v1803 = vadd.f32 %v1745, %v1775
    %v1804 = vadd.f32 %v1746, %v1776
    %v1805 = vadd.f32 %v1747, %v1777
    %v1806 = vadd.f32 %v1748, %v1778
    %v1807 = vadd.f32 %v1749, %v1779
    %v1808 = vadd.f32 %v1750, %v1780
    %v1809 = vadd.f32 %v1751, %v1781
    %v1810 = vadd.f32 %v1752, %v1782
    %v1811 = vadd.f32 %v1753, %v1783
    %v1812 = vadd.f32 %v1754, %v1784
    %s1813 = sld [smem:[#allocation8 + $0x106]]
    %v1814 = vstv %s1813
    %v1815 = vmul.f32 %v1814, %v581
    %v1816 = vmul.f32 %v1814, %v582
    %v1817 = vmul.f32 %v1814, %v583
    %v1818 = vmul.f32 %v1814, %v584
    %v1819 = vmul.f32 %v1814, %v585
    %v1820 = vmul.f32 %v1814, %v586
    %v1821 = vmul.f32 %v1814, %v587
    %v1822 = vmul.f32 %v1814, %v588
    %v1823 = vmul.f32 %v1814, %v589
    %v1824 = vmul.f32 %v1814, %v590
    %v1825 = vmul.f32 %v1814, %v591
    %v1826 = vmul.f32 %v1814, %v592
    %v1827 = vmul.f32 %v1814, %v593
    %v1828 = vmul.f32 %v1814, %v594
    %v1829 = vmul.f32 %v1814, %v595
    %v1830 = vmul.f32 %v1814, %v596
    %v1831 = vmul.f32 %v1814, %v597
    %v1832 = vmul.f32 %v1814, %v598
    %v1833 = vmul.f32 %v1814, %v599
    %v1834 = vmul.f32 %v1814, %v600
    %v1835 = vmul.f32 %v1814, %v601
    %v1836 = vmul.f32 %v1814, %v602
    %v1837 = vmul.f32 %v1814, %v603
    %v1838 = vmul.f32 %v1814, %v604
    %v1839 = vmul.f32 %v1814, %v605
    %v1840 = vmul.f32 %v1814, %v606
    %v1841 = vmul.f32 %v1814, %v607
    %v1842 = vmul.f32 %v1814, %v608
    %v1843 = vadd.f32 %v1785, %v1815
    %v1844 = vadd.f32 %v1786, %v1816
    %v1845 = vadd.f32 %v1787, %v1817
    %v1846 = vadd.f32 %v1788, %v1818
    %v1847 = vadd.f32 %v1789, %v1819
    %v1848 = vadd.f32 %v1790, %v1820
    %v1849 = vadd.f32 %v1791, %v1821
    %v1850 = vadd.f32 %v1792, %v1822
    %v1851 = vadd.f32 %v1793, %v1823
    %v1852 = vadd.f32 %v1794, %v1824
    %v1853 = vadd.f32 %v1795, %v1825
    %v1854 = vadd.f32 %v1796, %v1826
    %v1855 = vadd.f32 %v1797, %v1827
    %v1856 = vadd.f32 %v1798, %v1828
    %v1857 = vadd.f32 %v1799, %v1829
    %v1858 = vadd.f32 %v1800, %v1830
    %v1859 = vadd.f32 %v1801, %v1831
    %v1860 = vadd.f32 %v1802, %v1832
    %v1861 = vadd.f32 %v1803, %v1833
    %v1862 = vadd.f32 %v1804, %v1834
    %v1863 = vadd.f32 %v1805, %v1835
    %v1864 = vadd.f32 %v1806, %v1836
    %v1865 = vadd.f32 %v1807, %v1837
    %v1866 = vadd.f32 %v1808, %v1838
    %v1867 = vadd.f32 %v1809, %v1839
    %v1868 = vadd.f32 %v1810, %v1840
    %v1869 = vadd.f32 %v1811, %v1841
    %v1870 = vadd.f32 %v1812, %v1842
    %s1871 = sld [smem:[#allocation8 + $0x107]]
    %v1872 = vstv %s1871
    %v1873 = vmul.f32 %v1872, %v667
    %v1874 = vmul.f32 %v1872, %v668
    %v1875 = vmul.f32 %v1872, %v669
    %v1876 = vmul.f32 %v1872, %v670
    %v1877 = vmul.f32 %v1872, %v671
    %v1878 = vmul.f32 %v1872, %v672
    %v1879 = vmul.f32 %v1872, %v673
    %v1880 = vmul.f32 %v1872, %v674
    %v1881 = vmul.f32 %v1872, %v675
    %v1882 = vmul.f32 %v1872, %v676
    %v1883 = vmul.f32 %v1872, %v677
    %v1884 = vmul.f32 %v1872, %v678
    %v1885 = vmul.f32 %v1872, %v679
    %v1886 = vmul.f32 %v1872, %v680
    %v1887 = vmul.f32 %v1872, %v681
    %v1888 = vmul.f32 %v1872, %v682
    %v1889 = vmul.f32 %v1872, %v683
    %v1890 = vmul.f32 %v1872, %v684
    %v1891 = vmul.f32 %v1872, %v685
    %v1892 = vmul.f32 %v1872, %v686
    %v1893 = vmul.f32 %v1872, %v687
    %v1894 = vmul.f32 %v1872, %v688
    %v1895 = vmul.f32 %v1872, %v689
    %v1896 = vmul.f32 %v1872, %v690
    %v1897 = vmul.f32 %v1872, %v691
    %v1898 = vmul.f32 %v1872, %v692
    %v1899 = vmul.f32 %v1872, %v693
    %v1900 = vmul.f32 %v1872, %v694
    %v1901 = vadd.f32 %v1843, %v1873
    %v1902 = vadd.f32 %v1844, %v1874
    %v1903 = vadd.f32 %v1845, %v1875
    %v1904 = vadd.f32 %v1846, %v1876
    %v1905 = vadd.f32 %v1847, %v1877
    %v1906 = vadd.f32 %v1848, %v1878
    %v1907 = vadd.f32 %v1849, %v1879
    %v1908 = vadd.f32 %v1850, %v1880
    %v1909 = vadd.f32 %v1851, %v1881
    %v1910 = vadd.f32 %v1852, %v1882
    %v1911 = vadd.f32 %v1853, %v1883
    %v1912 = vadd.f32 %v1854, %v1884
    %v1913 = vadd.f32 %v1855, %v1885
    %v1914 = vadd.f32 %v1856, %v1886
    %v1915 = vadd.f32 %v1857, %v1887
    %v1916 = vadd.f32 %v1858, %v1888
    %v1917 = vadd.f32 %v1859, %v1889
    %v1918 = vadd.f32 %v1860, %v1890
    %v1919 = vadd.f32 %v1861, %v1891
    %v1920 = vadd.f32 %v1862, %v1892
    %v1921 = vadd.f32 %v1863, %v1893
    %v1922 = vadd.f32 %v1864, %v1894
    %v1923 = vadd.f32 %v1865, %v1895
    %v1924 = vadd.f32 %v1866, %v1896
    %v1925 = vadd.f32 %v1867, %v1897
    %v1926 = vadd.f32 %v1868, %v1898
    %v1927 = vadd.f32 %v1869, %v1899
    %v1928 = vadd.f32 %v1870, %v1900
    %s1929 = sld [smem:[#allocation8 + $0x108]]
    %v1930 = vstv %s1929
    %v1931 = vmul.f32 %v1930, %v753
    %v1932 = vmul.f32 %v1930, %v754
    %v1933 = vmul.f32 %v1930, %v755
    %v1934 = vmul.f32 %v1930, %v756
    %v1935 = vmul.f32 %v1930, %v757
    %v1936 = vmul.f32 %v1930, %v758
    %v1937 = vmul.f32 %v1930, %v759
    %v1938 = vmul.f32 %v1930, %v760
    %v1939 = vmul.f32 %v1930, %v761
    %v1940 = vmul.f32 %v1930, %v762
    %v1941 = vmul.f32 %v1930, %v763
    %v1942 = vmul.f32 %v1930, %v764
    %v1943 = vmul.f32 %v1930, %v765
    %v1944 = vmul.f32 %v1930, %v766
    %v1945 = vmul.f32 %v1930, %v767
    %v1946 = vmul.f32 %v1930, %v768
    %v1947 = vmul.f32 %v1930, %v769
    %v1948 = vmul.f32 %v1930, %v770
    %v1949 = vmul.f32 %v1930, %v771
    %v1950 = vmul.f32 %v1930, %v772
    %v1951 = vmul.f32 %v1930, %v773
    %v1952 = vmul.f32 %v1930, %v774
    %v1953 = vmul.f32 %v1930, %v775
    %v1954 = vmul.f32 %v1930, %v776
    %v1955 = vmul.f32 %v1930, %v777
    %v1956 = vmul.f32 %v1930, %v778
    %v1957 = vmul.f32 %v1930, %v779
    %v1958 = vmul.f32 %v1930, %v780
    %v1959 = vadd.f32 %v1901, %v1931
    %v1960 = vadd.f32 %v1902, %v1932
    %v1961 = vadd.f32 %v1903, %v1933
    %v1962 = vadd.f32 %v1904, %v1934
    %v1963 = vadd.f32 %v1905, %v1935
    %v1964 = vadd.f32 %v1906, %v1936
    %v1965 = vadd.f32 %v1907, %v1937
    %v1966 = vadd.f32 %v1908, %v1938
    %v1967 = vadd.f32 %v1909, %v1939
    %v1968 = vadd.f32 %v1910, %v1940
    %v1969 = vadd.f32 %v1911, %v1941
    %v1970 = vadd.f32 %v1912, %v1942
    %v1971 = vadd.f32 %v1913, %v1943
    %v1972 = vadd.f32 %v1914, %v1944
    %v1973 = vadd.f32 %v1915, %v1945
    %v1974 = vadd.f32 %v1916, %v1946
    %v1975 = vadd.f32 %v1917, %v1947
    %v1976 = vadd.f32 %v1918, %v1948
    %v1977 = vadd.f32 %v1919, %v1949
    %v1978 = vadd.f32 %v1920, %v1950
    %v1979 = vadd.f32 %v1921, %v1951
    %v1980 = vadd.f32 %v1922, %v1952
    %v1981 = vadd.f32 %v1923, %v1953
    %v1982 = vadd.f32 %v1924, %v1954
    %v1983 = vadd.f32 %v1925, %v1955
    %v1984 = vadd.f32 %v1926, %v1956
    %v1985 = vadd.f32 %v1927, %v1957
    %v1986 = vadd.f32 %v1928, %v1958
    %v1987 = vmax.f32 %v1959, %v1963
    %v1988 = vmax.f32 %v1961, %v1965
    %v1989 = vmax.f32 %v1987, %v1967
    %v1990 = vmax.f32 %v1988, %v1969
    %v1991 = vmax.f32 %v1989, %v1971
    %v1992 = vmax.f32 %v1990, %v1973
    %v1993 = vmax.f32 %v1991, %v1975
    %v1994 = vmax.f32 %v1992, %v1977
    %v1995 = vmax.f32 %v1993, %v1979
    %v1996 = vmax.f32 %v1994, %v1981
    %v1997 = vmax.f32 %v1995, %v1983
    %v1998 = vmax.f32 %v1996, %v1985
    %v1999 = vmax.f32 %v1997, %v1998
    %v2000 = vsel %vm851, %v1960, -inf
    %v2001 = vsel %vm851, %v1962, -inf
    %v2002 = vsel %vm851, %v1964, -inf
    %v2003 = vmax.f32 %v2000, %v2002
    %v2004 = vsel %vm851, %v1966, -inf
    %v2005 = vmax.f32 %v2001, %v2004
    %v2006 = vsel %vm851, %v1968, -inf
    %v2007 = vmax.f32 %v2003, %v2006
    %v2008 = vsel %vm851, %v1970, -inf
    %v2009 = vmax.f32 %v2005, %v2008
    %v2010 = vsel %vm851, %v1972, -inf
    %v2011 = vmax.f32 %v2007, %v2010
    %v2012 = vsel %vm851, %v1974, -inf
    %v2013 = vmax.f32 %v2009, %v2012
    %v2014 = vsel %vm851, %v1976, -inf
    %v2015 = vmax.f32 %v2011, %v2014
    %v2016 = vsel %vm851, %v1978, -inf
    %v2017 = vmax.f32 %v2013, %v2016
    %v2018 = vsel %vm851, %v1980, -inf
    %v2019 = vmax.f32 %v2015, %v2018
    %v2020 = vsel %vm851, %v1982, -inf
    %v2021 = vmax.f32 %v2017, %v2020
    %v2022 = vsel %vm851, %v1984, -inf
    %v2023 = vmax.f32 %v2019, %v2022
    %v2024 = vsel %vm851, %v1986, -inf
    %v2025 = vmax.f32 %v2021, %v2024
    %v2026 = vmax.f32 %v2023, %v2025
    %v2027 = vsel %vm851, %v2026, -inf
    %v2028 = vmax.f32 %v1999, %v2027
    %v2029 = vrot.slane %v2028, 4
    %v2030 = vmax.f32 %v2028, %v2029
    %v2031 = vrot.slane %v2030, 2
    %v2032 = vmax.f32 %v2030, %v2031
    %v2033 = vrot.slane %v2032, 1
    %v2034 = vmax.f32 %v2032, %v2033
    %s2035 = sld [smem:[#allocation9 + $0x2]]
    %v2036 = vstv %s2035
    %v2037 = vmul.f32 %v2034, %v2036
    %v2038 = vadd.f32 %v1464, %v2037
    %s2039 = sld [smem:[#allocation8 + $0x180]]
    %v2040 = vstv %s2039
    %v2041 = vmul.f32 %v2040, %v63
    %v2042 = vmul.f32 %v2040, %v64
    %v2043 = vmul.f32 %v2040, %v65
    %v2044 = vmul.f32 %v2040, %v66
    %v2045 = vmul.f32 %v2040, %v67
    %v2046 = vmul.f32 %v2040, %v68
    %v2047 = vmul.f32 %v2040, %v69
    %v2048 = vmul.f32 %v2040, %v70
    %v2049 = vmul.f32 %v2040, %v71
    %v2050 = vmul.f32 %v2040, %v72
    %v2051 = vmul.f32 %v2040, %v73
    %v2052 = vmul.f32 %v2040, %v74
    %v2053 = vmul.f32 %v2040, %v75
    %v2054 = vmul.f32 %v2040, %v76
    %v2055 = vmul.f32 %v2040, %v77
    %v2056 = vmul.f32 %v2040, %v78
    %v2057 = vmul.f32 %v2040, %v79
    %v2058 = vmul.f32 %v2040, %v80
    %v2059 = vmul.f32 %v2040, %v81
    %v2060 = vmul.f32 %v2040, %v82
    %v2061 = vmul.f32 %v2040, %v83
    %v2062 = vmul.f32 %v2040, %v84
    %v2063 = vmul.f32 %v2040, %v85
    %v2064 = vmul.f32 %v2040, %v86
    %v2065 = vmul.f32 %v2040, %v87
    %v2066 = vmul.f32 %v2040, %v88
    %v2067 = vmul.f32 %v2040, %v89
    %v2068 = vmul.f32 %v2040, %v90
    %v2069 = vadd.f32 %v2041, 0.0
    %v2070 = vadd.f32 %v2042, 0.0
    %v2071 = vadd.f32 %v2043, 0.0
    %v2072 = vadd.f32 %v2044, 0.0
    %v2073 = vadd.f32 %v2045, 0.0
    %v2074 = vadd.f32 %v2046, 0.0
    %v2075 = vadd.f32 %v2047, 0.0
    %v2076 = vadd.f32 %v2048, 0.0
    %v2077 = vadd.f32 %v2049, 0.0
    %v2078 = vadd.f32 %v2050, 0.0
    %v2079 = vadd.f32 %v2051, 0.0
    %v2080 = vadd.f32 %v2052, 0.0
    %v2081 = vadd.f32 %v2053, 0.0
    %v2082 = vadd.f32 %v2054, 0.0
    %v2083 = vadd.f32 %v2055, 0.0
    %v2084 = vadd.f32 %v2056, 0.0
    %v2085 = vadd.f32 %v2057, 0.0
    %v2086 = vadd.f32 %v2058, 0.0
    %v2087 = vadd.f32 %v2059, 0.0
    %v2088 = vadd.f32 %v2060, 0.0
    %v2089 = vadd.f32 %v2061, 0.0
    %v2090 = vadd.f32 %v2062, 0.0
    %v2091 = vadd.f32 %v2063, 0.0
    %v2092 = vadd.f32 %v2064, 0.0
    %v2093 = vadd.f32 %v2065, 0.0
    %v2094 = vadd.f32 %v2066, 0.0
    %v2095 = vadd.f32 %v2067, 0.0
    %v2096 = vadd.f32 %v2068, 0.0
    %s2097 = sld [smem:[#allocation8 + $0x181]]
    %v2098 = vstv %s2097
    %v2099 = vmul.f32 %v2098, %v149
    %v2100 = vmul.f32 %v2098, %v150
    %v2101 = vmul.f32 %v2098, %v151
    %v2102 = vmul.f32 %v2098, %v152
    %v2103 = vmul.f32 %v2098, %v153
    %v2104 = vmul.f32 %v2098, %v154
    %v2105 = vmul.f32 %v2098, %v155
    %v2106 = vmul.f32 %v2098, %v156
    %v2107 = vmul.f32 %v2098, %v157
    %v2108 = vmul.f32 %v2098, %v158
    %v2109 = vmul.f32 %v2098, %v159
    %v2110 = vmul.f32 %v2098, %v160
    %v2111 = vmul.f32 %v2098, %v161
    %v2112 = vmul.f32 %v2098, %v162
    %v2113 = vmul.f32 %v2098, %v163
    %v2114 = vmul.f32 %v2098, %v164
    %v2115 = vmul.f32 %v2098, %v165
    %v2116 = vmul.f32 %v2098, %v166
    %v2117 = vmul.f32 %v2098, %v167
    %v2118 = vmul.f32 %v2098, %v168
    %v2119 = vmul.f32 %v2098, %v169
    %v2120 = vmul.f32 %v2098, %v170
    %v2121 = vmul.f32 %v2098, %v171
    %v2122 = vmul.f32 %v2098, %v172
    %v2123 = vmul.f32 %v2098, %v173
    %v2124 = vmul.f32 %v2098, %v174
    %v2125 = vmul.f32 %v2098, %v175
    %v2126 = vmul.f32 %v2098, %v176
    %v2127 = vadd.f32 %v2069, %v2099
    %v2128 = vadd.f32 %v2070, %v2100
    %v2129 = vadd.f32 %v2071, %v2101
    %v2130 = vadd.f32 %v2072, %v2102
    %v2131 = vadd.f32 %v2073, %v2103
    %v2132 = vadd.f32 %v2074, %v2104
    %v2133 = vadd.f32 %v2075, %v2105
    %v2134 = vadd.f32 %v2076, %v2106
    %v2135 = vadd.f32 %v2077, %v2107
    %v2136 = vadd.f32 %v2078, %v2108
    %v2137 = vadd.f32 %v2079, %v2109
    %v2138 = vadd.f32 %v2080, %v2110
    %v2139 = vadd.f32 %v2081, %v2111
    %v2140 = vadd.f32 %v2082, %v2112
    %v2141 = vadd.f32 %v2083, %v2113
    %v2142 = vadd.f32 %v2084, %v2114
    %v2143 = vadd.f32 %v2085, %v2115
    %v2144 = vadd.f32 %v2086, %v2116
    %v2145 = vadd.f32 %v2087, %v2117
    %v2146 = vadd.f32 %v2088, %v2118
    %v2147 = vadd.f32 %v2089, %v2119
    %v2148 = vadd.f32 %v2090, %v2120
    %v2149 = vadd.f32 %v2091, %v2121
    %v2150 = vadd.f32 %v2092, %v2122
    %v2151 = vadd.f32 %v2093, %v2123
    %v2152 = vadd.f32 %v2094, %v2124
    %v2153 = vadd.f32 %v2095, %v2125
    %v2154 = vadd.f32 %v2096, %v2126
    %s2155 = sld [smem:[#allocation8 + $0x182]]
    %v2156 = vstv %s2155
    %v2157 = vmul.f32 %v2156, %v235
    %v2158 = vmul.f32 %v2156, %v236
    %v2159 = vmul.f32 %v2156, %v237
    %v2160 = vmul.f32 %v2156, %v238
    %v2161 = vmul.f32 %v2156, %v239
    %v2162 = vmul.f32 %v2156, %v240
    %v2163 = vmul.f32 %v2156, %v241
    %v2164 = vmul.f32 %v2156, %v242
    %v2165 = vmul.f32 %v2156, %v243
    %v2166 = vmul.f32 %v2156, %v244
    %v2167 = vmul.f32 %v2156, %v245
    %v2168 = vmul.f32 %v2156, %v246
    %v2169 = vmul.f32 %v2156, %v247
    %v2170 = vmul.f32 %v2156, %v248
    %v2171 = vmul.f32 %v2156, %v249
    %v2172 = vmul.f32 %v2156, %v250
    %v2173 = vmul.f32 %v2156, %v251
    %v2174 = vmul.f32 %v2156, %v252
    %v2175 = vmul.f32 %v2156, %v253
    %v2176 = vmul.f32 %v2156, %v254
    %v2177 = vmul.f32 %v2156, %v255
    %v2178 = vmul.f32 %v2156, %v256
    %v2179 = vmul.f32 %v2156, %v257
    %v2180 = vmul.f32 %v2156, %v258
    %v2181 = vmul.f32 %v2156, %v259
    %v2182 = vmul.f32 %v2156, %v260
    %v2183 = vmul.f32 %v2156, %v261
    %v2184 = vmul.f32 %v2156, %v262
    %v2185 = vadd.f32 %v2127, %v2157
    %v2186 = vadd.f32 %v2128, %v2158
    %v2187 = vadd.f32 %v2129, %v2159
    %v2188 = vadd.f32 %v2130, %v2160
    %v2189 = vadd.f32 %v2131, %v2161
    %v2190 = vadd.f32 %v2132, %v2162
    %v2191 = vadd.f32 %v2133, %v2163
    %v2192 = vadd.f32 %v2134, %v2164
    %v2193 = vadd.f32 %v2135, %v2165
    %v2194 = vadd.f32 %v2136, %v2166
    %v2195 = vadd.f32 %v2137, %v2167
    %v2196 = vadd.f32 %v2138, %v2168
    %v2197 = vadd.f32 %v2139, %v2169
    %v2198 = vadd.f32 %v2140, %v2170
    %v2199 = vadd.f32 %v2141, %v2171
    %v2200 = vadd.f32 %v2142, %v2172
    %v2201 = vadd.f32 %v2143, %v2173
    %v2202 = vadd.f32 %v2144, %v2174
    %v2203 = vadd.f32 %v2145, %v2175
    %v2204 = vadd.f32 %v2146, %v2176
    %v2205 = vadd.f32 %v2147, %v2177
    %v2206 = vadd.f32 %v2148, %v2178
    %v2207 = vadd.f32 %v2149, %v2179
    %v2208 = vadd.f32 %v2150, %v2180
    %v2209 = vadd.f32 %v2151, %v2181
    %v2210 = vadd.f32 %v2152, %v2182
    %v2211 = vadd.f32 %v2153, %v2183
    %v2212 = vadd.f32 %v2154, %v2184
    %s2213 = sld [smem:[#allocation8 + $0x183]]
    %v2214 = vstv %s2213
    %v2215 = vmul.f32 %v2214, %v322
    %v2216 = vmul.f32 %v2214, %v323
    %v2217 = vmul.f32 %v2214, %v324
    %v2218 = vmul.f32 %v2214, %v325
    %v2219 = vmul.f32 %v2214, %v326
    %v2220 = vmul.f32 %v2214, %v327
    %v2221 = vmul.f32 %v2214, %v328
    %v2222 = vmul.f32 %v2214, %v329
    %v2223 = vmul.f32 %v2214, %v330
    %v2224 = vmul.f32 %v2214, %v331
    %v2225 = vmul.f32 %v2214, %v332
    %v2226 = vmul.f32 %v2214, %v333
    %v2227 = vmul.f32 %v2214, %v334
    %v2228 = vmul.f32 %v2214, %v335
    %v2229 = vmul.f32 %v2214, %v336
    %v2230 = vmul.f32 %v2214, %v337
    %v2231 = vmul.f32 %v2214, %v338
    %v2232 = vmul.f32 %v2214, %v339
    %v2233 = vmul.f32 %v2214, %v340
    %v2234 = vmul.f32 %v2214, %v341
    %v2235 = vmul.f32 %v2214, %v342
    %v2236 = vmul.f32 %v2214, %v343
    %v2237 = vmul.f32 %v2214, %v344
    %v2238 = vmul.f32 %v2214, %v345
    %v2239 = vmul.f32 %v2214, %v346
    %v2240 = vmul.f32 %v2214, %v347
    %v2241 = vmul.f32 %v2214, %v348
    %v2242 = vmul.f32 %v2214, %v349
    %v2243 = vadd.f32 %v2185, %v2215
    %v2244 = vadd.f32 %v2186, %v2216
    %v2245 = vadd.f32 %v2187, %v2217
    %v2246 = vadd.f32 %v2188, %v2218
    %v2247 = vadd.f32 %v2189, %v2219
    %v2248 = vadd.f32 %v2190, %v2220
    %v2249 = vadd.f32 %v2191, %v2221
    %v2250 = vadd.f32 %v2192, %v2222
    %v2251 = vadd.f32 %v2193, %v2223
    %v2252 = vadd.f32 %v2194, %v2224
    %v2253 = vadd.f32 %v2195, %v2225
    %v2254 = vadd.f32 %v2196, %v2226
    %v2255 = vadd.f32 %v2197, %v2227
    %v2256 = vadd.f32 %v2198, %v2228
    %v2257 = vadd.f32 %v2199, %v2229
    %v2258 = vadd.f32 %v2200, %v2230
    %v2259 = vadd.f32 %v2201, %v2231
    %v2260 = vadd.f32 %v2202, %v2232
    %v2261 = vadd.f32 %v2203, %v2233
    %v2262 = vadd.f32 %v2204, %v2234
    %v2263 = vadd.f32 %v2205, %v2235
    %v2264 = vadd.f32 %v2206, %v2236
    %v2265 = vadd.f32 %v2207, %v2237
    %v2266 = vadd.f32 %v2208, %v2238
    %v2267 = vadd.f32 %v2209, %v2239
    %v2268 = vadd.f32 %v2210, %v2240
    %v2269 = vadd.f32 %v2211, %v2241
    %v2270 = vadd.f32 %v2212, %v2242
    %s2271 = sld [smem:[#allocation8 + $0x184]]
    %v2272 = vstv %s2271
    %v2273 = vmul.f32 %v2272, %v408
    %v2274 = vmul.f32 %v2272, %v409
    %v2275 = vmul.f32 %v2272, %v410
    %v2276 = vmul.f32 %v2272, %v411
    %v2277 = vmul.f32 %v2272, %v412
    %v2278 = vmul.f32 %v2272, %v413
    %v2279 = vmul.f32 %v2272, %v414
    %v2280 = vmul.f32 %v2272, %v415
    %v2281 = vmul.f32 %v2272, %v416
    %v2282 = vmul.f32 %v2272, %v417
    %v2283 = vmul.f32 %v2272, %v418
    %v2284 = vmul.f32 %v2272, %v419
    %v2285 = vmul.f32 %v2272, %v420
    %v2286 = vmul.f32 %v2272, %v421
    %v2287 = vmul.f32 %v2272, %v422
    %v2288 = vmul.f32 %v2272, %v423
    %v2289 = vmul.f32 %v2272, %v424
    %v2290 = vmul.f32 %v2272, %v425
    %v2291 = vmul.f32 %v2272, %v426
    %v2292 = vmul.f32 %v2272, %v427
    %v2293 = vmul.f32 %v2272, %v428
    %v2294 = vmul.f32 %v2272, %v429
    %v2295 = vmul.f32 %v2272, %v430
    %v2296 = vmul.f32 %v2272, %v431
    %v2297 = vmul.f32 %v2272, %v432
    %v2298 = vmul.f32 %v2272, %v433
    %v2299 = vmul.f32 %v2272, %v434
    %v2300 = vmul.f32 %v2272, %v435
    %v2301 = vadd.f32 %v2243, %v2273
    %v2302 = vadd.f32 %v2244, %v2274
    %v2303 = vadd.f32 %v2245, %v2275
    %v2304 = vadd.f32 %v2246, %v2276
    %v2305 = vadd.f32 %v2247, %v2277
    %v2306 = vadd.f32 %v2248, %v2278
    %v2307 = vadd.f32 %v2249, %v2279
    %v2308 = vadd.f32 %v2250, %v2280
    %v2309 = vadd.f32 %v2251, %v2281
    %v2310 = vadd.f32 %v2252, %v2282
    %v2311 = vadd.f32 %v2253, %v2283
    %v2312 = vadd.f32 %v2254, %v2284
    %v2313 = vadd.f32 %v2255, %v2285
    %v2314 = vadd.f32 %v2256, %v2286
    %v2315 = vadd.f32 %v2257, %v2287
    %v2316 = vadd.f32 %v2258, %v2288
    %v2317 = vadd.f32 %v2259, %v2289
    %v2318 = vadd.f32 %v2260, %v2290
    %v2319 = vadd.f32 %v2261, %v2291
    %v2320 = vadd.f32 %v2262, %v2292
    %v2321 = vadd.f32 %v2263, %v2293
    %v2322 = vadd.f32 %v2264, %v2294
    %v2323 = vadd.f32 %v2265, %v2295
    %v2324 = vadd.f32 %v2266, %v2296
    %v2325 = vadd.f32 %v2267, %v2297
    %v2326 = vadd.f32 %v2268, %v2298
    %v2327 = vadd.f32 %v2269, %v2299
    %v2328 = vadd.f32 %v2270, %v2300
    %s2329 = sld [smem:[#allocation8 + $0x185]]
    %v2330 = vstv %s2329
    %v2331 = vmul.f32 %v2330, %v494
    %v2332 = vmul.f32 %v2330, %v495
    %v2333 = vmul.f32 %v2330, %v496
    %v2334 = vmul.f32 %v2330, %v497
    %v2335 = vmul.f32 %v2330, %v498
    %v2336 = vmul.f32 %v2330, %v499
    %v2337 = vmul.f32 %v2330, %v500
    %v2338 = vmul.f32 %v2330, %v501
    %v2339 = vmul.f32 %v2330, %v502
    %v2340 = vmul.f32 %v2330, %v503
    %v2341 = vmul.f32 %v2330, %v504
    %v2342 = vmul.f32 %v2330, %v505
    %v2343 = vmul.f32 %v2330, %v506
    %v2344 = vmul.f32 %v2330, %v507
    %v2345 = vmul.f32 %v2330, %v508
    %v2346 = vmul.f32 %v2330, %v509
    %v2347 = vmul.f32 %v2330, %v510
    %v2348 = vmul.f32 %v2330, %v511
    %v2349 = vmul.f32 %v2330, %v512
    %v2350 = vmul.f32 %v2330, %v513
    %v2351 = vmul.f32 %v2330, %v514
    %v2352 = vmul.f32 %v2330, %v515
    %v2353 = vmul.f32 %v2330, %v516
    %v2354 = vmul.f32 %v2330, %v517
    %v2355 = vmul.f32 %v2330, %v518
    %v2356 = vmul.f32 %v2330, %v519
    %v2357 = vmul.f32 %v2330, %v520
    %v2358 = vmul.f32 %v2330, %v521
    %v2359 = vadd.f32 %v2301, %v2331
    %v2360 = vadd.f32 %v2302, %v2332
    %v2361 = vadd.f32 %v2303, %v2333
    %v2362 = vadd.f32 %v2304, %v2334
    %v2363 = vadd.f32 %v2305, %v2335
    %v2364 = vadd.f32 %v2306, %v2336
    %v2365 = vadd.f32 %v2307, %v2337
    %v2366 = vadd.f32 %v2308, %v2338
    %v2367 = vadd.f32 %v2309, %v2339
    %v2368 = vadd.f32 %v2310, %v2340
    %v2369 = vadd.f32 %v2311, %v2341
    %v2370 = vadd.f32 %v2312, %v2342
    %v2371 = vadd.f32 %v2313, %v2343
    %v2372 = vadd.f32 %v2314, %v2344
    %v2373 = vadd.f32 %v2315, %v2345
    %v2374 = vadd.f32 %v2316, %v2346
    %v2375 = vadd.f32 %v2317, %v2347
    %v2376 = vadd.f32 %v2318, %v2348
    %v2377 = vadd.f32 %v2319, %v2349
    %v2378 = vadd.f32 %v2320, %v2350
    %v2379 = vadd.f32 %v2321, %v2351
    %v2380 = vadd.f32 %v2322, %v2352
    %v2381 = vadd.f32 %v2323, %v2353
    %v2382 = vadd.f32 %v2324, %v2354
    %v2383 = vadd.f32 %v2325, %v2355
    %v2384 = vadd.f32 %v2326, %v2356
    %v2385 = vadd.f32 %v2327, %v2357
    %v2386 = vadd.f32 %v2328, %v2358
    %s2387 = sld [smem:[#allocation8 + $0x186]]
    %v2388 = vstv %s2387
    %v2389 = vmul.f32 %v2388, %v581
    %v2390 = vmul.f32 %v2388, %v582
    %v2391 = vmul.f32 %v2388, %v583
    %v2392 = vmul.f32 %v2388, %v584
    %v2393 = vmul.f32 %v2388, %v585
    %v2394 = vmul.f32 %v2388, %v586
    %v2395 = vmul.f32 %v2388, %v587
    %v2396 = vmul.f32 %v2388, %v588
    %v2397 = vmul.f32 %v2388, %v589
    %v2398 = vmul.f32 %v2388, %v590
    %v2399 = vmul.f32 %v2388, %v591
    %v2400 = vmul.f32 %v2388, %v592
    %v2401 = vmul.f32 %v2388, %v593
    %v2402 = vmul.f32 %v2388, %v594
    %v2403 = vmul.f32 %v2388, %v595
    %v2404 = vmul.f32 %v2388, %v596
    %v2405 = vmul.f32 %v2388, %v597
    %v2406 = vmul.f32 %v2388, %v598
    %v2407 = vmul.f32 %v2388, %v599
    %v2408 = vmul.f32 %v2388, %v600
    %v2409 = vmul.f32 %v2388, %v601
    %v2410 = vmul.f32 %v2388, %v602
    %v2411 = vmul.f32 %v2388, %v603
    %v2412 = vmul.f32 %v2388, %v604
    %v2413 = vmul.f32 %v2388, %v605
    %v2414 = vmul.f32 %v2388, %v606
    %v2415 = vmul.f32 %v2388, %v607
    %v2416 = vmul.f32 %v2388, %v608
    %v2417 = vadd.f32 %v2359, %v2389
    %v2418 = vadd.f32 %v2360, %v2390
    %v2419 = vadd.f32 %v2361, %v2391
    %v2420 = vadd.f32 %v2362, %v2392
    %v2421 = vadd.f32 %v2363, %v2393
    %v2422 = vadd.f32 %v2364, %v2394
    %v2423 = vadd.f32 %v2365, %v2395
    %v2424 = vadd.f32 %v2366, %v2396
    %v2425 = vadd.f32 %v2367, %v2397
    %v2426 = vadd.f32 %v2368, %v2398
    %v2427 = vadd.f32 %v2369, %v2399
    %v2428 = vadd.f32 %v2370, %v2400
    %v2429 = vadd.f32 %v2371, %v2401
    %v2430 = vadd.f32 %v2372, %v2402
    %v2431 = vadd.f32 %v2373, %v2403
    %v2432 = vadd.f32 %v2374, %v2404
    %v2433 = vadd.f32 %v2375, %v2405
    %v2434 = vadd.f32 %v2376, %v2406
    %v2435 = vadd.f32 %v2377, %v2407
    %v2436 = vadd.f32 %v2378, %v2408
    %v2437 = vadd.f32 %v2379, %v2409
    %v2438 = vadd.f32 %v2380, %v2410
    %v2439 = vadd.f32 %v2381, %v2411
    %v2440 = vadd.f32 %v2382, %v2412
    %v2441 = vadd.f32 %v2383, %v2413
    %v2442 = vadd.f32 %v2384, %v2414
    %v2443 = vadd.f32 %v2385, %v2415
    %v2444 = vadd.f32 %v2386, %v2416
    %s2445 = sld [smem:[#allocation8 + $0x187]]
    %v2446 = vstv %s2445
    %v2447 = vmul.f32 %v2446, %v667
    %v2448 = vmul.f32 %v2446, %v668
    %v2449 = vmul.f32 %v2446, %v669
    %v2450 = vmul.f32 %v2446, %v670
    %v2451 = vmul.f32 %v2446, %v671
    %v2452 = vmul.f32 %v2446, %v672
    %v2453 = vmul.f32 %v2446, %v673
    %v2454 = vmul.f32 %v2446, %v674
    %v2455 = vmul.f32 %v2446, %v675
    %v2456 = vmul.f32 %v2446, %v676
    %v2457 = vmul.f32 %v2446, %v677
    %v2458 = vmul.f32 %v2446, %v678
    %v2459 = vmul.f32 %v2446, %v679
    %v2460 = vmul.f32 %v2446, %v680
    %v2461 = vmul.f32 %v2446, %v681
    %v2462 = vmul.f32 %v2446, %v682
    %v2463 = vmul.f32 %v2446, %v683
    %v2464 = vmul.f32 %v2446, %v684
    %v2465 = vmul.f32 %v2446, %v685
    %v2466 = vmul.f32 %v2446, %v686
    %v2467 = vmul.f32 %v2446, %v687
    %v2468 = vmul.f32 %v2446, %v688
    %v2469 = vmul.f32 %v2446, %v689
    %v2470 = vmul.f32 %v2446, %v690
    %v2471 = vmul.f32 %v2446, %v691
    %v2472 = vmul.f32 %v2446, %v692
    %v2473 = vmul.f32 %v2446, %v693
    %v2474 = vmul.f32 %v2446, %v694
    %v2475 = vadd.f32 %v2417, %v2447
    %v2476 = vadd.f32 %v2418, %v2448
    %v2477 = vadd.f32 %v2419, %v2449
    %v2478 = vadd.f32 %v2420, %v2450
    %v2479 = vadd.f32 %v2421, %v2451
    %v2480 = vadd.f32 %v2422, %v2452
    %v2481 = vadd.f32 %v2423, %v2453
    %v2482 = vadd.f32 %v2424, %v2454
    %v2483 = vadd.f32 %v2425, %v2455
    %v2484 = vadd.f32 %v2426, %v2456
    %v2485 = vadd.f32 %v2427, %v2457
    %v2486 = vadd.f32 %v2428, %v2458
    %v2487 = vadd.f32 %v2429, %v2459
    %v2488 = vadd.f32 %v2430, %v2460
    %v2489 = vadd.f32 %v2431, %v2461
    %v2490 = vadd.f32 %v2432, %v2462
    %v2491 = vadd.f32 %v2433, %v2463
    %v2492 = vadd.f32 %v2434, %v2464
    %v2493 = vadd.f32 %v2435, %v2465
    %v2494 = vadd.f32 %v2436, %v2466
    %v2495 = vadd.f32 %v2437, %v2467
    %v2496 = vadd.f32 %v2438, %v2468
    %v2497 = vadd.f32 %v2439, %v2469
    %v2498 = vadd.f32 %v2440, %v2470
    %v2499 = vadd.f32 %v2441, %v2471
    %v2500 = vadd.f32 %v2442, %v2472
    %v2501 = vadd.f32 %v2443, %v2473
    %v2502 = vadd.f32 %v2444, %v2474
    %s2503 = sld [smem:[#allocation8 + $0x188]]
    %v2504 = vstv %s2503
    %v2505 = vmul.f32 %v2504, %v753
    %v2506 = vmul.f32 %v2504, %v754
    %v2507 = vmul.f32 %v2504, %v755
    %v2508 = vmul.f32 %v2504, %v756
    %v2509 = vmul.f32 %v2504, %v757
    %v2510 = vmul.f32 %v2504, %v758
    %v2511 = vmul.f32 %v2504, %v759
    %v2512 = vmul.f32 %v2504, %v760
    %v2513 = vmul.f32 %v2504, %v761
    %v2514 = vmul.f32 %v2504, %v762
    %v2515 = vmul.f32 %v2504, %v763
    %v2516 = vmul.f32 %v2504, %v764
    %v2517 = vmul.f32 %v2504, %v765
    %v2518 = vmul.f32 %v2504, %v766
    %v2519 = vmul.f32 %v2504, %v767
    %v2520 = vmul.f32 %v2504, %v768
    %v2521 = vmul.f32 %v2504, %v769
    %v2522 = vmul.f32 %v2504, %v770
    %v2523 = vmul.f32 %v2504, %v771
    %v2524 = vmul.f32 %v2504, %v772
    %v2525 = vmul.f32 %v2504, %v773
    %v2526 = vmul.f32 %v2504, %v774
    %v2527 = vmul.f32 %v2504, %v775
    %v2528 = vmul.f32 %v2504, %v776
    %v2529 = vmul.f32 %v2504, %v777
    %v2530 = vmul.f32 %v2504, %v778
    %v2531 = vmul.f32 %v2504, %v779
    %v2532 = vmul.f32 %v2504, %v780
    %v2533 = vadd.f32 %v2475, %v2505
    %v2534 = vadd.f32 %v2476, %v2506
    %v2535 = vadd.f32 %v2477, %v2507
    %v2536 = vadd.f32 %v2478, %v2508
    %v2537 = vadd.f32 %v2479, %v2509
    %v2538 = vadd.f32 %v2480, %v2510
    %v2539 = vadd.f32 %v2481, %v2511
    %v2540 = vadd.f32 %v2482, %v2512
    %v2541 = vadd.f32 %v2483, %v2513
    %v2542 = vadd.f32 %v2484, %v2514
    %v2543 = vadd.f32 %v2485, %v2515
    %v2544 = vadd.f32 %v2486, %v2516
    %v2545 = vadd.f32 %v2487, %v2517
    %v2546 = vadd.f32 %v2488, %v2518
    %v2547 = vadd.f32 %v2489, %v2519
    %v2548 = vadd.f32 %v2490, %v2520
    %v2549 = vadd.f32 %v2491, %v2521
    %v2550 = vadd.f32 %v2492, %v2522
    %v2551 = vadd.f32 %v2493, %v2523
    %v2552 = vadd.f32 %v2494, %v2524
    %v2553 = vadd.f32 %v2495, %v2525
    %v2554 = vadd.f32 %v2496, %v2526
    %v2555 = vadd.f32 %v2497, %v2527
    %v2556 = vadd.f32 %v2498, %v2528
    %v2557 = vadd.f32 %v2499, %v2529
    %v2558 = vadd.f32 %v2500, %v2530
    %v2559 = vadd.f32 %v2501, %v2531
    %v2560 = vadd.f32 %v2502, %v2532
    %v2561 = vmax.f32 %v2533, %v2537
    %v2562 = vmax.f32 %v2535, %v2539
    %v2563 = vmax.f32 %v2561, %v2541
    %v2564 = vmax.f32 %v2562, %v2543
    %v2565 = vmax.f32 %v2563, %v2545
    %v2566 = vmax.f32 %v2564, %v2547
    %v2567 = vmax.f32 %v2565, %v2549
    %v2568 = vmax.f32 %v2566, %v2551
    %v2569 = vmax.f32 %v2567, %v2553
    %v2570 = vmax.f32 %v2568, %v2555
    %v2571 = vmax.f32 %v2569, %v2557
    %v2572 = vmax.f32 %v2570, %v2559
    %v2573 = vmax.f32 %v2571, %v2572
    %v2574 = vsel %vm851, %v2534, -inf
    %v2575 = vsel %vm851, %v2536, -inf
    %v2576 = vsel %vm851, %v2538, -inf
    %v2577 = vmax.f32 %v2574, %v2576
    %v2578 = vsel %vm851, %v2540, -inf
    %v2579 = vmax.f32 %v2575, %v2578
    %v2580 = vsel %vm851, %v2542, -inf
    %v2581 = vmax.f32 %v2577, %v2580
    %v2582 = vsel %vm851, %v2544, -inf
    %v2583 = vmax.f32 %v2579, %v2582
    %v2584 = vsel %vm851, %v2546, -inf
    %v2585 = vmax.f32 %v2581, %v2584
    %v2586 = vsel %vm851, %v2548, -inf
    %v2587 = vmax.f32 %v2583, %v2586
    %v2588 = vsel %vm851, %v2550, -inf
    %v2589 = vmax.f32 %v2585, %v2588
    %v2590 = vsel %vm851, %v2552, -inf
    %v2591 = vmax.f32 %v2587, %v2590
    %v2592 = vsel %vm851, %v2554, -inf
    %v2593 = vmax.f32 %v2589, %v2592
    %v2594 = vsel %vm851, %v2556, -inf
    %v2595 = vmax.f32 %v2591, %v2594
    %v2596 = vsel %vm851, %v2558, -inf
    %v2597 = vmax.f32 %v2593, %v2596
    %v2598 = vsel %vm851, %v2560, -inf
    %v2599 = vmax.f32 %v2595, %v2598
    %v2600 = vmax.f32 %v2597, %v2599
    %v2601 = vsel %vm851, %v2600, -inf
    %v2602 = vmax.f32 %v2573, %v2601
    %v2603 = vrot.slane %v2602, 4
    %v2604 = vmax.f32 %v2602, %v2603
    %v2605 = vrot.slane %v2604, 2
    %v2606 = vmax.f32 %v2604, %v2605
    %v2607 = vrot.slane %v2606, 1
    %v2608 = vmax.f32 %v2606, %v2607
    %s2609 = sld [smem:[#allocation9 + $0x3]]
    %v2610 = vstv %s2609
    %v2611 = vmul.f32 %v2608, %v2610
    %v2612 = vadd.f32 %v2038, %v2611
    %s2613 = sld [smem:[#allocation8 + $0x200]]
    %v2614 = vstv %s2613
    %v2615 = vmul.f32 %v2614, %v63
    %v2616 = vmul.f32 %v2614, %v64
    %v2617 = vmul.f32 %v2614, %v65
    %v2618 = vmul.f32 %v2614, %v66
    %v2619 = vmul.f32 %v2614, %v67
    %v2620 = vmul.f32 %v2614, %v68
    %v2621 = vmul.f32 %v2614, %v69
    %v2622 = vmul.f32 %v2614, %v70
    %v2623 = vmul.f32 %v2614, %v71
    %v2624 = vmul.f32 %v2614, %v72
    %v2625 = vmul.f32 %v2614, %v73
    %v2626 = vmul.f32 %v2614, %v74
    %v2627 = vmul.f32 %v2614, %v75
    %v2628 = vmul.f32 %v2614, %v76
    %v2629 = vmul.f32 %v2614, %v77
    %v2630 = vmul.f32 %v2614, %v78
    %v2631 = vmul.f32 %v2614, %v79
    %v2632 = vmul.f32 %v2614, %v80
    %v2633 = vmul.f32 %v2614, %v81
    %v2634 = vmul.f32 %v2614, %v82
    %v2635 = vmul.f32 %v2614, %v83
    %v2636 = vmul.f32 %v2614, %v84
    %v2637 = vmul.f32 %v2614, %v85
    %v2638 = vmul.f32 %v2614, %v86
    %v2639 = vmul.f32 %v2614, %v87
    %v2640 = vmul.f32 %v2614, %v88
    %v2641 = vmul.f32 %v2614, %v89
    %v2642 = vmul.f32 %v2614, %v90
    %v2643 = vadd.f32 %v2615, 0.0
    %v2644 = vadd.f32 %v2616, 0.0
    %v2645 = vadd.f32 %v2617, 0.0
    %v2646 = vadd.f32 %v2618, 0.0
    %v2647 = vadd.f32 %v2619, 0.0
    %v2648 = vadd.f32 %v2620, 0.0
    %v2649 = vadd.f32 %v2621, 0.0
    %v2650 = vadd.f32 %v2622, 0.0
    %v2651 = vadd.f32 %v2623, 0.0
    %v2652 = vadd.f32 %v2624, 0.0
    %v2653 = vadd.f32 %v2625, 0.0
    %v2654 = vadd.f32 %v2626, 0.0
    %v2655 = vadd.f32 %v2627, 0.0
    %v2656 = vadd.f32 %v2628, 0.0
    %v2657 = vadd.f32 %v2629, 0.0
    %v2658 = vadd.f32 %v2630, 0.0
    %v2659 = vadd.f32 %v2631, 0.0
    %v2660 = vadd.f32 %v2632, 0.0
    %v2661 = vadd.f32 %v2633, 0.0
    %v2662 = vadd.f32 %v2634, 0.0
    %v2663 = vadd.f32 %v2635, 0.0
    %v2664 = vadd.f32 %v2636, 0.0
    %v2665 = vadd.f32 %v2637, 0.0
    %v2666 = vadd.f32 %v2638, 0.0
    %v2667 = vadd.f32 %v2639, 0.0
    %v2668 = vadd.f32 %v2640, 0.0
    %v2669 = vadd.f32 %v2641, 0.0
    %v2670 = vadd.f32 %v2642, 0.0
    %s2671 = sld [smem:[#allocation8 + $0x201]]
    %v2672 = vstv %s2671
    %v2673 = vmul.f32 %v2672, %v149
    %v2674 = vmul.f32 %v2672, %v150
    %v2675 = vmul.f32 %v2672, %v151
    %v2676 = vmul.f32 %v2672, %v152
    %v2677 = vmul.f32 %v2672, %v153
    %v2678 = vmul.f32 %v2672, %v154
    %v2679 = vmul.f32 %v2672, %v155
    %v2680 = vmul.f32 %v2672, %v156
    %v2681 = vmul.f32 %v2672, %v157
    %v2682 = vmul.f32 %v2672, %v158
    %v2683 = vmul.f32 %v2672, %v159
    %v2684 = vmul.f32 %v2672, %v160
    %v2685 = vmul.f32 %v2672, %v161
    %v2686 = vmul.f32 %v2672, %v162
    %v2687 = vmul.f32 %v2672, %v163
    %v2688 = vmul.f32 %v2672, %v164
    %v2689 = vmul.f32 %v2672, %v165
    %v2690 = vmul.f32 %v2672, %v166
    %v2691 = vmul.f32 %v2672, %v167
    %v2692 = vmul.f32 %v2672, %v168
    %v2693 = vmul.f32 %v2672, %v169
    %v2694 = vmul.f32 %v2672, %v170
    %v2695 = vmul.f32 %v2672, %v171
    %v2696 = vmul.f32 %v2672, %v172
    %v2697 = vmul.f32 %v2672, %v173
    %v2698 = vmul.f32 %v2672, %v174
    %v2699 = vmul.f32 %v2672, %v175
    %v2700 = vmul.f32 %v2672, %v176
    %v2701 = vadd.f32 %v2643, %v2673
    %v2702 = vadd.f32 %v2644, %v2674
    %v2703 = vadd.f32 %v2645, %v2675
    %v2704 = vadd.f32 %v2646, %v2676
    %v2705 = vadd.f32 %v2647, %v2677
    %v2706 = vadd.f32 %v2648, %v2678
    %v2707 = vadd.f32 %v2649, %v2679
    %v2708 = vadd.f32 %v2650, %v2680
    %v2709 = vadd.f32 %v2651, %v2681
    %v2710 = vadd.f32 %v2652, %v2682
    %v2711 = vadd.f32 %v2653, %v2683
    %v2712 = vadd.f32 %v2654, %v2684
    %v2713 = vadd.f32 %v2655, %v2685
    %v2714 = vadd.f32 %v2656, %v2686
    %v2715 = vadd.f32 %v2657, %v2687
    %v2716 = vadd.f32 %v2658, %v2688
    %v2717 = vadd.f32 %v2659, %v2689
    %v2718 = vadd.f32 %v2660, %v2690
    %v2719 = vadd.f32 %v2661, %v2691
    %v2720 = vadd.f32 %v2662, %v2692
    %v2721 = vadd.f32 %v2663, %v2693
    %v2722 = vadd.f32 %v2664, %v2694
    %v2723 = vadd.f32 %v2665, %v2695
    %v2724 = vadd.f32 %v2666, %v2696
    %v2725 = vadd.f32 %v2667, %v2697
    %v2726 = vadd.f32 %v2668, %v2698
    %v2727 = vadd.f32 %v2669, %v2699
    %v2728 = vadd.f32 %v2670, %v2700
    %s2729 = sld [smem:[#allocation8 + $0x202]]
    %v2730 = vstv %s2729
    %v2731 = vmul.f32 %v2730, %v235
    %v2732 = vmul.f32 %v2730, %v236
    %v2733 = vmul.f32 %v2730, %v237
    %v2734 = vmul.f32 %v2730, %v238
    %v2735 = vmul.f32 %v2730, %v239
    %v2736 = vmul.f32 %v2730, %v240
    %v2737 = vmul.f32 %v2730, %v241
    %v2738 = vmul.f32 %v2730, %v242
    %v2739 = vmul.f32 %v2730, %v243
    %v2740 = vmul.f32 %v2730, %v244
    %v2741 = vmul.f32 %v2730, %v245
    %v2742 = vmul.f32 %v2730, %v246
    %v2743 = vmul.f32 %v2730, %v247
    %v2744 = vmul.f32 %v2730, %v248
    %v2745 = vmul.f32 %v2730, %v249
    %v2746 = vmul.f32 %v2730, %v250
    %v2747 = vmul.f32 %v2730, %v251
    %v2748 = vmul.f32 %v2730, %v252
    %v2749 = vmul.f32 %v2730, %v253
    %v2750 = vmul.f32 %v2730, %v254
    %v2751 = vmul.f32 %v2730, %v255
    %v2752 = vmul.f32 %v2730, %v256
    %v2753 = vmul.f32 %v2730, %v257
    %v2754 = vmul.f32 %v2730, %v258
    %v2755 = vmul.f32 %v2730, %v259
    %v2756 = vmul.f32 %v2730, %v260
    %v2757 = vmul.f32 %v2730, %v261
    %v2758 = vmul.f32 %v2730, %v262
    %v2759 = vadd.f32 %v2701, %v2731
    %v2760 = vadd.f32 %v2702, %v2732
    %v2761 = vadd.f32 %v2703, %v2733
    %v2762 = vadd.f32 %v2704, %v2734
    %v2763 = vadd.f32 %v2705, %v2735
    %v2764 = vadd.f32 %v2706, %v2736
    %v2765 = vadd.f32 %v2707, %v2737
    %v2766 = vadd.f32 %v2708, %v2738
    %v2767 = vadd.f32 %v2709, %v2739
    %v2768 = vadd.f32 %v2710, %v2740
    %v2769 = vadd.f32 %v2711, %v2741
    %v2770 = vadd.f32 %v2712, %v2742
    %v2771 = vadd.f32 %v2713, %v2743
    %v2772 = vadd.f32 %v2714, %v2744
    %v2773 = vadd.f32 %v2715, %v2745
    %v2774 = vadd.f32 %v2716, %v2746
    %v2775 = vadd.f32 %v2717, %v2747
    %v2776 = vadd.f32 %v2718, %v2748
    %v2777 = vadd.f32 %v2719, %v2749
    %v2778 = vadd.f32 %v2720, %v2750
    %v2779 = vadd.f32 %v2721, %v2751
    %v2780 = vadd.f32 %v2722, %v2752
    %v2781 = vadd.f32 %v2723, %v2753
    %v2782 = vadd.f32 %v2724, %v2754
    %v2783 = vadd.f32 %v2725, %v2755
    %v2784 = vadd.f32 %v2726, %v2756
    %v2785 = vadd.f32 %v2727, %v2757
    %v2786 = vadd.f32 %v2728, %v2758
    %s2787 = sld [smem:[#allocation8 + $0x203]]
    %v2788 = vstv %s2787
    %v2789 = vmul.f32 %v2788, %v322
    %v2790 = vmul.f32 %v2788, %v323
    %v2791 = vmul.f32 %v2788, %v324
    %v2792 = vmul.f32 %v2788, %v325
    %v2793 = vmul.f32 %v2788, %v326
    %v2794 = vmul.f32 %v2788, %v327
    %v2795 = vmul.f32 %v2788, %v328
    %v2796 = vmul.f32 %v2788, %v329
    %v2797 = vmul.f32 %v2788, %v330
    %v2798 = vmul.f32 %v2788, %v331
    %v2799 = vmul.f32 %v2788, %v332
    %v2800 = vmul.f32 %v2788, %v333
    %v2801 = vmul.f32 %v2788, %v334
    %v2802 = vmul.f32 %v2788, %v335
    %v2803 = vmul.f32 %v2788, %v336
    %v2804 = vmul.f32 %v2788, %v337
    %v2805 = vmul.f32 %v2788, %v338
    %v2806 = vmul.f32 %v2788, %v339
    %v2807 = vmul.f32 %v2788, %v340
    %v2808 = vmul.f32 %v2788, %v341
    %v2809 = vmul.f32 %v2788, %v342
    %v2810 = vmul.f32 %v2788, %v343
    %v2811 = vmul.f32 %v2788, %v344
    %v2812 = vmul.f32 %v2788, %v345
    %v2813 = vmul.f32 %v2788, %v346
    %v2814 = vmul.f32 %v2788, %v347
    %v2815 = vmul.f32 %v2788, %v348
    %v2816 = vmul.f32 %v2788, %v349
    %v2817 = vadd.f32 %v2759, %v2789
    %v2818 = vadd.f32 %v2760, %v2790
    %v2819 = vadd.f32 %v2761, %v2791
    %v2820 = vadd.f32 %v2762, %v2792
    %v2821 = vadd.f32 %v2763, %v2793
    %v2822 = vadd.f32 %v2764, %v2794
    %v2823 = vadd.f32 %v2765, %v2795
    %v2824 = vadd.f32 %v2766, %v2796
    %v2825 = vadd.f32 %v2767, %v2797
    %v2826 = vadd.f32 %v2768, %v2798
    %v2827 = vadd.f32 %v2769, %v2799
    %v2828 = vadd.f32 %v2770, %v2800
    %v2829 = vadd.f32 %v2771, %v2801
    %v2830 = vadd.f32 %v2772, %v2802
    %v2831 = vadd.f32 %v2773, %v2803
    %v2832 = vadd.f32 %v2774, %v2804
    %v2833 = vadd.f32 %v2775, %v2805
    %v2834 = vadd.f32 %v2776, %v2806
    %v2835 = vadd.f32 %v2777, %v2807
    %v2836 = vadd.f32 %v2778, %v2808
    %v2837 = vadd.f32 %v2779, %v2809
    %v2838 = vadd.f32 %v2780, %v2810
    %v2839 = vadd.f32 %v2781, %v2811
    %v2840 = vadd.f32 %v2782, %v2812
    %v2841 = vadd.f32 %v2783, %v2813
    %v2842 = vadd.f32 %v2784, %v2814
    %v2843 = vadd.f32 %v2785, %v2815
    %v2844 = vadd.f32 %v2786, %v2816
    %s2845 = sld [smem:[#allocation8 + $0x204]]
    %v2846 = vstv %s2845
    %v2847 = vmul.f32 %v2846, %v408
    %v2848 = vmul.f32 %v2846, %v409
    %v2849 = vmul.f32 %v2846, %v410
    %v2850 = vmul.f32 %v2846, %v411
    %v2851 = vmul.f32 %v2846, %v412
    %v2852 = vmul.f32 %v2846, %v413
    %v2853 = vmul.f32 %v2846, %v414
    %v2854 = vmul.f32 %v2846, %v415
    %v2855 = vmul.f32 %v2846, %v416
    %v2856 = vmul.f32 %v2846, %v417
    %v2857 = vmul.f32 %v2846, %v418
    %v2858 = vmul.f32 %v2846, %v419
    %v2859 = vmul.f32 %v2846, %v420
    %v2860 = vmul.f32 %v2846, %v421
    %v2861 = vmul.f32 %v2846, %v422
    %v2862 = vmul.f32 %v2846, %v423
    %v2863 = vmul.f32 %v2846, %v424
    %v2864 = vmul.f32 %v2846, %v425
    %v2865 = vmul.f32 %v2846, %v426
    %v2866 = vmul.f32 %v2846, %v427
    %v2867 = vmul.f32 %v2846, %v428
    %v2868 = vmul.f32 %v2846, %v429
    %v2869 = vmul.f32 %v2846, %v430
    %v2870 = vmul.f32 %v2846, %v431
    %v2871 = vmul.f32 %v2846, %v432
    %v2872 = vmul.f32 %v2846, %v433
    %v2873 = vmul.f32 %v2846, %v434
    %v2874 = vmul.f32 %v2846, %v435
    %v2875 = vadd.f32 %v2817, %v2847
    %v2876 = vadd.f32 %v2818, %v2848
    %v2877 = vadd.f32 %v2819, %v2849
    %v2878 = vadd.f32 %v2820, %v2850
    %v2879 = vadd.f32 %v2821, %v2851
    %v2880 = vadd.f32 %v2822, %v2852
    %v2881 = vadd.f32 %v2823, %v2853
    %v2882 = vadd.f32 %v2824, %v2854
    %v2883 = vadd.f32 %v2825, %v2855
    %v2884 = vadd.f32 %v2826, %v2856
    %v2885 = vadd.f32 %v2827, %v2857
    %v2886 = vadd.f32 %v2828, %v2858
    %v2887 = vadd.f32 %v2829, %v2859
    %v2888 = vadd.f32 %v2830, %v2860
    %v2889 = vadd.f32 %v2831, %v2861
    %v2890 = vadd.f32 %v2832, %v2862
    %v2891 = vadd.f32 %v2833, %v2863
    %v2892 = vadd.f32 %v2834, %v2864
    %v2893 = vadd.f32 %v2835, %v2865
    %v2894 = vadd.f32 %v2836, %v2866
    %v2895 = vadd.f32 %v2837, %v2867
    %v2896 = vadd.f32 %v2838, %v2868
    %v2897 = vadd.f32 %v2839, %v2869
    %v2898 = vadd.f32 %v2840, %v2870
    %v2899 = vadd.f32 %v2841, %v2871
    %v2900 = vadd.f32 %v2842, %v2872
    %v2901 = vadd.f32 %v2843, %v2873
    %v2902 = vadd.f32 %v2844, %v2874
    %s2903 = sld [smem:[#allocation8 + $0x205]]
    %v2904 = vstv %s2903
    %v2905 = vmul.f32 %v2904, %v494
    %v2906 = vmul.f32 %v2904, %v495
    %v2907 = vmul.f32 %v2904, %v496
    %v2908 = vmul.f32 %v2904, %v497
    %v2909 = vmul.f32 %v2904, %v498
    %v2910 = vmul.f32 %v2904, %v499
    %v2911 = vmul.f32 %v2904, %v500
    %v2912 = vmul.f32 %v2904, %v501
    %v2913 = vmul.f32 %v2904, %v502
    %v2914 = vmul.f32 %v2904, %v503
    %v2915 = vmul.f32 %v2904, %v504
    %v2916 = vmul.f32 %v2904, %v505
    %v2917 = vmul.f32 %v2904, %v506
    %v2918 = vmul.f32 %v2904, %v507
    %v2919 = vmul.f32 %v2904, %v508
    %v2920 = vmul.f32 %v2904, %v509
    %v2921 = vmul.f32 %v2904, %v510
    %v2922 = vmul.f32 %v2904, %v511
    %v2923 = vmul.f32 %v2904, %v512
    %v2924 = vmul.f32 %v2904, %v513
    %v2925 = vmul.f32 %v2904, %v514
    %v2926 = vmul.f32 %v2904, %v515
    %v2927 = vmul.f32 %v2904, %v516
    %v2928 = vmul.f32 %v2904, %v517
    %v2929 = vmul.f32 %v2904, %v518
    %v2930 = vmul.f32 %v2904, %v519
    %v2931 = vmul.f32 %v2904, %v520
    %v2932 = vmul.f32 %v2904, %v521
    %v2933 = vadd.f32 %v2875, %v2905
    %v2934 = vadd.f32 %v2876, %v2906
    %v2935 = vadd.f32 %v2877, %v2907
    %v2936 = vadd.f32 %v2878, %v2908
    %v2937 = vadd.f32 %v2879, %v2909
    %v2938 = vadd.f32 %v2880, %v2910
    %v2939 = vadd.f32 %v2881, %v2911
    %v2940 = vadd.f32 %v2882, %v2912
    %v2941 = vadd.f32 %v2883, %v2913
    %v2942 = vadd.f32 %v2884, %v2914
    %v2943 = vadd.f32 %v2885, %v2915
    %v2944 = vadd.f32 %v2886, %v2916
    %v2945 = vadd.f32 %v2887, %v2917
    %v2946 = vadd.f32 %v2888, %v2918
    %v2947 = vadd.f32 %v2889, %v2919
    %v2948 = vadd.f32 %v2890, %v2920
    %v2949 = vadd.f32 %v2891, %v2921
    %v2950 = vadd.f32 %v2892, %v2922
    %v2951 = vadd.f32 %v2893, %v2923
    %v2952 = vadd.f32 %v2894, %v2924
    %v2953 = vadd.f32 %v2895, %v2925
    %v2954 = vadd.f32 %v2896, %v2926
    %v2955 = vadd.f32 %v2897, %v2927
    %v2956 = vadd.f32 %v2898, %v2928
    %v2957 = vadd.f32 %v2899, %v2929
    %v2958 = vadd.f32 %v2900, %v2930
    %v2959 = vadd.f32 %v2901, %v2931
    %v2960 = vadd.f32 %v2902, %v2932
    %s2961 = sld [smem:[#allocation8 + $0x206]]
    %v2962 = vstv %s2961
    %v2963 = vmul.f32 %v2962, %v581
    %v2964 = vmul.f32 %v2962, %v582
    %v2965 = vmul.f32 %v2962, %v583
    %v2966 = vmul.f32 %v2962, %v584
    %v2967 = vmul.f32 %v2962, %v585
    %v2968 = vmul.f32 %v2962, %v586
    %v2969 = vmul.f32 %v2962, %v587
    %v2970 = vmul.f32 %v2962, %v588
    %v2971 = vmul.f32 %v2962, %v589
    %v2972 = vmul.f32 %v2962, %v590
    %v2973 = vmul.f32 %v2962, %v591
    %v2974 = vmul.f32 %v2962, %v592
    %v2975 = vmul.f32 %v2962, %v593
    %v2976 = vmul.f32 %v2962, %v594
    %v2977 = vmul.f32 %v2962, %v595
    %v2978 = vmul.f32 %v2962, %v596
    %v2979 = vmul.f32 %v2962, %v597
    %v2980 = vmul.f32 %v2962, %v598
    %v2981 = vmul.f32 %v2962, %v599
    %v2982 = vmul.f32 %v2962, %v600
    %v2983 = vmul.f32 %v2962, %v601
    %v2984 = vmul.f32 %v2962, %v602
    %v2985 = vmul.f32 %v2962, %v603
    %v2986 = vmul.f32 %v2962, %v604
    %v2987 = vmul.f32 %v2962, %v605
    %v2988 = vmul.f32 %v2962, %v606
    %v2989 = vmul.f32 %v2962, %v607
    %v2990 = vmul.f32 %v2962, %v608
    %v2991 = vadd.f32 %v2933, %v2963
    %v2992 = vadd.f32 %v2934, %v2964
    %v2993 = vadd.f32 %v2935, %v2965
    %v2994 = vadd.f32 %v2936, %v2966
    %v2995 = vadd.f32 %v2937, %v2967
    %v2996 = vadd.f32 %v2938, %v2968
    %v2997 = vadd.f32 %v2939, %v2969
    %v2998 = vadd.f32 %v2940, %v2970
    %v2999 = vadd.f32 %v2941, %v2971
    %v3000 = vadd.f32 %v2942, %v2972
    %v3001 = vadd.f32 %v2943, %v2973
    %v3002 = vadd.f32 %v2944, %v2974
    %v3003 = vadd.f32 %v2945, %v2975
    %v3004 = vadd.f32 %v2946, %v2976
    %v3005 = vadd.f32 %v2947, %v2977
    %v3006 = vadd.f32 %v2948, %v2978
    %v3007 = vadd.f32 %v2949, %v2979
    %v3008 = vadd.f32 %v2950, %v2980
    %v3009 = vadd.f32 %v2951, %v2981
    %v3010 = vadd.f32 %v2952, %v2982
    %v3011 = vadd.f32 %v2953, %v2983
    %v3012 = vadd.f32 %v2954, %v2984
    %v3013 = vadd.f32 %v2955, %v2985
    %v3014 = vadd.f32 %v2956, %v2986
    %v3015 = vadd.f32 %v2957, %v2987
    %v3016 = vadd.f32 %v2958, %v2988
    %v3017 = vadd.f32 %v2959, %v2989
    %v3018 = vadd.f32 %v2960, %v2990
    %s3019 = sld [smem:[#allocation8 + $0x207]]
    %v3020 = vstv %s3019
    %v3021 = vmul.f32 %v3020, %v667
    %v3022 = vmul.f32 %v3020, %v668
    %v3023 = vmul.f32 %v3020, %v669
    %v3024 = vmul.f32 %v3020, %v670
    %v3025 = vmul.f32 %v3020, %v671
    %v3026 = vmul.f32 %v3020, %v672
    %v3027 = vmul.f32 %v3020, %v673
    %v3028 = vmul.f32 %v3020, %v674
    %v3029 = vmul.f32 %v3020, %v675
    %v3030 = vmul.f32 %v3020, %v676
    %v3031 = vmul.f32 %v3020, %v677
    %v3032 = vmul.f32 %v3020, %v678
    %v3033 = vmul.f32 %v3020, %v679
    %v3034 = vmul.f32 %v3020, %v680
    %v3035 = vmul.f32 %v3020, %v681
    %v3036 = vmul.f32 %v3020, %v682
    %v3037 = vmul.f32 %v3020, %v683
    %v3038 = vmul.f32 %v3020, %v684
    %v3039 = vmul.f32 %v3020, %v685
    %v3040 = vmul.f32 %v3020, %v686
    %v3041 = vmul.f32 %v3020, %v687
    %v3042 = vmul.f32 %v3020, %v688
    %v3043 = vmul.f32 %v3020, %v689
    %v3044 = vmul.f32 %v3020, %v690
    %v3045 = vmul.f32 %v3020, %v691
    %v3046 = vmul.f32 %v3020, %v692
    %v3047 = vmul.f32 %v3020, %v693
    %v3048 = vmul.f32 %v3020, %v694
    %v3049 = vadd.f32 %v2991, %v3021
    %v3050 = vadd.f32 %v2992, %v3022
    %v3051 = vadd.f32 %v2993, %v3023
    %v3052 = vadd.f32 %v2994, %v3024
    %v3053 = vadd.f32 %v2995, %v3025
    %v3054 = vadd.f32 %v2996, %v3026
    %v3055 = vadd.f32 %v2997, %v3027
    %v3056 = vadd.f32 %v2998, %v3028
    %v3057 = vadd.f32 %v2999, %v3029
    %v3058 = vadd.f32 %v3000, %v3030
    %v3059 = vadd.f32 %v3001, %v3031
    %v3060 = vadd.f32 %v3002, %v3032
    %v3061 = vadd.f32 %v3003, %v3033
    %v3062 = vadd.f32 %v3004, %v3034
    %v3063 = vadd.f32 %v3005, %v3035
    %v3064 = vadd.f32 %v3006, %v3036
    %v3065 = vadd.f32 %v3007, %v3037
    %v3066 = vadd.f32 %v3008, %v3038
    %v3067 = vadd.f32 %v3009, %v3039
    %v3068 = vadd.f32 %v3010, %v3040
    %v3069 = vadd.f32 %v3011, %v3041
    %v3070 = vadd.f32 %v3012, %v3042
    %v3071 = vadd.f32 %v3013, %v3043
    %v3072 = vadd.f32 %v3014, %v3044
    %v3073 = vadd.f32 %v3015, %v3045
    %v3074 = vadd.f32 %v3016, %v3046
    %v3075 = vadd.f32 %v3017, %v3047
    %v3076 = vadd.f32 %v3018, %v3048
    %s3077 = sld [smem:[#allocation8 + $0x208]]
    %v3078 = vstv %s3077
    %v3079 = vmul.f32 %v3078, %v753
    %v3080 = vmul.f32 %v3078, %v754
    %v3081 = vmul.f32 %v3078, %v755
    %v3082 = vmul.f32 %v3078, %v756
    %v3083 = vmul.f32 %v3078, %v757
    %v3084 = vmul.f32 %v3078, %v758
    %v3085 = vmul.f32 %v3078, %v759
    %v3086 = vmul.f32 %v3078, %v760
    %v3087 = vmul.f32 %v3078, %v761
    %v3088 = vmul.f32 %v3078, %v762
    %v3089 = vmul.f32 %v3078, %v763
    %v3090 = vmul.f32 %v3078, %v764
    %v3091 = vmul.f32 %v3078, %v765
    %v3092 = vmul.f32 %v3078, %v766
    %v3093 = vmul.f32 %v3078, %v767
    %v3094 = vmul.f32 %v3078, %v768
    %v3095 = vmul.f32 %v3078, %v769
    %v3096 = vmul.f32 %v3078, %v770
    %v3097 = vmul.f32 %v3078, %v771
    %v3098 = vmul.f32 %v3078, %v772
    %v3099 = vmul.f32 %v3078, %v773
    %v3100 = vmul.f32 %v3078, %v774
    %v3101 = vmul.f32 %v3078, %v775
    %v3102 = vmul.f32 %v3078, %v776
    %v3103 = vmul.f32 %v3078, %v777
    %v3104 = vmul.f32 %v3078, %v778
    %v3105 = vmul.f32 %v3078, %v779
    %v3106 = vmul.f32 %v3078, %v780
    %v3107 = vadd.f32 %v3049, %v3079
    %v3108 = vadd.f32 %v3050, %v3080
    %v3109 = vadd.f32 %v3051, %v3081
    %v3110 = vadd.f32 %v3052, %v3082
    %v3111 = vadd.f32 %v3053, %v3083
    %v3112 = vadd.f32 %v3054, %v3084
    %v3113 = vadd.f32 %v3055, %v3085
    %v3114 = vadd.f32 %v3056, %v3086
    %v3115 = vadd.f32 %v3057, %v3087
    %v3116 = vadd.f32 %v3058, %v3088
    %v3117 = vadd.f32 %v3059, %v3089
    %v3118 = vadd.f32 %v3060, %v3090
    %v3119 = vadd.f32 %v3061, %v3091
    %v3120 = vadd.f32 %v3062, %v3092
    %v3121 = vadd.f32 %v3063, %v3093
    %v3122 = vadd.f32 %v3064, %v3094
    %v3123 = vadd.f32 %v3065, %v3095
    %v3124 = vadd.f32 %v3066, %v3096
    %v3125 = vadd.f32 %v3067, %v3097
    %v3126 = vadd.f32 %v3068, %v3098
    %v3127 = vadd.f32 %v3069, %v3099
    %v3128 = vadd.f32 %v3070, %v3100
    %v3129 = vadd.f32 %v3071, %v3101
    %v3130 = vadd.f32 %v3072, %v3102
    %v3131 = vadd.f32 %v3073, %v3103
    %v3132 = vadd.f32 %v3074, %v3104
    %v3133 = vadd.f32 %v3075, %v3105
    %v3134 = vadd.f32 %v3076, %v3106
    %v3135 = vmax.f32 %v3107, %v3111
    %v3136 = vmax.f32 %v3109, %v3113
    %v3137 = vmax.f32 %v3135, %v3115
    %v3138 = vmax.f32 %v3136, %v3117
    %v3139 = vmax.f32 %v3137, %v3119
    %v3140 = vmax.f32 %v3138, %v3121
    %v3141 = vmax.f32 %v3139, %v3123
    %v3142 = vmax.f32 %v3140, %v3125
    %v3143 = vmax.f32 %v3141, %v3127
    %v3144 = vmax.f32 %v3142, %v3129
    %v3145 = vmax.f32 %v3143, %v3131
    %v3146 = vmax.f32 %v3144, %v3133
    %v3147 = vmax.f32 %v3145, %v3146
    %v3148 = vsel %vm851, %v3108, -inf
    %v3149 = vsel %vm851, %v3110, -inf
    %v3150 = vsel %vm851, %v3112, -inf
    %v3151 = vmax.f32 %v3148, %v3150
    %v3152 = vsel %vm851, %v3114, -inf
    %v3153 = vmax.f32 %v3149, %v3152
    %v3154 = vsel %vm851, %v3116, -inf
    %v3155 = vmax.f32 %v3151, %v3154
    %v3156 = vsel %vm851, %v3118, -inf
    %v3157 = vmax.f32 %v3153, %v3156
    %v3158 = vsel %vm851, %v3120, -inf
    %v3159 = vmax.f32 %v3155, %v3158
    %v3160 = vsel %vm851, %v3122, -inf
    %v3161 = vmax.f32 %v3157, %v3160
    %v3162 = vsel %vm851, %v3124, -inf
    %v3163 = vmax.f32 %v3159, %v3162
    %v3164 = vsel %vm851, %v3126, -inf
    %v3165 = vmax.f32 %v3161, %v3164
    %v3166 = vsel %vm851, %v3128, -inf
    %v3167 = vmax.f32 %v3163, %v3166
    %v3168 = vsel %vm851, %v3130, -inf
    %v3169 = vmax.f32 %v3165, %v3168
    %v3170 = vsel %vm851, %v3132, -inf
    %v3171 = vmax.f32 %v3167, %v3170
    %v3172 = vsel %vm851, %v3134, -inf
    %v3173 = vmax.f32 %v3169, %v3172
    %v3174 = vmax.f32 %v3171, %v3173
    %v3175 = vsel %vm851, %v3174, -inf
    %v3176 = vmax.f32 %v3147, %v3175
    %v3177 = vrot.slane %v3176, 4
    %v3178 = vmax.f32 %v3176, %v3177
    %v3179 = vrot.slane %v3178, 2
    %v3180 = vmax.f32 %v3178, %v3179
    %v3181 = vrot.slane %v3180, 1
    %v3182 = vmax.f32 %v3180, %v3181
    %s3183 = sld [smem:[#allocation9 + $0x4]]
    %v3184 = vstv %s3183
    %v3185 = vmul.f32 %v3182, %v3184
    %v3186 = vadd.f32 %v2612, %v3185
    %s3187 = sld [smem:[#allocation8 + $0x280]]
    %v3188 = vstv %s3187
    %v3189 = vmul.f32 %v3188, %v63
    %v3190 = vmul.f32 %v3188, %v64
    %v3191 = vmul.f32 %v3188, %v65
    %v3192 = vmul.f32 %v3188, %v66
    %v3193 = vmul.f32 %v3188, %v67
    %v3194 = vmul.f32 %v3188, %v68
    %v3195 = vmul.f32 %v3188, %v69
    %v3196 = vmul.f32 %v3188, %v70
    %v3197 = vmul.f32 %v3188, %v71
    %v3198 = vmul.f32 %v3188, %v72
    %v3199 = vmul.f32 %v3188, %v73
    %v3200 = vmul.f32 %v3188, %v74
    %v3201 = vmul.f32 %v3188, %v75
    %v3202 = vmul.f32 %v3188, %v76
    %v3203 = vmul.f32 %v3188, %v77
    %v3204 = vmul.f32 %v3188, %v78
    %v3205 = vmul.f32 %v3188, %v79
    %v3206 = vmul.f32 %v3188, %v80
    %v3207 = vmul.f32 %v3188, %v81
    %v3208 = vmul.f32 %v3188, %v82
    %v3209 = vmul.f32 %v3188, %v83
    %v3210 = vmul.f32 %v3188, %v84
    %v3211 = vmul.f32 %v3188, %v85
    %v3212 = vmul.f32 %v3188, %v86
    %v3213 = vmul.f32 %v3188, %v87
    %v3214 = vmul.f32 %v3188, %v88
    %v3215 = vmul.f32 %v3188, %v89
    %v3216 = vmul.f32 %v3188, %v90
    %v3217 = vadd.f32 %v3189, 0.0
    %v3218 = vadd.f32 %v3190, 0.0
    %v3219 = vadd.f32 %v3191, 0.0
    %v3220 = vadd.f32 %v3192, 0.0
    %v3221 = vadd.f32 %v3193, 0.0
    %v3222 = vadd.f32 %v3194, 0.0
    %v3223 = vadd.f32 %v3195, 0.0
    %v3224 = vadd.f32 %v3196, 0.0
    %v3225 = vadd.f32 %v3197, 0.0
    %v3226 = vadd.f32 %v3198, 0.0
    %v3227 = vadd.f32 %v3199, 0.0
    %v3228 = vadd.f32 %v3200, 0.0
    %v3229 = vadd.f32 %v3201, 0.0
    %v3230 = vadd.f32 %v3202, 0.0
    %v3231 = vadd.f32 %v3203, 0.0
    %v3232 = vadd.f32 %v3204, 0.0
    %v3233 = vadd.f32 %v3205, 0.0
    %v3234 = vadd.f32 %v3206, 0.0
    %v3235 = vadd.f32 %v3207, 0.0
    %v3236 = vadd.f32 %v3208, 0.0
    %v3237 = vadd.f32 %v3209, 0.0
    %v3238 = vadd.f32 %v3210, 0.0
    %v3239 = vadd.f32 %v3211, 0.0
    %v3240 = vadd.f32 %v3212, 0.0
    %v3241 = vadd.f32 %v3213, 0.0
    %v3242 = vadd.f32 %v3214, 0.0
    %v3243 = vadd.f32 %v3215, 0.0
    %v3244 = vadd.f32 %v3216, 0.0
    %s3245 = sld [smem:[#allocation8 + $0x281]]
    %v3246 = vstv %s3245
    %v3247 = vmul.f32 %v3246, %v149
    %v3248 = vmul.f32 %v3246, %v150
    %v3249 = vmul.f32 %v3246, %v151
    %v3250 = vmul.f32 %v3246, %v152
    %v3251 = vmul.f32 %v3246, %v153
    %v3252 = vmul.f32 %v3246, %v154
    %v3253 = vmul.f32 %v3246, %v155
    %v3254 = vmul.f32 %v3246, %v156
    %v3255 = vmul.f32 %v3246, %v157
    %v3256 = vmul.f32 %v3246, %v158
    %v3257 = vmul.f32 %v3246, %v159
    %v3258 = vmul.f32 %v3246, %v160
    %v3259 = vmul.f32 %v3246, %v161
    %v3260 = vmul.f32 %v3246, %v162
    %v3261 = vmul.f32 %v3246, %v163
    %v3262 = vmul.f32 %v3246, %v164
    %v3263 = vmul.f32 %v3246, %v165
    %v3264 = vmul.f32 %v3246, %v166
    %v3265 = vmul.f32 %v3246, %v167
    %v3266 = vmul.f32 %v3246, %v168
    %v3267 = vmul.f32 %v3246, %v169
    %v3268 = vmul.f32 %v3246, %v170
    %v3269 = vmul.f32 %v3246, %v171
    %v3270 = vmul.f32 %v3246, %v172
    %v3271 = vmul.f32 %v3246, %v173
    %v3272 = vmul.f32 %v3246, %v174
    %v3273 = vmul.f32 %v3246, %v175
    %v3274 = vmul.f32 %v3246, %v176
    %v3275 = vadd.f32 %v3217, %v3247
    %v3276 = vadd.f32 %v3218, %v3248
    %v3277 = vadd.f32 %v3219, %v3249
    %v3278 = vadd.f32 %v3220, %v3250
    %v3279 = vadd.f32 %v3221, %v3251
    %v3280 = vadd.f32 %v3222, %v3252
    %v3281 = vadd.f32 %v3223, %v3253
    %v3282 = vadd.f32 %v3224, %v3254
    %v3283 = vadd.f32 %v3225, %v3255
    %v3284 = vadd.f32 %v3226, %v3256
    %v3285 = vadd.f32 %v3227, %v3257
    %v3286 = vadd.f32 %v3228, %v3258
    %v3287 = vadd.f32 %v3229, %v3259
    %v3288 = vadd.f32 %v3230, %v3260
    %v3289 = vadd.f32 %v3231, %v3261
    %v3290 = vadd.f32 %v3232, %v3262
    %v3291 = vadd.f32 %v3233, %v3263
    %v3292 = vadd.f32 %v3234, %v3264
    %v3293 = vadd.f32 %v3235, %v3265
    %v3294 = vadd.f32 %v3236, %v3266
    %v3295 = vadd.f32 %v3237, %v3267
    %v3296 = vadd.f32 %v3238, %v3268
    %v3297 = vadd.f32 %v3239, %v3269
    %v3298 = vadd.f32 %v3240, %v3270
    %v3299 = vadd.f32 %v3241, %v3271
    %v3300 = vadd.f32 %v3242, %v3272
    %v3301 = vadd.f32 %v3243, %v3273
    %v3302 = vadd.f32 %v3244, %v3274
    %s3303 = sld [smem:[#allocation8 + $0x282]]
    %v3304 = vstv %s3303
    %v3305 = vmul.f32 %v3304, %v235
    %v3306 = vmul.f32 %v3304, %v236
    %v3307 = vmul.f32 %v3304, %v237
    %v3308 = vmul.f32 %v3304, %v238
    %v3309 = vmul.f32 %v3304, %v239
    %v3310 = vmul.f32 %v3304, %v240
    %v3311 = vmul.f32 %v3304, %v241
    %v3312 = vmul.f32 %v3304, %v242
    %v3313 = vmul.f32 %v3304, %v243
    %v3314 = vmul.f32 %v3304, %v244
    %v3315 = vmul.f32 %v3304, %v245
    %v3316 = vmul.f32 %v3304, %v246
    %v3317 = vmul.f32 %v3304, %v247
    %v3318 = vmul.f32 %v3304, %v248
    %v3319 = vmul.f32 %v3304, %v249
    %v3320 = vmul.f32 %v3304, %v250
    %v3321 = vmul.f32 %v3304, %v251
    %v3322 = vmul.f32 %v3304, %v252
    %v3323 = vmul.f32 %v3304, %v253
    %v3324 = vmul.f32 %v3304, %v254
    %v3325 = vmul.f32 %v3304, %v255
    %v3326 = vmul.f32 %v3304, %v256
    %v3327 = vmul.f32 %v3304, %v257
    %v3328 = vmul.f32 %v3304, %v258
    %v3329 = vmul.f32 %v3304, %v259
    %v3330 = vmul.f32 %v3304, %v260
    %v3331 = vmul.f32 %v3304, %v261
    %v3332 = vmul.f32 %v3304, %v262
    %v3333 = vadd.f32 %v3275, %v3305
    %v3334 = vadd.f32 %v3276, %v3306
    %v3335 = vadd.f32 %v3277, %v3307
    %v3336 = vadd.f32 %v3278, %v3308
    %v3337 = vadd.f32 %v3279, %v3309
    %v3338 = vadd.f32 %v3280, %v3310
    %v3339 = vadd.f32 %v3281, %v3311
    %v3340 = vadd.f32 %v3282, %v3312
    %v3341 = vadd.f32 %v3283, %v3313
    %v3342 = vadd.f32 %v3284, %v3314
    %v3343 = vadd.f32 %v3285, %v3315
    %v3344 = vadd.f32 %v3286, %v3316
    %v3345 = vadd.f32 %v3287, %v3317
    %v3346 = vadd.f32 %v3288, %v3318
    %v3347 = vadd.f32 %v3289, %v3319
    %v3348 = vadd.f32 %v3290, %v3320
    %v3349 = vadd.f32 %v3291, %v3321
    %v3350 = vadd.f32 %v3292, %v3322
    %v3351 = vadd.f32 %v3293, %v3323
    %v3352 = vadd.f32 %v3294, %v3324
    %v3353 = vadd.f32 %v3295, %v3325
    %v3354 = vadd.f32 %v3296, %v3326
    %v3355 = vadd.f32 %v3297, %v3327
    %v3356 = vadd.f32 %v3298, %v3328
    %v3357 = vadd.f32 %v3299, %v3329
    %v3358 = vadd.f32 %v3300, %v3330
    %v3359 = vadd.f32 %v3301, %v3331
    %v3360 = vadd.f32 %v3302, %v3332
    %s3361 = sld [smem:[#allocation8 + $0x283]]
    %v3362 = vstv %s3361
    %v3363 = vmul.f32 %v3362, %v322
    %v3364 = vmul.f32 %v3362, %v323
    %v3365 = vmul.f32 %v3362, %v324
    %v3366 = vmul.f32 %v3362, %v325
    %v3367 = vmul.f32 %v3362, %v326
    %v3368 = vmul.f32 %v3362, %v327
    %v3369 = vmul.f32 %v3362, %v328
    %v3370 = vmul.f32 %v3362, %v329
    %v3371 = vmul.f32 %v3362, %v330
    %v3372 = vmul.f32 %v3362, %v331
    %v3373 = vmul.f32 %v3362, %v332
    %v3374 = vmul.f32 %v3362, %v333
    %v3375 = vmul.f32 %v3362, %v334
    %v3376 = vmul.f32 %v3362, %v335
    %v3377 = vmul.f32 %v3362, %v336
    %v3378 = vmul.f32 %v3362, %v337
    %v3379 = vmul.f32 %v3362, %v338
    %v3380 = vmul.f32 %v3362, %v339
    %v3381 = vmul.f32 %v3362, %v340
    %v3382 = vmul.f32 %v3362, %v341
    %v3383 = vmul.f32 %v3362, %v342
    %v3384 = vmul.f32 %v3362, %v343
    %v3385 = vmul.f32 %v3362, %v344
    %v3386 = vmul.f32 %v3362, %v345
    %v3387 = vmul.f32 %v3362, %v346
    %v3388 = vmul.f32 %v3362, %v347
    %v3389 = vmul.f32 %v3362, %v348
    %v3390 = vmul.f32 %v3362, %v349
    %v3391 = vadd.f32 %v3333, %v3363
    %v3392 = vadd.f32 %v3334, %v3364
    %v3393 = vadd.f32 %v3335, %v3365
    %v3394 = vadd.f32 %v3336, %v3366
    %v3395 = vadd.f32 %v3337, %v3367
    %v3396 = vadd.f32 %v3338, %v3368
    %v3397 = vadd.f32 %v3339, %v3369
    %v3398 = vadd.f32 %v3340, %v3370
    %v3399 = vadd.f32 %v3341, %v3371
    %v3400 = vadd.f32 %v3342, %v3372
    %v3401 = vadd.f32 %v3343, %v3373
    %v3402 = vadd.f32 %v3344, %v3374
    %v3403 = vadd.f32 %v3345, %v3375
    %v3404 = vadd.f32 %v3346, %v3376
    %v3405 = vadd.f32 %v3347, %v3377
    %v3406 = vadd.f32 %v3348, %v3378
    %v3407 = vadd.f32 %v3349, %v3379
    %v3408 = vadd.f32 %v3350, %v3380
    %v3409 = vadd.f32 %v3351, %v3381
    %v3410 = vadd.f32 %v3352, %v3382
    %v3411 = vadd.f32 %v3353, %v3383
    %v3412 = vadd.f32 %v3354, %v3384
    %v3413 = vadd.f32 %v3355, %v3385
    %v3414 = vadd.f32 %v3356, %v3386
    %v3415 = vadd.f32 %v3357, %v3387
    %v3416 = vadd.f32 %v3358, %v3388
    %v3417 = vadd.f32 %v3359, %v3389
    %v3418 = vadd.f32 %v3360, %v3390
    %s3419 = sld [smem:[#allocation8 + $0x284]]
    %v3420 = vstv %s3419
    %v3421 = vmul.f32 %v3420, %v408
    %v3422 = vmul.f32 %v3420, %v409
    %v3423 = vmul.f32 %v3420, %v410
    %v3424 = vmul.f32 %v3420, %v411
    %v3425 = vmul.f32 %v3420, %v412
    %v3426 = vmul.f32 %v3420, %v413
    %v3427 = vmul.f32 %v3420, %v414
    %v3428 = vmul.f32 %v3420, %v415
    %v3429 = vmul.f32 %v3420, %v416
    %v3430 = vmul.f32 %v3420, %v417
    %v3431 = vmul.f32 %v3420, %v418
    %v3432 = vmul.f32 %v3420, %v419
    %v3433 = vmul.f32 %v3420, %v420
    %v3434 = vmul.f32 %v3420, %v421
    %v3435 = vmul.f32 %v3420, %v422
    %v3436 = vmul.f32 %v3420, %v423
    %v3437 = vmul.f32 %v3420, %v424
    %v3438 = vmul.f32 %v3420, %v425
    %v3439 = vmul.f32 %v3420, %v426
    %v3440 = vmul.f32 %v3420, %v427
    %v3441 = vmul.f32 %v3420, %v428
    %v3442 = vmul.f32 %v3420, %v429
    %v3443 = vmul.f32 %v3420, %v430
    %v3444 = vmul.f32 %v3420, %v431
    %v3445 = vmul.f32 %v3420, %v432
    %v3446 = vmul.f32 %v3420, %v433
    %v3447 = vmul.f32 %v3420, %v434
    %v3448 = vmul.f32 %v3420, %v435
    %v3449 = vadd.f32 %v3391, %v3421
    %v3450 = vadd.f32 %v3392, %v3422
    %v3451 = vadd.f32 %v3393, %v3423
    %v3452 = vadd.f32 %v3394, %v3424
    %v3453 = vadd.f32 %v3395, %v3425
    %v3454 = vadd.f32 %v3396, %v3426
    %v3455 = vadd.f32 %v3397, %v3427
    %v3456 = vadd.f32 %v3398, %v3428
    %v3457 = vadd.f32 %v3399, %v3429
    %v3458 = vadd.f32 %v3400, %v3430
    %v3459 = vadd.f32 %v3401, %v3431
    %v3460 = vadd.f32 %v3402, %v3432
    %v3461 = vadd.f32 %v3403, %v3433
    %v3462 = vadd.f32 %v3404, %v3434
    %v3463 = vadd.f32 %v3405, %v3435
    %v3464 = vadd.f32 %v3406, %v3436
    %v3465 = vadd.f32 %v3407, %v3437
    %v3466 = vadd.f32 %v3408, %v3438
    %v3467 = vadd.f32 %v3409, %v3439
    %v3468 = vadd.f32 %v3410, %v3440
    %v3469 = vadd.f32 %v3411, %v3441
    %v3470 = vadd.f32 %v3412, %v3442
    %v3471 = vadd.f32 %v3413, %v3443
    %v3472 = vadd.f32 %v3414, %v3444
    %v3473 = vadd.f32 %v3415, %v3445
    %v3474 = vadd.f32 %v3416, %v3446
    %v3475 = vadd.f32 %v3417, %v3447
    %v3476 = vadd.f32 %v3418, %v3448
    %s3477 = sld [smem:[#allocation8 + $0x285]]
    %v3478 = vstv %s3477
    %v3479 = vmul.f32 %v3478, %v494
    %v3480 = vmul.f32 %v3478, %v495
    %v3481 = vmul.f32 %v3478, %v496
    %v3482 = vmul.f32 %v3478, %v497
    %v3483 = vmul.f32 %v3478, %v498
    %v3484 = vmul.f32 %v3478, %v499
    %v3485 = vmul.f32 %v3478, %v500
    %v3486 = vmul.f32 %v3478, %v501
    %v3487 = vmul.f32 %v3478, %v502
    %v3488 = vmul.f32 %v3478, %v503
    %v3489 = vmul.f32 %v3478, %v504
    %v3490 = vmul.f32 %v3478, %v505
    %v3491 = vmul.f32 %v3478, %v506
    %v3492 = vmul.f32 %v3478, %v507
    %v3493 = vmul.f32 %v3478, %v508
    %v3494 = vmul.f32 %v3478, %v509
    %v3495 = vmul.f32 %v3478, %v510
    %v3496 = vmul.f32 %v3478, %v511
    %v3497 = vmul.f32 %v3478, %v512
    %v3498 = vmul.f32 %v3478, %v513
    %v3499 = vmul.f32 %v3478, %v514
    %v3500 = vmul.f32 %v3478, %v515
    %v3501 = vmul.f32 %v3478, %v516
    %v3502 = vmul.f32 %v3478, %v517
    %v3503 = vmul.f32 %v3478, %v518
    %v3504 = vmul.f32 %v3478, %v519
    %v3505 = vmul.f32 %v3478, %v520
    %v3506 = vmul.f32 %v3478, %v521
    %v3507 = vadd.f32 %v3449, %v3479
    %v3508 = vadd.f32 %v3450, %v3480
    %v3509 = vadd.f32 %v3451, %v3481
    %v3510 = vadd.f32 %v3452, %v3482
    %v3511 = vadd.f32 %v3453, %v3483
    %v3512 = vadd.f32 %v3454, %v3484
    %v3513 = vadd.f32 %v3455, %v3485
    %v3514 = vadd.f32 %v3456, %v3486
    %v3515 = vadd.f32 %v3457, %v3487
    %v3516 = vadd.f32 %v3458, %v3488
    %v3517 = vadd.f32 %v3459, %v3489
    %v3518 = vadd.f32 %v3460, %v3490
    %v3519 = vadd.f32 %v3461, %v3491
    %v3520 = vadd.f32 %v3462, %v3492
    %v3521 = vadd.f32 %v3463, %v3493
    %v3522 = vadd.f32 %v3464, %v3494
    %v3523 = vadd.f32 %v3465, %v3495
    %v3524 = vadd.f32 %v3466, %v3496
    %v3525 = vadd.f32 %v3467, %v3497
    %v3526 = vadd.f32 %v3468, %v3498
    %v3527 = vadd.f32 %v3469, %v3499
    %v3528 = vadd.f32 %v3470, %v3500
    %v3529 = vadd.f32 %v3471, %v3501
    %v3530 = vadd.f32 %v3472, %v3502
    %v3531 = vadd.f32 %v3473, %v3503
    %v3532 = vadd.f32 %v3474, %v3504
    %v3533 = vadd.f32 %v3475, %v3505
    %v3534 = vadd.f32 %v3476, %v3506
    %s3535 = sld [smem:[#allocation8 + $0x286]]
    %v3536 = vstv %s3535
    %v3537 = vmul.f32 %v3536, %v581
    %v3538 = vmul.f32 %v3536, %v582
    %v3539 = vmul.f32 %v3536, %v583
    %v3540 = vmul.f32 %v3536, %v584
    %v3541 = vmul.f32 %v3536, %v585
    %v3542 = vmul.f32 %v3536, %v586
    %v3543 = vmul.f32 %v3536, %v587
    %v3544 = vmul.f32 %v3536, %v588
    %v3545 = vmul.f32 %v3536, %v589
    %v3546 = vmul.f32 %v3536, %v590
    %v3547 = vmul.f32 %v3536, %v591
    %v3548 = vmul.f32 %v3536, %v592
    %v3549 = vmul.f32 %v3536, %v593
    %v3550 = vmul.f32 %v3536, %v594
    %v3551 = vmul.f32 %v3536, %v595
    %v3552 = vmul.f32 %v3536, %v596
    %v3553 = vmul.f32 %v3536, %v597
    %v3554 = vmul.f32 %v3536, %v598
    %v3555 = vmul.f32 %v3536, %v599
    %v3556 = vmul.f32 %v3536, %v600
    %v3557 = vmul.f32 %v3536, %v601
    %v3558 = vmul.f32 %v3536, %v602
    %v3559 = vmul.f32 %v3536, %v603
    %v3560 = vmul.f32 %v3536, %v604
    %v3561 = vmul.f32 %v3536, %v605
    %v3562 = vmul.f32 %v3536, %v606
    %v3563 = vmul.f32 %v3536, %v607
    %v3564 = vmul.f32 %v3536, %v608
    %v3565 = vadd.f32 %v3507, %v3537
    %v3566 = vadd.f32 %v3508, %v3538
    %v3567 = vadd.f32 %v3509, %v3539
    %v3568 = vadd.f32 %v3510, %v3540
    %v3569 = vadd.f32 %v3511, %v3541
    %v3570 = vadd.f32 %v3512, %v3542
    %v3571 = vadd.f32 %v3513, %v3543
    %v3572 = vadd.f32 %v3514, %v3544
    %v3573 = vadd.f32 %v3515, %v3545
    %v3574 = vadd.f32 %v3516, %v3546
    %v3575 = vadd.f32 %v3517, %v3547
    %v3576 = vadd.f32 %v3518, %v3548
    %v3577 = vadd.f32 %v3519, %v3549
    %v3578 = vadd.f32 %v3520, %v3550
    %v3579 = vadd.f32 %v3521, %v3551
    %v3580 = vadd.f32 %v3522, %v3552
    %v3581 = vadd.f32 %v3523, %v3553
    %v3582 = vadd.f32 %v3524, %v3554
    %v3583 = vadd.f32 %v3525, %v3555
    %v3584 = vadd.f32 %v3526, %v3556
    %v3585 = vadd.f32 %v3527, %v3557
    %v3586 = vadd.f32 %v3528, %v3558
    %v3587 = vadd.f32 %v3529, %v3559
    %v3588 = vadd.f32 %v3530, %v3560
    %v3589 = vadd.f32 %v3531, %v3561
    %v3590 = vadd.f32 %v3532, %v3562
    %v3591 = vadd.f32 %v3533, %v3563
    %v3592 = vadd.f32 %v3534, %v3564
    %s3593 = sld [smem:[#allocation8 + $0x287]]
    %v3594 = vstv %s3593
    %v3595 = vmul.f32 %v3594, %v667
    %v3596 = vmul.f32 %v3594, %v668
    %v3597 = vmul.f32 %v3594, %v669
    %v3598 = vmul.f32 %v3594, %v670
    %v3599 = vmul.f32 %v3594, %v671
    %v3600 = vmul.f32 %v3594, %v672
    %v3601 = vmul.f32 %v3594, %v673
    %v3602 = vmul.f32 %v3594, %v674
    %v3603 = vmul.f32 %v3594, %v675
    %v3604 = vmul.f32 %v3594, %v676
    %v3605 = vmul.f32 %v3594, %v677
    %v3606 = vmul.f32 %v3594, %v678
    %v3607 = vmul.f32 %v3594, %v679
    %v3608 = vmul.f32 %v3594, %v680
    %v3609 = vmul.f32 %v3594, %v681
    %v3610 = vmul.f32 %v3594, %v682
    %v3611 = vmul.f32 %v3594, %v683
    %v3612 = vmul.f32 %v3594, %v684
    %v3613 = vmul.f32 %v3594, %v685
    %v3614 = vmul.f32 %v3594, %v686
    %v3615 = vmul.f32 %v3594, %v687
    %v3616 = vmul.f32 %v3594, %v688
    %v3617 = vmul.f32 %v3594, %v689
    %v3618 = vmul.f32 %v3594, %v690
    %v3619 = vmul.f32 %v3594, %v691
    %v3620 = vmul.f32 %v3594, %v692
    %v3621 = vmul.f32 %v3594, %v693
    %v3622 = vmul.f32 %v3594, %v694
    %v3623 = vadd.f32 %v3565, %v3595
    %v3624 = vadd.f32 %v3566, %v3596
    %v3625 = vadd.f32 %v3567, %v3597
    %v3626 = vadd.f32 %v3568, %v3598
    %v3627 = vadd.f32 %v3569, %v3599
    %v3628 = vadd.f32 %v3570, %v3600
    %v3629 = vadd.f32 %v3571, %v3601
    %v3630 = vadd.f32 %v3572, %v3602
    %v3631 = vadd.f32 %v3573, %v3603
    %v3632 = vadd.f32 %v3574, %v3604
    %v3633 = vadd.f32 %v3575, %v3605
    %v3634 = vadd.f32 %v3576, %v3606
    %v3635 = vadd.f32 %v3577, %v3607
    %v3636 = vadd.f32 %v3578, %v3608
    %v3637 = vadd.f32 %v3579, %v3609
    %v3638 = vadd.f32 %v3580, %v3610
    %v3639 = vadd.f32 %v3581, %v3611
    %v3640 = vadd.f32 %v3582, %v3612
    %v3641 = vadd.f32 %v3583, %v3613
    %v3642 = vadd.f32 %v3584, %v3614
    %v3643 = vadd.f32 %v3585, %v3615
    %v3644 = vadd.f32 %v3586, %v3616
    %v3645 = vadd.f32 %v3587, %v3617
    %v3646 = vadd.f32 %v3588, %v3618
    %v3647 = vadd.f32 %v3589, %v3619
    %v3648 = vadd.f32 %v3590, %v3620
    %v3649 = vadd.f32 %v3591, %v3621
    %v3650 = vadd.f32 %v3592, %v3622
    %s3651 = sld [smem:[#allocation8 + $0x288]]
    %v3652 = vstv %s3651
    %v3653 = vmul.f32 %v3652, %v753
    %v3654 = vmul.f32 %v3652, %v754
    %v3655 = vmul.f32 %v3652, %v755
    %v3656 = vmul.f32 %v3652, %v756
    %v3657 = vmul.f32 %v3652, %v757
    %v3658 = vmul.f32 %v3652, %v758
    %v3659 = vmul.f32 %v3652, %v759
    %v3660 = vmul.f32 %v3652, %v760
    %v3661 = vmul.f32 %v3652, %v761
    %v3662 = vmul.f32 %v3652, %v762
    %v3663 = vmul.f32 %v3652, %v763
    %v3664 = vmul.f32 %v3652, %v764
    %v3665 = vmul.f32 %v3652, %v765
    %v3666 = vmul.f32 %v3652, %v766
    %v3667 = vmul.f32 %v3652, %v767
    %v3668 = vmul.f32 %v3652, %v768
    %v3669 = vmul.f32 %v3652, %v769
    %v3670 = vmul.f32 %v3652, %v770
    %v3671 = vmul.f32 %v3652, %v771
    %v3672 = vmul.f32 %v3652, %v772
    %v3673 = vmul.f32 %v3652, %v773
    %v3674 = vmul.f32 %v3652, %v774
    %v3675 = vmul.f32 %v3652, %v775
    %v3676 = vmul.f32 %v3652, %v776
    %v3677 = vmul.f32 %v3652, %v777
    %v3678 = vmul.f32 %v3652, %v778
    %v3679 = vmul.f32 %v3652, %v779
    %v3680 = vmul.f32 %v3652, %v780
    %v3681 = vadd.f32 %v3623, %v3653
    %v3682 = vadd.f32 %v3624, %v3654
    %v3683 = vadd.f32 %v3625, %v3655
    %v3684 = vadd.f32 %v3626, %v3656
    %v3685 = vadd.f32 %v3627, %v3657
    %v3686 = vadd.f32 %v3628, %v3658
    %v3687 = vadd.f32 %v3629, %v3659
    %v3688 = vadd.f32 %v3630, %v3660
    %v3689 = vadd.f32 %v3631, %v3661
    %v3690 = vadd.f32 %v3632, %v3662
    %v3691 = vadd.f32 %v3633, %v3663
    %v3692 = vadd.f32 %v3634, %v3664
    %v3693 = vadd.f32 %v3635, %v3665
    %v3694 = vadd.f32 %v3636, %v3666
    %v3695 = vadd.f32 %v3637, %v3667
    %v3696 = vadd.f32 %v3638, %v3668
    %v3697 = vadd.f32 %v3639, %v3669
    %v3698 = vadd.f32 %v3640, %v3670
    %v3699 = vadd.f32 %v3641, %v3671
    %v3700 = vadd.f32 %v3642, %v3672
    %v3701 = vadd.f32 %v3643, %v3673
    %v3702 = vadd.f32 %v3644, %v3674
    %v3703 = vadd.f32 %v3645, %v3675
    %v3704 = vadd.f32 %v3646, %v3676
    %v3705 = vadd.f32 %v3647, %v3677
    %v3706 = vadd.f32 %v3648, %v3678
    %v3707 = vadd.f32 %v3649, %v3679
    %v3708 = vadd.f32 %v3650, %v3680
    %v3709 = vmax.f32 %v3681, %v3685
    %v3710 = vmax.f32 %v3683, %v3687
    %v3711 = vmax.f32 %v3709, %v3689
    %v3712 = vmax.f32 %v3710, %v3691
    %v3713 = vmax.f32 %v3711, %v3693
    %v3714 = vmax.f32 %v3712, %v3695
    %v3715 = vmax.f32 %v3713, %v3697
    %v3716 = vmax.f32 %v3714, %v3699
    %v3717 = vmax.f32 %v3715, %v3701
    %v3718 = vmax.f32 %v3716, %v3703
    %v3719 = vmax.f32 %v3717, %v3705
    %v3720 = vmax.f32 %v3718, %v3707
    %v3721 = vmax.f32 %v3719, %v3720
    %v3722 = vsel %vm851, %v3682, -inf
    %v3723 = vsel %vm851, %v3684, -inf
    %v3724 = vsel %vm851, %v3686, -inf
    %v3725 = vmax.f32 %v3722, %v3724
    %v3726 = vsel %vm851, %v3688, -inf
    %v3727 = vmax.f32 %v3723, %v3726
    %v3728 = vsel %vm851, %v3690, -inf
    %v3729 = vmax.f32 %v3725, %v3728
    %v3730 = vsel %vm851, %v3692, -inf
    %v3731 = vmax.f32 %v3727, %v3730
    %v3732 = vsel %vm851, %v3694, -inf
    %v3733 = vmax.f32 %v3729, %v3732
    %v3734 = vsel %vm851, %v3696, -inf
    %v3735 = vmax.f32 %v3731, %v3734
    %v3736 = vsel %vm851, %v3698, -inf
    %v3737 = vmax.f32 %v3733, %v3736
    %v3738 = vsel %vm851, %v3700, -inf
    %v3739 = vmax.f32 %v3735, %v3738
    %v3740 = vsel %vm851, %v3702, -inf
    %v3741 = vmax.f32 %v3737, %v3740
    %v3742 = vsel %vm851, %v3704, -inf
    %v3743 = vmax.f32 %v3739, %v3742
    %v3744 = vsel %vm851, %v3706, -inf
    %v3745 = vmax.f32 %v3741, %v3744
    %v3746 = vsel %vm851, %v3708, -inf
    %v3747 = vmax.f32 %v3743, %v3746
    %v3748 = vmax.f32 %v3745, %v3747
    %v3749 = vsel %vm851, %v3748, -inf
    %v3750 = vmax.f32 %v3721, %v3749
    %v3751 = vrot.slane %v3750, 4
    %v3752 = vmax.f32 %v3750, %v3751
    %v3753 = vrot.slane %v3752, 2
    %v3754 = vmax.f32 %v3752, %v3753
    %v3755 = vrot.slane %v3754, 1
    %v3756 = vmax.f32 %v3754, %v3755
    %s3757 = sld [smem:[#allocation9 + $0x5]]
    %v3758 = vstv %s3757
    %v3759 = vmul.f32 %v3756, %v3758
    %v3760 = vadd.f32 %v3186, %v3759
    %s3761 = sld [smem:[#allocation8 + $0x300]]
    %v3762 = vstv %s3761
    %v3763 = vmul.f32 %v3762, %v63
    %v3764 = vmul.f32 %v3762, %v64
    %v3765 = vmul.f32 %v3762, %v65
    %v3766 = vmul.f32 %v3762, %v66
    %v3767 = vmul.f32 %v3762, %v67
    %v3768 = vmul.f32 %v3762, %v68
    %v3769 = vmul.f32 %v3762, %v69
    %v3770 = vmul.f32 %v3762, %v70
    %v3771 = vmul.f32 %v3762, %v71
    %v3772 = vmul.f32 %v3762, %v72
    %v3773 = vmul.f32 %v3762, %v73
    %v3774 = vmul.f32 %v3762, %v74
    %v3775 = vmul.f32 %v3762, %v75
    %v3776 = vmul.f32 %v3762, %v76
    %v3777 = vmul.f32 %v3762, %v77
    %v3778 = vmul.f32 %v3762, %v78
    %v3779 = vmul.f32 %v3762, %v79
    %v3780 = vmul.f32 %v3762, %v80
    %v3781 = vmul.f32 %v3762, %v81
    %v3782 = vmul.f32 %v3762, %v82
    %v3783 = vmul.f32 %v3762, %v83
    %v3784 = vmul.f32 %v3762, %v84
    %v3785 = vmul.f32 %v3762, %v85
    %v3786 = vmul.f32 %v3762, %v86
    %v3787 = vmul.f32 %v3762, %v87
    %v3788 = vmul.f32 %v3762, %v88
    %v3789 = vmul.f32 %v3762, %v89
    %v3790 = vmul.f32 %v3762, %v90
    %v3791 = vadd.f32 %v3763, 0.0
    %v3792 = vadd.f32 %v3764, 0.0
    %v3793 = vadd.f32 %v3765, 0.0
    %v3794 = vadd.f32 %v3766, 0.0
    %v3795 = vadd.f32 %v3767, 0.0
    %v3796 = vadd.f32 %v3768, 0.0
    %v3797 = vadd.f32 %v3769, 0.0
    %v3798 = vadd.f32 %v3770, 0.0
    %v3799 = vadd.f32 %v3771, 0.0
    %v3800 = vadd.f32 %v3772, 0.0
    %v3801 = vadd.f32 %v3773, 0.0
    %v3802 = vadd.f32 %v3774, 0.0
    %v3803 = vadd.f32 %v3775, 0.0
    %v3804 = vadd.f32 %v3776, 0.0
    %v3805 = vadd.f32 %v3777, 0.0
    %v3806 = vadd.f32 %v3778, 0.0
    %v3807 = vadd.f32 %v3779, 0.0
    %v3808 = vadd.f32 %v3780, 0.0
    %v3809 = vadd.f32 %v3781, 0.0
    %v3810 = vadd.f32 %v3782, 0.0
    %v3811 = vadd.f32 %v3783, 0.0
    %v3812 = vadd.f32 %v3784, 0.0
    %v3813 = vadd.f32 %v3785, 0.0
    %v3814 = vadd.f32 %v3786, 0.0
    %v3815 = vadd.f32 %v3787, 0.0
    %v3816 = vadd.f32 %v3788, 0.0
    %v3817 = vadd.f32 %v3789, 0.0
    %v3818 = vadd.f32 %v3790, 0.0
    %s3819 = sld [smem:[#allocation8 + $0x301]]
    %v3820 = vstv %s3819
    %v3821 = vmul.f32 %v3820, %v149
    %v3822 = vmul.f32 %v3820, %v150
    %v3823 = vmul.f32 %v3820, %v151
    %v3824 = vmul.f32 %v3820, %v152
    %v3825 = vmul.f32 %v3820, %v153
    %v3826 = vmul.f32 %v3820, %v154
    %v3827 = vmul.f32 %v3820, %v155
    %v3828 = vmul.f32 %v3820, %v156
    %v3829 = vmul.f32 %v3820, %v157
    %v3830 = vmul.f32 %v3820, %v158
    %v3831 = vmul.f32 %v3820, %v159
    %v3832 = vmul.f32 %v3820, %v160
    %v3833 = vmul.f32 %v3820, %v161
    %v3834 = vmul.f32 %v3820, %v162
    %v3835 = vmul.f32 %v3820, %v163
    %v3836 = vmul.f32 %v3820, %v164
    %v3837 = vmul.f32 %v3820, %v165
    %v3838 = vmul.f32 %v3820, %v166
    %v3839 = vmul.f32 %v3820, %v167
    %v3840 = vmul.f32 %v3820, %v168
    %v3841 = vmul.f32 %v3820, %v169
    %v3842 = vmul.f32 %v3820, %v170
    %v3843 = vmul.f32 %v3820, %v171
    %v3844 = vmul.f32 %v3820, %v172
    %v3845 = vmul.f32 %v3820, %v173
    %v3846 = vmul.f32 %v3820, %v174
    %v3847 = vmul.f32 %v3820, %v175
    %v3848 = vmul.f32 %v3820, %v176
    %v3849 = vadd.f32 %v3791, %v3821
    %v3850 = vadd.f32 %v3792, %v3822
    %v3851 = vadd.f32 %v3793, %v3823
    %v3852 = vadd.f32 %v3794, %v3824
    %v3853 = vadd.f32 %v3795, %v3825
    %v3854 = vadd.f32 %v3796, %v3826
    %v3855 = vadd.f32 %v3797, %v3827
    %v3856 = vadd.f32 %v3798, %v3828
    %v3857 = vadd.f32 %v3799, %v3829
    %v3858 = vadd.f32 %v3800, %v3830
    %v3859 = vadd.f32 %v3801, %v3831
    %v3860 = vadd.f32 %v3802, %v3832
    %v3861 = vadd.f32 %v3803, %v3833
    %v3862 = vadd.f32 %v3804, %v3834
    %v3863 = vadd.f32 %v3805, %v3835
    %v3864 = vadd.f32 %v3806, %v3836
    %v3865 = vadd.f32 %v3807, %v3837
    %v3866 = vadd.f32 %v3808, %v3838
    %v3867 = vadd.f32 %v3809, %v3839
    %v3868 = vadd.f32 %v3810, %v3840
    %v3869 = vadd.f32 %v3811, %v3841
    %v3870 = vadd.f32 %v3812, %v3842
    %v3871 = vadd.f32 %v3813, %v3843
    %v3872 = vadd.f32 %v3814, %v3844
    %v3873 = vadd.f32 %v3815, %v3845
    %v3874 = vadd.f32 %v3816, %v3846
    %v3875 = vadd.f32 %v3817, %v3847
    %v3876 = vadd.f32 %v3818, %v3848
    %s3877 = sld [smem:[#allocation8 + $0x302]]
    %v3878 = vstv %s3877
    %v3879 = vmul.f32 %v3878, %v235
    %v3880 = vmul.f32 %v3878, %v236
    %v3881 = vmul.f32 %v3878, %v237
    %v3882 = vmul.f32 %v3878, %v238
    %v3883 = vmul.f32 %v3878, %v239
    %v3884 = vmul.f32 %v3878, %v240
    %v3885 = vmul.f32 %v3878, %v241
    %v3886 = vmul.f32 %v3878, %v242
    %v3887 = vmul.f32 %v3878, %v243
    %v3888 = vmul.f32 %v3878, %v244
    %v3889 = vmul.f32 %v3878, %v245
    %v3890 = vmul.f32 %v3878, %v246
    %v3891 = vmul.f32 %v3878, %v247
    %v3892 = vmul.f32 %v3878, %v248
    %v3893 = vmul.f32 %v3878, %v249
    %v3894 = vmul.f32 %v3878, %v250
    %v3895 = vmul.f32 %v3878, %v251
    %v3896 = vmul.f32 %v3878, %v252
    %v3897 = vmul.f32 %v3878, %v253
    %v3898 = vmul.f32 %v3878, %v254
    %v3899 = vmul.f32 %v3878, %v255
    %v3900 = vmul.f32 %v3878, %v256
    %v3901 = vmul.f32 %v3878, %v257
    %v3902 = vmul.f32 %v3878, %v258
    %v3903 = vmul.f32 %v3878, %v259
    %v3904 = vmul.f32 %v3878, %v260
    %v3905 = vmul.f32 %v3878, %v261
    %v3906 = vmul.f32 %v3878, %v262
    %v3907 = vadd.f32 %v3849, %v3879
    %v3908 = vadd.f32 %v3850, %v3880
    %v3909 = vadd.f32 %v3851, %v3881
    %v3910 = vadd.f32 %v3852, %v3882
    %v3911 = vadd.f32 %v3853, %v3883
    %v3912 = vadd.f32 %v3854, %v3884
    %v3913 = vadd.f32 %v3855, %v3885
    %v3914 = vadd.f32 %v3856, %v3886
    %v3915 = vadd.f32 %v3857, %v3887
    %v3916 = vadd.f32 %v3858, %v3888
    %v3917 = vadd.f32 %v3859, %v3889
    %v3918 = vadd.f32 %v3860, %v3890
    %v3919 = vadd.f32 %v3861, %v3891
    %v3920 = vadd.f32 %v3862, %v3892
    %v3921 = vadd.f32 %v3863, %v3893
    %v3922 = vadd.f32 %v3864, %v3894
    %v3923 = vadd.f32 %v3865, %v3895
    %v3924 = vadd.f32 %v3866, %v3896
    %v3925 = vadd.f32 %v3867, %v3897
    %v3926 = vadd.f32 %v3868, %v3898
    %v3927 = vadd.f32 %v3869, %v3899
    %v3928 = vadd.f32 %v3870, %v3900
    %v3929 = vadd.f32 %v3871, %v3901
    %v3930 = vadd.f32 %v3872, %v3902
    %v3931 = vadd.f32 %v3873, %v3903
    %v3932 = vadd.f32 %v3874, %v3904
    %v3933 = vadd.f32 %v3875, %v3905
    %v3934 = vadd.f32 %v3876, %v3906
    %s3935 = sld [smem:[#allocation8 + $0x303]]
    %v3936 = vstv %s3935
    %v3937 = vmul.f32 %v3936, %v322
    %v3938 = vmul.f32 %v3936, %v323
    %v3939 = vmul.f32 %v3936, %v324
    %v3940 = vmul.f32 %v3936, %v325
    %v3941 = vmul.f32 %v3936, %v326
    %v3942 = vmul.f32 %v3936, %v327
    %v3943 = vmul.f32 %v3936, %v328
    %v3944 = vmul.f32 %v3936, %v329
    %v3945 = vmul.f32 %v3936, %v330
    %v3946 = vmul.f32 %v3936, %v331
    %v3947 = vmul.f32 %v3936, %v332
    %v3948 = vmul.f32 %v3936, %v333
    %v3949 = vmul.f32 %v3936, %v334
    %v3950 = vmul.f32 %v3936, %v335
    %v3951 = vmul.f32 %v3936, %v336
    %v3952 = vmul.f32 %v3936, %v337
    %v3953 = vmul.f32 %v3936, %v338
    %v3954 = vmul.f32 %v3936, %v339
    %v3955 = vmul.f32 %v3936, %v340
    %v3956 = vmul.f32 %v3936, %v341
    %v3957 = vmul.f32 %v3936, %v342
    %v3958 = vmul.f32 %v3936, %v343
    %v3959 = vmul.f32 %v3936, %v344
    %v3960 = vmul.f32 %v3936, %v345
    %v3961 = vmul.f32 %v3936, %v346
    %v3962 = vmul.f32 %v3936, %v347
    %v3963 = vmul.f32 %v3936, %v348
    %v3964 = vmul.f32 %v3936, %v349
    %v3965 = vadd.f32 %v3907, %v3937
    %v3966 = vadd.f32 %v3908, %v3938
    %v3967 = vadd.f32 %v3909, %v3939
    %v3968 = vadd.f32 %v3910, %v3940
    %v3969 = vadd.f32 %v3911, %v3941
    %v3970 = vadd.f32 %v3912, %v3942
    %v3971 = vadd.f32 %v3913, %v3943
    %v3972 = vadd.f32 %v3914, %v3944
    %v3973 = vadd.f32 %v3915, %v3945
    %v3974 = vadd.f32 %v3916, %v3946
    %v3975 = vadd.f32 %v3917, %v3947
    %v3976 = vadd.f32 %v3918, %v3948
    %v3977 = vadd.f32 %v3919, %v3949
    %v3978 = vadd.f32 %v3920, %v3950
    %v3979 = vadd.f32 %v3921, %v3951
    %v3980 = vadd.f32 %v3922, %v3952
    %v3981 = vadd.f32 %v3923, %v3953
    %v3982 = vadd.f32 %v3924, %v3954
    %v3983 = vadd.f32 %v3925, %v3955
    %v3984 = vadd.f32 %v3926, %v3956
    %v3985 = vadd.f32 %v3927, %v3957
    %v3986 = vadd.f32 %v3928, %v3958
    %v3987 = vadd.f32 %v3929, %v3959
    %v3988 = vadd.f32 %v3930, %v3960
    %v3989 = vadd.f32 %v3931, %v3961
    %v3990 = vadd.f32 %v3932, %v3962
    %v3991 = vadd.f32 %v3933, %v3963
    %v3992 = vadd.f32 %v3934, %v3964
    %s3993 = sld [smem:[#allocation8 + $0x304]]
    %v3994 = vstv %s3993
    %v3995 = vmul.f32 %v3994, %v408
    %v3996 = vmul.f32 %v3994, %v409
    %v3997 = vmul.f32 %v3994, %v410
    %v3998 = vmul.f32 %v3994, %v411
    %v3999 = vmul.f32 %v3994, %v412
    %v4000 = vmul.f32 %v3994, %v413
    %v4001 = vmul.f32 %v3994, %v414
    %v4002 = vmul.f32 %v3994, %v415
    %v4003 = vmul.f32 %v3994, %v416
    %v4004 = vmul.f32 %v3994, %v417
    %v4005 = vmul.f32 %v3994, %v418
    %v4006 = vmul.f32 %v3994, %v419
    %v4007 = vmul.f32 %v3994, %v420
    %v4008 = vmul.f32 %v3994, %v421
    %v4009 = vmul.f32 %v3994, %v422
    %v4010 = vmul.f32 %v3994, %v423
    %v4011 = vmul.f32 %v3994, %v424
    %v4012 = vmul.f32 %v3994, %v425
    %v4013 = vmul.f32 %v3994, %v426
    %v4014 = vmul.f32 %v3994, %v427
    %v4015 = vmul.f32 %v3994, %v428
    %v4016 = vmul.f32 %v3994, %v429
    %v4017 = vmul.f32 %v3994, %v430
    %v4018 = vmul.f32 %v3994, %v431
    %v4019 = vmul.f32 %v3994, %v432
    %v4020 = vmul.f32 %v3994, %v433
    %v4021 = vmul.f32 %v3994, %v434
    %v4022 = vmul.f32 %v3994, %v435
    %v4023 = vadd.f32 %v3965, %v3995
    %v4024 = vadd.f32 %v3966, %v3996
    %v4025 = vadd.f32 %v3967, %v3997
    %v4026 = vadd.f32 %v3968, %v3998
    %v4027 = vadd.f32 %v3969, %v3999
    %v4028 = vadd.f32 %v3970, %v4000
    %v4029 = vadd.f32 %v3971, %v4001
    %v4030 = vadd.f32 %v3972, %v4002
    %v4031 = vadd.f32 %v3973, %v4003
    %v4032 = vadd.f32 %v3974, %v4004
    %v4033 = vadd.f32 %v3975, %v4005
    %v4034 = vadd.f32 %v3976, %v4006
    %v4035 = vadd.f32 %v3977, %v4007
    %v4036 = vadd.f32 %v3978, %v4008
    %v4037 = vadd.f32 %v3979, %v4009
    %v4038 = vadd.f32 %v3980, %v4010
    %v4039 = vadd.f32 %v3981, %v4011
    %v4040 = vadd.f32 %v3982, %v4012
    %v4041 = vadd.f32 %v3983, %v4013
    %v4042 = vadd.f32 %v3984, %v4014
    %v4043 = vadd.f32 %v3985, %v4015
    %v4044 = vadd.f32 %v3986, %v4016
    %v4045 = vadd.f32 %v3987, %v4017
    %v4046 = vadd.f32 %v3988, %v4018
    %v4047 = vadd.f32 %v3989, %v4019
    %v4048 = vadd.f32 %v3990, %v4020
    %v4049 = vadd.f32 %v3991, %v4021
    %v4050 = vadd.f32 %v3992, %v4022
    %s4051 = sld [smem:[#allocation8 + $0x305]]
    %v4052 = vstv %s4051
    %v4053 = vmul.f32 %v4052, %v494
    %v4054 = vmul.f32 %v4052, %v495
    %v4055 = vmul.f32 %v4052, %v496
    %v4056 = vmul.f32 %v4052, %v497
    %v4057 = vmul.f32 %v4052, %v498
    %v4058 = vmul.f32 %v4052, %v499
    %v4059 = vmul.f32 %v4052, %v500
    %v4060 = vmul.f32 %v4052, %v501
    %v4061 = vmul.f32 %v4052, %v502
    %v4062 = vmul.f32 %v4052, %v503
    %v4063 = vmul.f32 %v4052, %v504
    %v4064 = vmul.f32 %v4052, %v505
    %v4065 = vmul.f32 %v4052, %v506
    %v4066 = vmul.f32 %v4052, %v507
    %v4067 = vmul.f32 %v4052, %v508
    %v4068 = vmul.f32 %v4052, %v509
    %v4069 = vmul.f32 %v4052, %v510
    %v4070 = vmul.f32 %v4052, %v511
    %v4071 = vmul.f32 %v4052, %v512
    %v4072 = vmul.f32 %v4052, %v513
    %v4073 = vmul.f32 %v4052, %v514
    %v4074 = vmul.f32 %v4052, %v515
    %v4075 = vmul.f32 %v4052, %v516
    %v4076 = vmul.f32 %v4052, %v517
    %v4077 = vmul.f32 %v4052, %v518
    %v4078 = vmul.f32 %v4052, %v519
    %v4079 = vmul.f32 %v4052, %v520
    %v4080 = vmul.f32 %v4052, %v521
    %v4081 = vadd.f32 %v4023, %v4053
    %v4082 = vadd.f32 %v4024, %v4054
    %v4083 = vadd.f32 %v4025, %v4055
    %v4084 = vadd.f32 %v4026, %v4056
    %v4085 = vadd.f32 %v4027, %v4057
    %v4086 = vadd.f32 %v4028, %v4058
    %v4087 = vadd.f32 %v4029, %v4059
    %v4088 = vadd.f32 %v4030, %v4060
    %v4089 = vadd.f32 %v4031, %v4061
    %v4090 = vadd.f32 %v4032, %v4062
    %v4091 = vadd.f32 %v4033, %v4063
    %v4092 = vadd.f32 %v4034, %v4064
    %v4093 = vadd.f32 %v4035, %v4065
    %v4094 = vadd.f32 %v4036, %v4066
    %v4095 = vadd.f32 %v4037, %v4067
    %v4096 = vadd.f32 %v4038, %v4068
    %v4097 = vadd.f32 %v4039, %v4069
    %v4098 = vadd.f32 %v4040, %v4070
    %v4099 = vadd.f32 %v4041, %v4071
    %v4100 = vadd.f32 %v4042, %v4072
    %v4101 = vadd.f32 %v4043, %v4073
    %v4102 = vadd.f32 %v4044, %v4074
    %v4103 = vadd.f32 %v4045, %v4075
    %v4104 = vadd.f32 %v4046, %v4076
    %v4105 = vadd.f32 %v4047, %v4077
    %v4106 = vadd.f32 %v4048, %v4078
    %v4107 = vadd.f32 %v4049, %v4079
    %v4108 = vadd.f32 %v4050, %v4080
    %s4109 = sld [smem:[#allocation8 + $0x306]]
    %v4110 = vstv %s4109
    %v4111 = vmul.f32 %v4110, %v581
    %v4112 = vmul.f32 %v4110, %v582
    %v4113 = vmul.f32 %v4110, %v583
    %v4114 = vmul.f32 %v4110, %v584
    %v4115 = vmul.f32 %v4110, %v585
    %v4116 = vmul.f32 %v4110, %v586
    %v4117 = vmul.f32 %v4110, %v587
    %v4118 = vmul.f32 %v4110, %v588
    %v4119 = vmul.f32 %v4110, %v589
    %v4120 = vmul.f32 %v4110, %v590
    %v4121 = vmul.f32 %v4110, %v591
    %v4122 = vmul.f32 %v4110, %v592
    %v4123 = vmul.f32 %v4110, %v593
    %v4124 = vmul.f32 %v4110, %v594
    %v4125 = vmul.f32 %v4110, %v595
    %v4126 = vmul.f32 %v4110, %v596
    %v4127 = vmul.f32 %v4110, %v597
    %v4128 = vmul.f32 %v4110, %v598
    %v4129 = vmul.f32 %v4110, %v599
    %v4130 = vmul.f32 %v4110, %v600
    %v4131 = vmul.f32 %v4110, %v601
    %v4132 = vmul.f32 %v4110, %v602
    %v4133 = vmul.f32 %v4110, %v603
    %v4134 = vmul.f32 %v4110, %v604
    %v4135 = vmul.f32 %v4110, %v605
    %v4136 = vmul.f32 %v4110, %v606
    %v4137 = vmul.f32 %v4110, %v607
    %v4138 = vmul.f32 %v4110, %v608
    %v4139 = vadd.f32 %v4081, %v4111
    %v4140 = vadd.f32 %v4082, %v4112
    %v4141 = vadd.f32 %v4083, %v4113
    %v4142 = vadd.f32 %v4084, %v4114
    %v4143 = vadd.f32 %v4085, %v4115
    %v4144 = vadd.f32 %v4086, %v4116
    %v4145 = vadd.f32 %v4087, %v4117
    %v4146 = vadd.f32 %v4088, %v4118
    %v4147 = vadd.f32 %v4089, %v4119
    %v4148 = vadd.f32 %v4090, %v4120
    %v4149 = vadd.f32 %v4091, %v4121
    %v4150 = vadd.f32 %v4092, %v4122
    %v4151 = vadd.f32 %v4093, %v4123
    %v4152 = vadd.f32 %v4094, %v4124
    %v4153 = vadd.f32 %v4095, %v4125
    %v4154 = vadd.f32 %v4096, %v4126
    %v4155 = vadd.f32 %v4097, %v4127
    %v4156 = vadd.f32 %v4098, %v4128
    %v4157 = vadd.f32 %v4099, %v4129
    %v4158 = vadd.f32 %v4100, %v4130
    %v4159 = vadd.f32 %v4101, %v4131
    %v4160 = vadd.f32 %v4102, %v4132
    %v4161 = vadd.f32 %v4103, %v4133
    %v4162 = vadd.f32 %v4104, %v4134
    %v4163 = vadd.f32 %v4105, %v4135
    %v4164 = vadd.f32 %v4106, %v4136
    %v4165 = vadd.f32 %v4107, %v4137
    %v4166 = vadd.f32 %v4108, %v4138
    %s4167 = sld [smem:[#allocation8 + $0x307]]
    %v4168 = vstv %s4167
    %v4169 = vmul.f32 %v4168, %v667
    %v4170 = vmul.f32 %v4168, %v668
    %v4171 = vmul.f32 %v4168, %v669
    %v4172 = vmul.f32 %v4168, %v670
    %v4173 = vmul.f32 %v4168, %v671
    %v4174 = vmul.f32 %v4168, %v672
    %v4175 = vmul.f32 %v4168, %v673
    %v4176 = vmul.f32 %v4168, %v674
    %v4177 = vmul.f32 %v4168, %v675
    %v4178 = vmul.f32 %v4168, %v676
    %v4179 = vmul.f32 %v4168, %v677
    %v4180 = vmul.f32 %v4168, %v678
    %v4181 = vmul.f32 %v4168, %v679
    %v4182 = vmul.f32 %v4168, %v680
    %v4183 = vmul.f32 %v4168, %v681
    %v4184 = vmul.f32 %v4168, %v682
    %v4185 = vmul.f32 %v4168, %v683
    %v4186 = vmul.f32 %v4168, %v684
    %v4187 = vmul.f32 %v4168, %v685
    %v4188 = vmul.f32 %v4168, %v686
    %v4189 = vmul.f32 %v4168, %v687
    %v4190 = vmul.f32 %v4168, %v688
    %v4191 = vmul.f32 %v4168, %v689
    %v4192 = vmul.f32 %v4168, %v690
    %v4193 = vmul.f32 %v4168, %v691
    %v4194 = vmul.f32 %v4168, %v692
    %v4195 = vmul.f32 %v4168, %v693
    %v4196 = vmul.f32 %v4168, %v694
    %v4197 = vadd.f32 %v4139, %v4169
    %v4198 = vadd.f32 %v4140, %v4170
    %v4199 = vadd.f32 %v4141, %v4171
    %v4200 = vadd.f32 %v4142, %v4172
    %v4201 = vadd.f32 %v4143, %v4173
    %v4202 = vadd.f32 %v4144, %v4174
    %v4203 = vadd.f32 %v4145, %v4175
    %v4204 = vadd.f32 %v4146, %v4176
    %v4205 = vadd.f32 %v4147, %v4177
    %v4206 = vadd.f32 %v4148, %v4178
    %v4207 = vadd.f32 %v4149, %v4179
    %v4208 = vadd.f32 %v4150, %v4180
    %v4209 = vadd.f32 %v4151, %v4181
    %v4210 = vadd.f32 %v4152, %v4182
    %v4211 = vadd.f32 %v4153, %v4183
    %v4212 = vadd.f32 %v4154, %v4184
    %v4213 = vadd.f32 %v4155, %v4185
    %v4214 = vadd.f32 %v4156, %v4186
    %v4215 = vadd.f32 %v4157, %v4187
    %v4216 = vadd.f32 %v4158, %v4188
    %v4217 = vadd.f32 %v4159, %v4189
    %v4218 = vadd.f32 %v4160, %v4190
    %v4219 = vadd.f32 %v4161, %v4191
    %v4220 = vadd.f32 %v4162, %v4192
    %v4221 = vadd.f32 %v4163, %v4193
    %v4222 = vadd.f32 %v4164, %v4194
    %v4223 = vadd.f32 %v4165, %v4195
    %v4224 = vadd.f32 %v4166, %v4196
    %s4225 = sld [smem:[#allocation8 + $0x308]]
    %v4226 = vstv %s4225
    %v4227 = vmul.f32 %v4226, %v753
    %v4228 = vmul.f32 %v4226, %v754
    %v4229 = vmul.f32 %v4226, %v755
    %v4230 = vmul.f32 %v4226, %v756
    %v4231 = vmul.f32 %v4226, %v757
    %v4232 = vmul.f32 %v4226, %v758
    %v4233 = vmul.f32 %v4226, %v759
    %v4234 = vmul.f32 %v4226, %v760
    %v4235 = vmul.f32 %v4226, %v761
    %v4236 = vmul.f32 %v4226, %v762
    %v4237 = vmul.f32 %v4226, %v763
    %v4238 = vmul.f32 %v4226, %v764
    %v4239 = vmul.f32 %v4226, %v765
    %v4240 = vmul.f32 %v4226, %v766
    %v4241 = vmul.f32 %v4226, %v767
    %v4242 = vmul.f32 %v4226, %v768
    %v4243 = vmul.f32 %v4226, %v769
    %v4244 = vmul.f32 %v4226, %v770
    %v4245 = vmul.f32 %v4226, %v771
    %v4246 = vmul.f32 %v4226, %v772
    %v4247 = vmul.f32 %v4226, %v773
    %v4248 = vmul.f32 %v4226, %v774
    %v4249 = vmul.f32 %v4226, %v775
    %v4250 = vmul.f32 %v4226, %v776
    %v4251 = vmul.f32 %v4226, %v777
    %v4252 = vmul.f32 %v4226, %v778
    %v4253 = vmul.f32 %v4226, %v779
    %v4254 = vmul.f32 %v4226, %v780
    %v4255 = vadd.f32 %v4197, %v4227
    %v4256 = vadd.f32 %v4198, %v4228
    %v4257 = vadd.f32 %v4199, %v4229
    %v4258 = vadd.f32 %v4200, %v4230
    %v4259 = vadd.f32 %v4201, %v4231
    %v4260 = vadd.f32 %v4202, %v4232
    %v4261 = vadd.f32 %v4203, %v4233
    %v4262 = vadd.f32 %v4204, %v4234
    %v4263 = vadd.f32 %v4205, %v4235
    %v4264 = vadd.f32 %v4206, %v4236
    %v4265 = vadd.f32 %v4207, %v4237
    %v4266 = vadd.f32 %v4208, %v4238
    %v4267 = vadd.f32 %v4209, %v4239
    %v4268 = vadd.f32 %v4210, %v4240
    %v4269 = vadd.f32 %v4211, %v4241
    %v4270 = vadd.f32 %v4212, %v4242
    %v4271 = vadd.f32 %v4213, %v4243
    %v4272 = vadd.f32 %v4214, %v4244
    %v4273 = vadd.f32 %v4215, %v4245
    %v4274 = vadd.f32 %v4216, %v4246
    %v4275 = vadd.f32 %v4217, %v4247
    %v4276 = vadd.f32 %v4218, %v4248
    %v4277 = vadd.f32 %v4219, %v4249
    %v4278 = vadd.f32 %v4220, %v4250
    %v4279 = vadd.f32 %v4221, %v4251
    %v4280 = vadd.f32 %v4222, %v4252
    %v4281 = vadd.f32 %v4223, %v4253
    %v4282 = vadd.f32 %v4224, %v4254
    %v4283 = vmax.f32 %v4255, %v4259
    %v4284 = vmax.f32 %v4257, %v4261
    %v4285 = vmax.f32 %v4283, %v4263
    %v4286 = vmax.f32 %v4284, %v4265
    %v4287 = vmax.f32 %v4285, %v4267
    %v4288 = vmax.f32 %v4286, %v4269
    %v4289 = vmax.f32 %v4287, %v4271
    %v4290 = vmax.f32 %v4288, %v4273
    %v4291 = vmax.f32 %v4289, %v4275
    %v4292 = vmax.f32 %v4290, %v4277
    %v4293 = vmax.f32 %v4291, %v4279
    %v4294 = vmax.f32 %v4292, %v4281
    %v4295 = vmax.f32 %v4293, %v4294
    %v4296 = vsel %vm851, %v4256, -inf
    %v4297 = vsel %vm851, %v4258, -inf
    %v4298 = vsel %vm851, %v4260, -inf
    %v4299 = vmax.f32 %v4296, %v4298
    %v4300 = vsel %vm851, %v4262, -inf
    %v4301 = vmax.f32 %v4297, %v4300
    %v4302 = vsel %vm851, %v4264, -inf
    %v4303 = vmax.f32 %v4299, %v4302
    %v4304 = vsel %vm851, %v4266, -inf
    %v4305 = vmax.f32 %v4301, %v4304
    %v4306 = vsel %vm851, %v4268, -inf
    %v4307 = vmax.f32 %v4303, %v4306
    %v4308 = vsel %vm851, %v4270, -inf
    %v4309 = vmax.f32 %v4305, %v4308
    %v4310 = vsel %vm851, %v4272, -inf
    %v4311 = vmax.f32 %v4307, %v4310
    %v4312 = vsel %vm851, %v4274, -inf
    %v4313 = vmax.f32 %v4309, %v4312
    %v4314 = vsel %vm851, %v4276, -inf
    %v4315 = vmax.f32 %v4311, %v4314
    %v4316 = vsel %vm851, %v4278, -inf
    %v4317 = vmax.f32 %v4313, %v4316
    %v4318 = vsel %vm851, %v4280, -inf
    %v4319 = vmax.f32 %v4315, %v4318
    %v4320 = vsel %vm851, %v4282, -inf
    %v4321 = vmax.f32 %v4317, %v4320
    %v4322 = vmax.f32 %v4319, %v4321
    %v4323 = vsel %vm851, %v4322, -inf
    %v4324 = vmax.f32 %v4295, %v4323
    %v4325 = vrot.slane %v4324, 4
    %v4326 = vmax.f32 %v4324, %v4325
    %v4327 = vrot.slane %v4326, 2
    %v4328 = vmax.f32 %v4326, %v4327
    %v4329 = vrot.slane %v4328, 1
    %v4330 = vmax.f32 %v4328, %v4329
    %s4331 = sld [smem:[#allocation9 + $0x6]]
    %v4332 = vstv %s4331
    %v4333 = vmul.f32 %v4330, %v4332
    %v4334 = vadd.f32 %v3760, %v4333
    %s4335 = sld [smem:[#allocation8 + $0x380]]
    %v4336 = vstv %s4335
    %v4337 = vmul.f32 %v4336, %v63
    %v4338 = vmul.f32 %v4336, %v64
    %v4339 = vmul.f32 %v4336, %v65
    %v4340 = vmul.f32 %v4336, %v66
    %v4341 = vmul.f32 %v4336, %v67
    %v4342 = vmul.f32 %v4336, %v68
    %v4343 = vmul.f32 %v4336, %v69
    %v4344 = vmul.f32 %v4336, %v70
    %v4345 = vmul.f32 %v4336, %v71
    %v4346 = vmul.f32 %v4336, %v72
    %v4347 = vmul.f32 %v4336, %v73
    %v4348 = vmul.f32 %v4336, %v74
    %v4349 = vmul.f32 %v4336, %v75
    %v4350 = vmul.f32 %v4336, %v76
    %v4351 = vmul.f32 %v4336, %v77
    %v4352 = vmul.f32 %v4336, %v78
    %v4353 = vmul.f32 %v4336, %v79
    %v4354 = vmul.f32 %v4336, %v80
    %v4355 = vmul.f32 %v4336, %v81
    %v4356 = vmul.f32 %v4336, %v82
    %v4357 = vmul.f32 %v4336, %v83
    %v4358 = vmul.f32 %v4336, %v84
    %v4359 = vmul.f32 %v4336, %v85
    %v4360 = vmul.f32 %v4336, %v86
    %v4361 = vmul.f32 %v4336, %v87
    %v4362 = vmul.f32 %v4336, %v88
    %v4363 = vmul.f32 %v4336, %v89
    %v4364 = vmul.f32 %v4336, %v90
    %v4365 = vadd.f32 %v4337, 0.0
    %v4366 = vadd.f32 %v4338, 0.0
    %v4367 = vadd.f32 %v4339, 0.0
    %v4368 = vadd.f32 %v4340, 0.0
    %v4369 = vadd.f32 %v4341, 0.0
    %v4370 = vadd.f32 %v4342, 0.0
    %v4371 = vadd.f32 %v4343, 0.0
    %v4372 = vadd.f32 %v4344, 0.0
    %v4373 = vadd.f32 %v4345, 0.0
    %v4374 = vadd.f32 %v4346, 0.0
    %v4375 = vadd.f32 %v4347, 0.0
    %v4376 = vadd.f32 %v4348, 0.0
    %v4377 = vadd.f32 %v4349, 0.0
    %v4378 = vadd.f32 %v4350, 0.0
    %v4379 = vadd.f32 %v4351, 0.0
    %v4380 = vadd.f32 %v4352, 0.0
    %v4381 = vadd.f32 %v4353, 0.0
    %v4382 = vadd.f32 %v4354, 0.0
    %v4383 = vadd.f32 %v4355, 0.0
    %v4384 = vadd.f32 %v4356, 0.0
    %v4385 = vadd.f32 %v4357, 0.0
    %v4386 = vadd.f32 %v4358, 0.0
    %v4387 = vadd.f32 %v4359, 0.0
    %v4388 = vadd.f32 %v4360, 0.0
    %v4389 = vadd.f32 %v4361, 0.0
    %v4390 = vadd.f32 %v4362, 0.0
    %v4391 = vadd.f32 %v4363, 0.0
    %v4392 = vadd.f32 %v4364, 0.0
    %s4393 = sld [smem:[#allocation8 + $0x381]]
    %v4394 = vstv %s4393
    %v4395 = vmul.f32 %v4394, %v149
    %v4396 = vmul.f32 %v4394, %v150
    %v4397 = vmul.f32 %v4394, %v151
    %v4398 = vmul.f32 %v4394, %v152
    %v4399 = vmul.f32 %v4394, %v153
    %v4400 = vmul.f32 %v4394, %v154
    %v4401 = vmul.f32 %v4394, %v155
    %v4402 = vmul.f32 %v4394, %v156
    %v4403 = vmul.f32 %v4394, %v157
    %v4404 = vmul.f32 %v4394, %v158
    %v4405 = vmul.f32 %v4394, %v159
    %v4406 = vmul.f32 %v4394, %v160
    %v4407 = vmul.f32 %v4394, %v161
    %v4408 = vmul.f32 %v4394, %v162
    %v4409 = vmul.f32 %v4394, %v163
    %v4410 = vmul.f32 %v4394, %v164
    %v4411 = vmul.f32 %v4394, %v165
    %v4412 = vmul.f32 %v4394, %v166
    %v4413 = vmul.f32 %v4394, %v167
    %v4414 = vmul.f32 %v4394, %v168
    %v4415 = vmul.f32 %v4394, %v169
    %v4416 = vmul.f32 %v4394, %v170
    %v4417 = vmul.f32 %v4394, %v171
    %v4418 = vmul.f32 %v4394, %v172
    %v4419 = vmul.f32 %v4394, %v173
    %v4420 = vmul.f32 %v4394, %v174
    %v4421 = vmul.f32 %v4394, %v175
    %v4422 = vmul.f32 %v4394, %v176
    %v4423 = vadd.f32 %v4365, %v4395
    %v4424 = vadd.f32 %v4366, %v4396
    %v4425 = vadd.f32 %v4367, %v4397
    %v4426 = vadd.f32 %v4368, %v4398
    %v4427 = vadd.f32 %v4369, %v4399
    %v4428 = vadd.f32 %v4370, %v4400
    %v4429 = vadd.f32 %v4371, %v4401
    %v4430 = vadd.f32 %v4372, %v4402
    %v4431 = vadd.f32 %v4373, %v4403
    %v4432 = vadd.f32 %v4374, %v4404
    %v4433 = vadd.f32 %v4375, %v4405
    %v4434 = vadd.f32 %v4376, %v4406
    %v4435 = vadd.f32 %v4377, %v4407
    %v4436 = vadd.f32 %v4378, %v4408
    %v4437 = vadd.f32 %v4379, %v4409
    %v4438 = vadd.f32 %v4380, %v4410
    %v4439 = vadd.f32 %v4381, %v4411
    %v4440 = vadd.f32 %v4382, %v4412
    %v4441 = vadd.f32 %v4383, %v4413
    %v4442 = vadd.f32 %v4384, %v4414
    %v4443 = vadd.f32 %v4385, %v4415
    %v4444 = vadd.f32 %v4386, %v4416
    %v4445 = vadd.f32 %v4387, %v4417
    %v4446 = vadd.f32 %v4388, %v4418
    %v4447 = vadd.f32 %v4389, %v4419
    %v4448 = vadd.f32 %v4390, %v4420
    %v4449 = vadd.f32 %v4391, %v4421
    %v4450 = vadd.f32 %v4392, %v4422
    %s4451 = sld [smem:[#allocation8 + $0x382]]
    %v4452 = vstv %s4451
    %v4453 = vmul.f32 %v4452, %v235
    %v4454 = vmul.f32 %v4452, %v236
    %v4455 = vmul.f32 %v4452, %v237
    %v4456 = vmul.f32 %v4452, %v238
    %v4457 = vmul.f32 %v4452, %v239
    %v4458 = vmul.f32 %v4452, %v240
    %v4459 = vmul.f32 %v4452, %v241
    %v4460 = vmul.f32 %v4452, %v242
    %v4461 = vmul.f32 %v4452, %v243
    %v4462 = vmul.f32 %v4452, %v244
    %v4463 = vmul.f32 %v4452, %v245
    %v4464 = vmul.f32 %v4452, %v246
    %v4465 = vmul.f32 %v4452, %v247
    %v4466 = vmul.f32 %v4452, %v248
    %v4467 = vmul.f32 %v4452, %v249
    %v4468 = vmul.f32 %v4452, %v250
    %v4469 = vmul.f32 %v4452, %v251
    %v4470 = vmul.f32 %v4452, %v252
    %v4471 = vmul.f32 %v4452, %v253
    %v4472 = vmul.f32 %v4452, %v254
    %v4473 = vmul.f32 %v4452, %v255
    %v4474 = vmul.f32 %v4452, %v256
    %v4475 = vmul.f32 %v4452, %v257
    %v4476 = vmul.f32 %v4452, %v258
    %v4477 = vmul.f32 %v4452, %v259
    %v4478 = vmul.f32 %v4452, %v260
    %v4479 = vmul.f32 %v4452, %v261
    %v4480 = vmul.f32 %v4452, %v262
    %v4481 = vadd.f32 %v4423, %v4453
    %v4482 = vadd.f32 %v4424, %v4454
    %v4483 = vadd.f32 %v4425, %v4455
    %v4484 = vadd.f32 %v4426, %v4456
    %v4485 = vadd.f32 %v4427, %v4457
    %v4486 = vadd.f32 %v4428, %v4458
    %v4487 = vadd.f32 %v4429, %v4459
    %v4488 = vadd.f32 %v4430, %v4460
    %v4489 = vadd.f32 %v4431, %v4461
    %v4490 = vadd.f32 %v4432, %v4462
    %v4491 = vadd.f32 %v4433, %v4463
    %v4492 = vadd.f32 %v4434, %v4464
    %v4493 = vadd.f32 %v4435, %v4465
    %v4494 = vadd.f32 %v4436, %v4466
    %v4495 = vadd.f32 %v4437, %v4467
    %v4496 = vadd.f32 %v4438, %v4468
    %v4497 = vadd.f32 %v4439, %v4469
    %v4498 = vadd.f32 %v4440, %v4470
    %v4499 = vadd.f32 %v4441, %v4471
    %v4500 = vadd.f32 %v4442, %v4472
    %v4501 = vadd.f32 %v4443, %v4473
    %v4502 = vadd.f32 %v4444, %v4474
    %v4503 = vadd.f32 %v4445, %v4475
    %v4504 = vadd.f32 %v4446, %v4476
    %v4505 = vadd.f32 %v4447, %v4477
    %v4506 = vadd.f32 %v4448, %v4478
    %v4507 = vadd.f32 %v4449, %v4479
    %v4508 = vadd.f32 %v4450, %v4480
    %s4509 = sld [smem:[#allocation8 + $0x383]]
    %v4510 = vstv %s4509
    %v4511 = vmul.f32 %v4510, %v322
    %v4512 = vmul.f32 %v4510, %v323
    %v4513 = vmul.f32 %v4510, %v324
    %v4514 = vmul.f32 %v4510, %v325
    %v4515 = vmul.f32 %v4510, %v326
    %v4516 = vmul.f32 %v4510, %v327
    %v4517 = vmul.f32 %v4510, %v328
    %v4518 = vmul.f32 %v4510, %v329
    %v4519 = vmul.f32 %v4510, %v330
    %v4520 = vmul.f32 %v4510, %v331
    %v4521 = vmul.f32 %v4510, %v332
    %v4522 = vmul.f32 %v4510, %v333
    %v4523 = vmul.f32 %v4510, %v334
    %v4524 = vmul.f32 %v4510, %v335
    %v4525 = vmul.f32 %v4510, %v336
    %v4526 = vmul.f32 %v4510, %v337
    %v4527 = vmul.f32 %v4510, %v338
    %v4528 = vmul.f32 %v4510, %v339
    %v4529 = vmul.f32 %v4510, %v340
    %v4530 = vmul.f32 %v4510, %v341
    %v4531 = vmul.f32 %v4510, %v342
    %v4532 = vmul.f32 %v4510, %v343
    %v4533 = vmul.f32 %v4510, %v344
    %v4534 = vmul.f32 %v4510, %v345
    %v4535 = vmul.f32 %v4510, %v346
    %v4536 = vmul.f32 %v4510, %v347
    %v4537 = vmul.f32 %v4510, %v348
    %v4538 = vmul.f32 %v4510, %v349
    %v4539 = vadd.f32 %v4481, %v4511
    %v4540 = vadd.f32 %v4482, %v4512
    %v4541 = vadd.f32 %v4483, %v4513
    %v4542 = vadd.f32 %v4484, %v4514
    %v4543 = vadd.f32 %v4485, %v4515
    %v4544 = vadd.f32 %v4486, %v4516
    %v4545 = vadd.f32 %v4487, %v4517
    %v4546 = vadd.f32 %v4488, %v4518
    %v4547 = vadd.f32 %v4489, %v4519
    %v4548 = vadd.f32 %v4490, %v4520
    %v4549 = vadd.f32 %v4491, %v4521
    %v4550 = vadd.f32 %v4492, %v4522
    %v4551 = vadd.f32 %v4493, %v4523
    %v4552 = vadd.f32 %v4494, %v4524
    %v4553 = vadd.f32 %v4495, %v4525
    %v4554 = vadd.f32 %v4496, %v4526
    %v4555 = vadd.f32 %v4497, %v4527
    %v4556 = vadd.f32 %v4498, %v4528
    %v4557 = vadd.f32 %v4499, %v4529
    %v4558 = vadd.f32 %v4500, %v4530
    %v4559 = vadd.f32 %v4501, %v4531
    %v4560 = vadd.f32 %v4502, %v4532
    %v4561 = vadd.f32 %v4503, %v4533
    %v4562 = vadd.f32 %v4504, %v4534
    %v4563 = vadd.f32 %v4505, %v4535
    %v4564 = vadd.f32 %v4506, %v4536
    %v4565 = vadd.f32 %v4507, %v4537
    %v4566 = vadd.f32 %v4508, %v4538
    %s4567 = sld [smem:[#allocation8 + $0x384]]
    %v4568 = vstv %s4567
    %v4569 = vmul.f32 %v4568, %v408
    %v4570 = vmul.f32 %v4568, %v409
    %v4571 = vmul.f32 %v4568, %v410
    %v4572 = vmul.f32 %v4568, %v411
    %v4573 = vmul.f32 %v4568, %v412
    %v4574 = vmul.f32 %v4568, %v413
    %v4575 = vmul.f32 %v4568, %v414
    %v4576 = vmul.f32 %v4568, %v415
    %v4577 = vmul.f32 %v4568, %v416
    %v4578 = vmul.f32 %v4568, %v417
    %v4579 = vmul.f32 %v4568, %v418
    %v4580 = vmul.f32 %v4568, %v419
    %v4581 = vmul.f32 %v4568, %v420
    %v4582 = vmul.f32 %v4568, %v421
    %v4583 = vmul.f32 %v4568, %v422
    %v4584 = vmul.f32 %v4568, %v423
    %v4585 = vmul.f32 %v4568, %v424
    %v4586 = vmul.f32 %v4568, %v425
    %v4587 = vmul.f32 %v4568, %v426
    %v4588 = vmul.f32 %v4568, %v427
    %v4589 = vmul.f32 %v4568, %v428
    %v4590 = vmul.f32 %v4568, %v429
    %v4591 = vmul.f32 %v4568, %v430
    %v4592 = vmul.f32 %v4568, %v431
    %v4593 = vmul.f32 %v4568, %v432
    %v4594 = vmul.f32 %v4568, %v433
    %v4595 = vmul.f32 %v4568, %v434
    %v4596 = vmul.f32 %v4568, %v435
    %v4597 = vadd.f32 %v4539, %v4569
    %v4598 = vadd.f32 %v4540, %v4570
    %v4599 = vadd.f32 %v4541, %v4571
    %v4600 = vadd.f32 %v4542, %v4572
    %v4601 = vadd.f32 %v4543, %v4573
    %v4602 = vadd.f32 %v4544, %v4574
    %v4603 = vadd.f32 %v4545, %v4575
    %v4604 = vadd.f32 %v4546, %v4576
    %v4605 = vadd.f32 %v4547, %v4577
    %v4606 = vadd.f32 %v4548, %v4578
    %v4607 = vadd.f32 %v4549, %v4579
    %v4608 = vadd.f32 %v4550, %v4580
    %v4609 = vadd.f32 %v4551, %v4581
    %v4610 = vadd.f32 %v4552, %v4582
    %v4611 = vadd.f32 %v4553, %v4583
    %v4612 = vadd.f32 %v4554, %v4584
    %v4613 = vadd.f32 %v4555, %v4585
    %v4614 = vadd.f32 %v4556, %v4586
    %v4615 = vadd.f32 %v4557, %v4587
    %v4616 = vadd.f32 %v4558, %v4588
    %v4617 = vadd.f32 %v4559, %v4589
    %v4618 = vadd.f32 %v4560, %v4590
    %v4619 = vadd.f32 %v4561, %v4591
    %v4620 = vadd.f32 %v4562, %v4592
    %v4621 = vadd.f32 %v4563, %v4593
    %v4622 = vadd.f32 %v4564, %v4594
    %v4623 = vadd.f32 %v4565, %v4595
    %v4624 = vadd.f32 %v4566, %v4596
    %s4625 = sld [smem:[#allocation8 + $0x385]]
    %v4626 = vstv %s4625
    %v4627 = vmul.f32 %v4626, %v494
    %v4628 = vmul.f32 %v4626, %v495
    %v4629 = vmul.f32 %v4626, %v496
    %v4630 = vmul.f32 %v4626, %v497
    %v4631 = vmul.f32 %v4626, %v498
    %v4632 = vmul.f32 %v4626, %v499
    %v4633 = vmul.f32 %v4626, %v500
    %v4634 = vmul.f32 %v4626, %v501
    %v4635 = vmul.f32 %v4626, %v502
    %v4636 = vmul.f32 %v4626, %v503
    %v4637 = vmul.f32 %v4626, %v504
    %v4638 = vmul.f32 %v4626, %v505
    %v4639 = vmul.f32 %v4626, %v506
    %v4640 = vmul.f32 %v4626, %v507
    %v4641 = vmul.f32 %v4626, %v508
    %v4642 = vmul.f32 %v4626, %v509
    %v4643 = vmul.f32 %v4626, %v510
    %v4644 = vmul.f32 %v4626, %v511
    %v4645 = vmul.f32 %v4626, %v512
    %v4646 = vmul.f32 %v4626, %v513
    %v4647 = vmul.f32 %v4626, %v514
    %v4648 = vmul.f32 %v4626, %v515
    %v4649 = vmul.f32 %v4626, %v516
    %v4650 = vmul.f32 %v4626, %v517
    %v4651 = vmul.f32 %v4626, %v518
    %v4652 = vmul.f32 %v4626, %v519
    %v4653 = vmul.f32 %v4626, %v520
    %v4654 = vmul.f32 %v4626, %v521
    %v4655 = vadd.f32 %v4597, %v4627
    %v4656 = vadd.f32 %v4598, %v4628
    %v4657 = vadd.f32 %v4599, %v4629
    %v4658 = vadd.f32 %v4600, %v4630
    %v4659 = vadd.f32 %v4601, %v4631
    %v4660 = vadd.f32 %v4602, %v4632
    %v4661 = vadd.f32 %v4603, %v4633
    %v4662 = vadd.f32 %v4604, %v4634
    %v4663 = vadd.f32 %v4605, %v4635
    %v4664 = vadd.f32 %v4606, %v4636
    %v4665 = vadd.f32 %v4607, %v4637
    %v4666 = vadd.f32 %v4608, %v4638
    %v4667 = vadd.f32 %v4609, %v4639
    %v4668 = vadd.f32 %v4610, %v4640
    %v4669 = vadd.f32 %v4611, %v4641
    %v4670 = vadd.f32 %v4612, %v4642
    %v4671 = vadd.f32 %v4613, %v4643
    %v4672 = vadd.f32 %v4614, %v4644
    %v4673 = vadd.f32 %v4615, %v4645
    %v4674 = vadd.f32 %v4616, %v4646
    %v4675 = vadd.f32 %v4617, %v4647
    %v4676 = vadd.f32 %v4618, %v4648
    %v4677 = vadd.f32 %v4619, %v4649
    %v4678 = vadd.f32 %v4620, %v4650
    %v4679 = vadd.f32 %v4621, %v4651
    %v4680 = vadd.f32 %v4622, %v4652
    %v4681 = vadd.f32 %v4623, %v4653
    %v4682 = vadd.f32 %v4624, %v4654
    %s4683 = sld [smem:[#allocation8 + $0x386]]
    %v4684 = vstv %s4683
    %v4685 = vmul.f32 %v4684, %v581
    %v4686 = vmul.f32 %v4684, %v582
    %v4687 = vmul.f32 %v4684, %v583
    %v4688 = vmul.f32 %v4684, %v584
    %v4689 = vmul.f32 %v4684, %v585
    %v4690 = vmul.f32 %v4684, %v586
    %v4691 = vmul.f32 %v4684, %v587
    %v4692 = vmul.f32 %v4684, %v588
    %v4693 = vmul.f32 %v4684, %v589
    %v4694 = vmul.f32 %v4684, %v590
    %v4695 = vmul.f32 %v4684, %v591
    %v4696 = vmul.f32 %v4684, %v592
    %v4697 = vmul.f32 %v4684, %v593
    %v4698 = vmul.f32 %v4684, %v594
    %v4699 = vmul.f32 %v4684, %v595
    %v4700 = vmul.f32 %v4684, %v596
    %v4701 = vmul.f32 %v4684, %v597
    %v4702 = vmul.f32 %v4684, %v598
    %v4703 = vmul.f32 %v4684, %v599
    %v4704 = vmul.f32 %v4684, %v600
    %v4705 = vmul.f32 %v4684, %v601
    %v4706 = vmul.f32 %v4684, %v602
    %v4707 = vmul.f32 %v4684, %v603
    %v4708 = vmul.f32 %v4684, %v604
    %v4709 = vmul.f32 %v4684, %v605
    %v4710 = vmul.f32 %v4684, %v606
    %v4711 = vmul.f32 %v4684, %v607
    %v4712 = vmul.f32 %v4684, %v608
    %v4713 = vadd.f32 %v4655, %v4685
    %v4714 = vadd.f32 %v4656, %v4686
    %v4715 = vadd.f32 %v4657, %v4687
    %v4716 = vadd.f32 %v4658, %v4688
    %v4717 = vadd.f32 %v4659, %v4689
    %v4718 = vadd.f32 %v4660, %v4690
    %v4719 = vadd.f32 %v4661, %v4691
    %v4720 = vadd.f32 %v4662, %v4692
    %v4721 = vadd.f32 %v4663, %v4693
    %v4722 = vadd.f32 %v4664, %v4694
    %v4723 = vadd.f32 %v4665, %v4695
    %v4724 = vadd.f32 %v4666, %v4696
    %v4725 = vadd.f32 %v4667, %v4697
    %v4726 = vadd.f32 %v4668, %v4698
    %v4727 = vadd.f32 %v4669, %v4699
    %v4728 = vadd.f32 %v4670, %v4700
    %v4729 = vadd.f32 %v4671, %v4701
    %v4730 = vadd.f32 %v4672, %v4702
    %v4731 = vadd.f32 %v4673, %v4703
    %v4732 = vadd.f32 %v4674, %v4704
    %v4733 = vadd.f32 %v4675, %v4705
    %v4734 = vadd.f32 %v4676, %v4706
    %v4735 = vadd.f32 %v4677, %v4707
    %v4736 = vadd.f32 %v4678, %v4708
    %v4737 = vadd.f32 %v4679, %v4709
    %v4738 = vadd.f32 %v4680, %v4710
    %v4739 = vadd.f32 %v4681, %v4711
    %v4740 = vadd.f32 %v4682, %v4712
    %s4741 = sld [smem:[#allocation8 + $0x387]]
    %v4742 = vstv %s4741
    %v4743 = vmul.f32 %v4742, %v667
    %v4744 = vmul.f32 %v4742, %v668
    %v4745 = vmul.f32 %v4742, %v669
    %v4746 = vmul.f32 %v4742, %v670
    %v4747 = vmul.f32 %v4742, %v671
    %v4748 = vmul.f32 %v4742, %v672
    %v4749 = vmul.f32 %v4742, %v673
    %v4750 = vmul.f32 %v4742, %v674
    %v4751 = vmul.f32 %v4742, %v675
    %v4752 = vmul.f32 %v4742, %v676
    %v4753 = vmul.f32 %v4742, %v677
    %v4754 = vmul.f32 %v4742, %v678
    %v4755 = vmul.f32 %v4742, %v679
    %v4756 = vmul.f32 %v4742, %v680
    %v4757 = vmul.f32 %v4742, %v681
    %v4758 = vmul.f32 %v4742, %v682
    %v4759 = vmul.f32 %v4742, %v683
    %v4760 = vmul.f32 %v4742, %v684
    %v4761 = vmul.f32 %v4742, %v685
    %v4762 = vmul.f32 %v4742, %v686
    %v4763 = vmul.f32 %v4742, %v687
    %v4764 = vmul.f32 %v4742, %v688
    %v4765 = vmul.f32 %v4742, %v689
    %v4766 = vmul.f32 %v4742, %v690
    %v4767 = vmul.f32 %v4742, %v691
    %v4768 = vmul.f32 %v4742, %v692
    %v4769 = vmul.f32 %v4742, %v693
    %v4770 = vmul.f32 %v4742, %v694
    %v4771 = vadd.f32 %v4713, %v4743
    %v4772 = vadd.f32 %v4714, %v4744
    %v4773 = vadd.f32 %v4715, %v4745
    %v4774 = vadd.f32 %v4716, %v4746
    %v4775 = vadd.f32 %v4717, %v4747
    %v4776 = vadd.f32 %v4718, %v4748
    %v4777 = vadd.f32 %v4719, %v4749
    %v4778 = vadd.f32 %v4720, %v4750
    %v4779 = vadd.f32 %v4721, %v4751
    %v4780 = vadd.f32 %v4722, %v4752
    %v4781 = vadd.f32 %v4723, %v4753
    %v4782 = vadd.f32 %v4724, %v4754
    %v4783 = vadd.f32 %v4725, %v4755
    %v4784 = vadd.f32 %v4726, %v4756
    %v4785 = vadd.f32 %v4727, %v4757
    %v4786 = vadd.f32 %v4728, %v4758
    %v4787 = vadd.f32 %v4729, %v4759
    %v4788 = vadd.f32 %v4730, %v4760
    %v4789 = vadd.f32 %v4731, %v4761
    %v4790 = vadd.f32 %v4732, %v4762
    %v4791 = vadd.f32 %v4733, %v4763
    %v4792 = vadd.f32 %v4734, %v4764
    %v4793 = vadd.f32 %v4735, %v4765
    %v4794 = vadd.f32 %v4736, %v4766
    %v4795 = vadd.f32 %v4737, %v4767
    %v4796 = vadd.f32 %v4738, %v4768
    %v4797 = vadd.f32 %v4739, %v4769
    %v4798 = vadd.f32 %v4740, %v4770
    %s4799 = sld [smem:[#allocation8 + $0x388]]
    %v4800 = vstv %s4799
    %v4801 = vmul.f32 %v4800, %v753
    %v4802 = vmul.f32 %v4800, %v754
    %v4803 = vmul.f32 %v4800, %v755
    %v4804 = vmul.f32 %v4800, %v756
    %v4805 = vmul.f32 %v4800, %v757
    %v4806 = vmul.f32 %v4800, %v758
    %v4807 = vmul.f32 %v4800, %v759
    %v4808 = vmul.f32 %v4800, %v760
    %v4809 = vmul.f32 %v4800, %v761
    %v4810 = vmul.f32 %v4800, %v762
    %v4811 = vmul.f32 %v4800, %v763
    %v4812 = vmul.f32 %v4800, %v764
    %v4813 = vmul.f32 %v4800, %v765
    %v4814 = vmul.f32 %v4800, %v766
    %v4815 = vmul.f32 %v4800, %v767
    %v4816 = vmul.f32 %v4800, %v768
    %v4817 = vmul.f32 %v4800, %v769
    %v4818 = vmul.f32 %v4800, %v770
    %v4819 = vmul.f32 %v4800, %v771
    %v4820 = vmul.f32 %v4800, %v772
    %v4821 = vmul.f32 %v4800, %v773
    %v4822 = vmul.f32 %v4800, %v774
    %v4823 = vmul.f32 %v4800, %v775
    %v4824 = vmul.f32 %v4800, %v776
    %v4825 = vmul.f32 %v4800, %v777
    %v4826 = vmul.f32 %v4800, %v778
    %v4827 = vmul.f32 %v4800, %v779
    %v4828 = vmul.f32 %v4800, %v780
    %v4829 = vadd.f32 %v4771, %v4801
    %v4830 = vadd.f32 %v4772, %v4802
    %v4831 = vadd.f32 %v4773, %v4803
    %v4832 = vadd.f32 %v4774, %v4804
    %v4833 = vadd.f32 %v4775, %v4805
    %v4834 = vadd.f32 %v4776, %v4806
    %v4835 = vadd.f32 %v4777, %v4807
    %v4836 = vadd.f32 %v4778, %v4808
    %v4837 = vadd.f32 %v4779, %v4809
    %v4838 = vadd.f32 %v4780, %v4810
    %v4839 = vadd.f32 %v4781, %v4811
    %v4840 = vadd.f32 %v4782, %v4812
    %v4841 = vadd.f32 %v4783, %v4813
    %v4842 = vadd.f32 %v4784, %v4814
    %v4843 = vadd.f32 %v4785, %v4815
    %v4844 = vadd.f32 %v4786, %v4816
    %v4845 = vadd.f32 %v4787, %v4817
    %v4846 = vadd.f32 %v4788, %v4818
    %v4847 = vadd.f32 %v4789, %v4819
    %v4848 = vadd.f32 %v4790, %v4820
    %v4849 = vadd.f32 %v4791, %v4821
    %v4850 = vadd.f32 %v4792, %v4822
    %v4851 = vadd.f32 %v4793, %v4823
    %v4852 = vadd.f32 %v4794, %v4824
    %v4853 = vadd.f32 %v4795, %v4825
    %v4854 = vadd.f32 %v4796, %v4826
    %v4855 = vadd.f32 %v4797, %v4827
    %v4856 = vadd.f32 %v4798, %v4828
    %v4857 = vmax.f32 %v4829, %v4833
    %v4858 = vmax.f32 %v4831, %v4835
    %v4859 = vmax.f32 %v4857, %v4837
    %v4860 = vmax.f32 %v4858, %v4839
    %v4861 = vmax.f32 %v4859, %v4841
    %v4862 = vmax.f32 %v4860, %v4843
    %v4863 = vmax.f32 %v4861, %v4845
    %v4864 = vmax.f32 %v4862, %v4847
    %v4865 = vmax.f32 %v4863, %v4849
    %v4866 = vmax.f32 %v4864, %v4851
    %v4867 = vmax.f32 %v4865, %v4853
    %v4868 = vmax.f32 %v4866, %v4855
    %v4869 = vmax.f32 %v4867, %v4868
    %v4870 = vsel %vm851, %v4830, -inf
    %v4871 = vsel %vm851, %v4832, -inf
    %v4872 = vsel %vm851, %v4834, -inf
    %v4873 = vmax.f32 %v4870, %v4872
    %v4874 = vsel %vm851, %v4836, -inf
    %v4875 = vmax.f32 %v4871, %v4874
    %v4876 = vsel %vm851, %v4838, -inf
    %v4877 = vmax.f32 %v4873, %v4876
    %v4878 = vsel %vm851, %v4840, -inf
    %v4879 = vmax.f32 %v4875, %v4878
    %v4880 = vsel %vm851, %v4842, -inf
    %v4881 = vmax.f32 %v4877, %v4880
    %v4882 = vsel %vm851, %v4844, -inf
    %v4883 = vmax.f32 %v4879, %v4882
    %v4884 = vsel %vm851, %v4846, -inf
    %v4885 = vmax.f32 %v4881, %v4884
    %v4886 = vsel %vm851, %v4848, -inf
    %v4887 = vmax.f32 %v4883, %v4886
    %v4888 = vsel %vm851, %v4850, -inf
    %v4889 = vmax.f32 %v4885, %v4888
    %v4890 = vsel %vm851, %v4852, -inf
    %v4891 = vmax.f32 %v4887, %v4890
    %v4892 = vsel %vm851, %v4854, -inf
    %v4893 = vmax.f32 %v4889, %v4892
    %v4894 = vsel %vm851, %v4856, -inf
    %v4895 = vmax.f32 %v4891, %v4894
    %v4896 = vmax.f32 %v4893, %v4895
    %v4897 = vsel %vm851, %v4896, -inf
    %v4898 = vmax.f32 %v4869, %v4897
    %v4899 = vrot.slane %v4898, 4
    %v4900 = vmax.f32 %v4898, %v4899
    %v4901 = vrot.slane %v4900, 2
    %v4902 = vmax.f32 %v4900, %v4901
    %v4903 = vrot.slane %v4902, 1
    %v4904 = vmax.f32 %v4902, %v4903
    %s4905 = sld [smem:[#allocation9 + $0x7]]
    %v4906 = vstv %s4905
    %v4907 = vmul.f32 %v4904, %v4906
    %v4908 = vadd.f32 %v4334, %v4907
    %v4909 = vxor.u32 %v4908, 2147483648
    %v4910 = vmul.f32 %v4909, 1.442695
    %v4911 = vpow.pop %v4910
    %v4912 = vadd.f32 %v4911, 1.0
    %v4913 = vrcp.pop %v4912
    %v4914 = vmul.f32 %v4912, %v4913
    %v4915 = vsub.f32 1.0, %v4914
    %v4916 = vmul.f32 %v4913, %v4915
    %v4917 = vadd.f32 %v4913, %v4916
    %vm4918 = vweird.f32 %v4912
    %vm4919 = vweird.f32 %v4913
    %vm4920 = vmor %vm4918, %vm4919
    %v4921 = vsel %vm4920, %v4913, %v4917
    %v4922 = vand.u32 2147483647, %v4912
    %vm4923 = vcmp.eq.f32.partialorder %v4922, 8.507059e+37
    %v4924 = vand.u32 %v4912, 2147483648
    %v4925 = vor.u32 1.1754944e-38, %v4924
    %v4926 = vsel %vm4923, %v4925, %v4921
    %v4927 = vmul.f32 1.0, %v4926
    %4928 = vst [vmem:[#allocation10] sm:$0x1] %v4927
    // Predicated region
    $region30: #{tpu_custom_call.1} parent=1 // pred_check
      _
    $region31: #{tpu_custom_call.1} parent=1 // pred_check_branch
      %4930 = sbr.rel (0) target = $region33
    $region32: #{tpu_custom_call.1} parent=1 // pred_region
      %4932 = vsyncadd [#allocation5], 0
      %s4934 = sshll.u32 [#allocation10], 4
      %s4935 = int_to_ptr.vmem [resolvable:$true] %s4934
      %s4936 = sshll.u32 %s4, 4
      %s4937 = int_to_ptr.hbm [resolvable:$true] %s4936
      %4939 = dma.vmem_to_hbm [thread:$0]  %s4935, 16, %s4937, [#allocation5]
    $region33: #{tpu_custom_call.1} parent=1 // pred_fallthru
      _
    // Predicated region
    $region34: #{tpu_custom_call.1} parent=1 // pred_check
      _
    $region35: #{tpu_custom_call.1} parent=1 // pred_check_branch
      %4941 = sbr.rel (0) target = $region37
    $region36: #{tpu_custom_call.1} parent=1 // pred_region
      %4943 = dma.done [#allocation5], 16
    $region37: #{tpu_custom_call.1} parent=1 // pred_fallthru
      _
    %4944 = vsyncpa [#allocation4], 1
    %4945 = vsyncpa [#allocation5], 1
    %4946 = vsyncpa [#allocation6], 1
    %4947 = vsyncpa [#allocation7], 1

</llo_original>
